<compile_context>
chip_gen: v7x
topology: tpu7x:2x2x1
jax: 0.10.0
libtpu: 0.0.40
codegen_flags: <defaults>
</compile_context>

<pallas_src>
import jax
import jax.numpy as jnp
from jax import lax
from jax.experimental import pallas as pl
from jax.experimental.pallas import tpu as pltpu


def _round_up(x, m):
    return ((x + m - 1) // m) * m


# ----------------------------------------------------------------------------
# Pallas kernel: sum of shifted dots (the 3x3 conv taps) + bias + ReLU
# ----------------------------------------------------------------------------
def _make_conv_kernel(plane_offsets, m_rows, n_planes):
    """plane_offsets[p] = tuple of static flat row offsets (one per conv tap)."""

    def kernel(*refs):
        x_refs = refs[:n_planes]                    # (R_p * W_all, Cin_p)  bf16
        w_refs = refs[n_planes:2 * n_planes]        # (T_p, Cin_p, Cp)      bf16
        b_ref = refs[2 * n_planes]                  # (1, Cp)               f32
        o_ref = refs[2 * n_planes + 1]              # (m_rows, Cp)

        acc = None
        for p in range(n_planes):
            xr = x_refs[p]
            wr = w_refs[p]
            for t, off in enumerate(plane_offsets[p]):
                win = xr[off:off + m_rows, :]               # static unit-stride slice
                d = jnp.dot(win, wr[t], preferred_element_type=jnp.float32)
                acc = d if acc is None else acc + d
        y = acc + b_ref[...]
        o_ref[...] = jnp.maximum(y, 0.0).astype(o_ref.dtype)

    return kernel


# ----------------------------------------------------------------------------
# Wrapper: 3x3 Conv2d(bias=False) + inference BatchNorm + ReLU, one pallas_call
# ----------------------------------------------------------------------------
def conv3x3_bn_relu(inputs, w_oihw, gamma, beta, mean, var, *, stride,
                    padding=1, eps=1e-5, target_rows=1024, lane=128,
                    out_dtype=jnp.float32):
    """`inputs` is a list of NHWC tensors treated as channel-concatenated,
    i.e. conv(torch.cat(inputs, dim=C)); the concat is never materialized
    (the weight is split along Cin instead)."""
    s, P = int(stride), int(padding)
    N, H, W, _ = map(int, inputs[0].shape)
    cins = [int(t.shape[-1]) for t in inputs]
    Cout, Cin_total, kh, kw = map(int, w_oihw.shape)
    assert (kh, kw) == (3, 3) and sum(cins) == Cin_total

    Hout = (H + 2 * P - 3) // s + 1
    Wout = (W + 2 * P - 3) // s + 1

    # Fold BN into the weight; pad Cout up to a lane-dense multiple of 128.
    Cp = _round_up(Cout, lane)
    scale = gamma / jnp.sqrt(var + eps)                                # (Cout,)
    wf = w_oihw.astype(jnp.float32) * scale[:, None, None, None]
    wf = jnp.pad(wf, ((0, Cp - Cout), (0, 0), (0, 0), (0, 0)))         # (Cp, Cin, 3, 3)
    bias = jnp.pad(beta - mean * scale, (0, Cp - Cout))
    bias = bias.reshape(1, Cp).astype(jnp.float32)

    # Tiling: each grid step produces TH output rows x W_all columns.
    mc_max = max(len([dx for dx in range(3) if dx % s == px]) - 1
                 for px in range(s))
    W_all = Wout + mc_max
    TH = max(1, min(Hout, max(8, pl.cdiv(target_rows, W_all))))
    n_tiles = pl.cdiv(Hout, TH)
    m_rows = TH * W_all

    # Extra zero columns so that padded output columns read in-bounds zeros.
    extra_w = max(0, s * W_all - (W + 2 * P))

    planes_x, planes_w, plane_offsets = [], [], []
    x_specs, w_specs = [], []
    ch_off = 0
    for x_i, cin_i in zip(inputs, cins):
        xp = jnp.pad(x_i.astype(jnp.bfloat16),
                     ((0, 0), (P, P), (P, P + extra_w), (0, 0)))
        for py in range(s):
            for px in range(s):
                taps = [(dy // s, dx // s)
                        for dy in range(3) for dx in range(3)
                        if dy % s == py and dx % s == px]
                if not taps:
                    continue
                mr_p = max(ry for ry, _ in taps)
                mc_p = max(rx for _, rx in taps)
                R_p = TH + mr_p + (1 if mc_p > 0 else 0)

                # Row/column phase slices: stride handled once here, so every
                # in-kernel access is a static unit-stride 2-D slice.
                xc = xp[:, py::s, px: px + s * (W_all - 1) + 1: s, :]
                n_avail = int(xc.shape[1])
                n_need = (n_tiles - 1) * TH + R_p
                if n_need > n_avail:
                    xc = jnp.pad(xc, ((0, 0), (0, n_need - n_avail),
                                      (0, 0), (0, 0)))
                if n_tiles == 1:
                    # Single tile: a plain slice, no gather / extra HBM copy.
                    xt = xc[:, :R_p].reshape(N, 1, R_p * W_all, cin_i)
                else:
                    # Overlapping (halo'd) row tiles via a row gather on the
                    # (already phase-sliced) view.
                    rows = (jnp.arange(n_tiles)[:, None] * TH
                            + jnp.arange(R_p)[None, :]).reshape(-1)
                    xt = jnp.take(xc, rows, axis=1)
                    xt = xt.reshape(N, n_tiles, R_p * W_all, cin_i)
                planes_x.append(xt)
                x_specs.append(pl.BlockSpec((None, None, R_p * W_all, cin_i),
                                            lambda n, i: (n, i, 0, 0)))

                # Per-tap BN-folded weights for this plane: (T_p, cin_i, Cp).
                wt = jnp.stack(
                    [wf[:, ch_off:ch_off + cin_i, ry * s + py, rx * s + px].T
                     for ry, rx in taps], axis=0).astype(jnp.bfloat16)
                planes_w.append(wt)
                w_specs.append(pl.BlockSpec((len(taps), cin_i, Cp),
                                            lambda n, i: (0, 0, 0)))
                plane_offsets.append(tuple(ry * W_all + rx for ry, rx in taps))
        ch_off += cin_i

    b_spec = pl.BlockSpec((1, Cp), lambda n, i: (0, 0))
    kernel = _make_conv_kernel(tuple(plane_offsets), m_rows, len(planes_x))

    out = pl.pallas_call(
        kernel,
        out_shape=jax.ShapeDtypeStruct((N, n_tiles, m_rows, Cp), out_dtype),
        grid=(N, n_tiles),
        in_specs=x_specs + w_specs + [b_spec],
        out_specs=pl.BlockSpec((None, None, m_rows, Cp),
                               lambda n, i: (n, i, 0, 0)),
        compiler_params=pltpu.CompilerParams(
            dimension_semantics=("parallel", "parallel"),
            vmem_limit_bytes=64 * 1024 * 1024),
    )(*planes_x, *planes_w, bias)

    out = out.reshape(N, n_tiles * TH, W_all, Cp)
    return out[:, :Hout, :Wout, :Cout]


# ----------------------------------------------------------------------------
# Conv2x module (deconv=False, is_3d=False, concat=True, bn=True, relu=True)
# ----------------------------------------------------------------------------
def init_conv2x_params(key, in_channels, out_channels):
    ks = jax.random.split(key, 10)
    f32 = jnp.float32
    return {
        # conv1: Conv2d(in, out, k=3, s=2, p=1, bias=False) + BN
        "w1": 0.10 * jax.random.normal(ks[0], (out_channels, in_channels, 3, 3), f32),
        "g1": 1.0 + 0.10 * jax.random.normal(ks[1], (out_channels,), f32),
        "b1": 0.10 * jax.random.normal(ks[2], (out_channels,), f32),
        "m1": 0.10 * jax.random.normal(ks[3], (out_channels,), f32),
        "v1": 1.0 + 0.50 * jax.random.uniform(ks[4], (out_channels,), f32),
        # conv2: Conv2d(2*out, out, k=3, s=1, p=1, bias=False) + BN
        "w2": 0.05 * jax.random.normal(ks[5], (out_channels, 2 * out_channels, 3, 3), f32),
        "g2": 1.0 + 0.10 * jax.random.normal(ks[6], (out_channels,), f32),
        "b2": 0.10 * jax.random.normal(ks[7], (out_channels,), f32),
        "m2": 0.10 * jax.random.normal(ks[8], (out_channels,), f32),
        "v2": 1.0 + 0.50 * jax.random.uniform(ks[9], (out_channels,), f32),
    }


def conv2x_forward(params, x_nchw, rem_nchw):
    # NCHW (PyTorch) -> NHWC (kernel layout)
    x = jnp.transpose(x_nchw, (0, 2, 3, 1))
    rem = jnp.transpose(rem_nchw, (0, 2, 3, 1))

    # conv1: stride-2 3x3 conv + BN + ReLU.  Output stored bf16: it is only
    # ever consumed as a bf16 MXU operand by conv2.
    x = conv3x3_bn_relu([x], params["w1"], params["g1"], params["b1"],
                        params["m1"], params["v1"], stride=2,
                        out_dtype=jnp.bfloat16)
    assert x.shape == rem.shape, (x.shape, rem.shape)

    # cat((x, rem), C) + conv2 fused: conv2 reads both tensors directly with
    # its weight split along Cin (no concatenated intermediate in HBM).
    x = conv3x3_bn_relu([x, rem], params["w2"], params["g2"], params["b2"],
                        params["m2"], params["v2"], stride=1,
                        out_dtype=jnp.float32)

    # NHWC -> NCHW
    return jnp.transpose(x, (0, 3, 1, 2))


# ----------------------------------------------------------------------------
# Pure-JAX f32 reference (for a numerical sanity check)
# ----------------------------------------------------------------------------
def _reference_conv2x(params, x_nchw, rem_nchw, eps=1e-5):
    def cbr(x_nhwc, w, g, b, m, v, stride):
        w_hwio = jnp.transpose(w, (2, 3, 1, 0)).astype(jnp.float32)
        y = lax.conv_general_dilated(
            x_nhwc.astype(jnp.float32), w_hwio, (stride, stride),
            [(1, 1), (1, 1)], dimension_numbers=("NHWC", "HWIO", "NHWC"))
        s = g / jnp.sqrt(v + eps)
        return jnp.maximum(y * s + (b - m * s), 0.0)

    x = jnp.transpose(x_nchw, (0, 2, 3, 1))
    rem = jnp.transpose(rem_nchw, (0, 2, 3, 1))
    x = cbr(x, params["w1"], params["g1"], params["b1"], params["m1"], params["v1"], 2)
    x = jnp.concatenate([x, rem], axis=-1)
    x = cbr(x, params["w2"], params["g2"], params["b2"], params["m2"], params["v2"], 1)
    return jnp.transpose(x, (0, 3, 1, 2))


if __name__ == "__main__":
    key = jax.random.PRNGKey(0)
    k_params, k_x, k_rem = jax.random.split(key, 3)

    in_channels, out_channels = 4, 8
    N, H, W = 2, 16, 16
    Hout, Wout = H // 2, W // 2   # stride-2, pad-1, k=3

    params = init_conv2x_params(k_params, in_channels, out_channels)
    x = jax.random.normal(k_x, (N, in_channels, H, W), jnp.float32)
    rem = jax.random.normal(k_rem, (N, out_channels, Hout, Wout), jnp.float32)

    out = jax.block_until_ready(jax.jit(conv2x_forward)(params, x, rem))
    assert out.shape == (N, out_channels, Hout, Wout), out.shape
    assert bool(jnp.all(jnp.isfinite(out)))

    # Numerical check against a pure-JAX f32 reference (bf16 MXU operands and
    # a bf16 intermediate in the kernel -> allow a small tolerance).
    ref = jax.block_until_ready(_reference_conv2x(params, x, rem))
    err = float(jnp.max(jnp.abs(out - ref)))
    assert err < 0.2, f"max abs error vs f32 reference: {err}"

    print("KERNEL_OK")
</pallas_src>

<mosaic_0001>
module attributes {stable_mosaic.version = 11 : i64} {
  func.func @kernel(%arg0: i32, %arg1: i32, %arg2: memref<1x1x90x4xbf16, #tpu.memory_space<vmem>>, %arg3: memref<1x1x81x4xbf16, #tpu.memory_space<vmem>>, %arg4: memref<1x1x81x4xbf16, #tpu.memory_space<vmem>>, %arg5: memref<1x1x72x4xbf16, #tpu.memory_space<vmem>>, %arg6: memref<4x4x128xbf16, #tpu.memory_space<vmem>>, %arg7: memref<2x4x128xbf16, #tpu.memory_space<vmem>>, %arg8: memref<2x4x128xbf16, #tpu.memory_space<vmem>>, %arg9: memref<1x4x128xbf16, #tpu.memory_space<vmem>>, %arg10: memref<1x128xf32, #tpu.memory_space<vmem>>, %arg11: memref<1x1x72x128xbf16, #tpu.memory_space<vmem>>) attributes {dimension_semantics = [#tpu.dimension_semantics<parallel>, #tpu.dimension_semantics<parallel>], iteration_bounds = array<i64: 2, 1>, scalar_prefetch = 0 : i64, scratch_operands = 0 : i64, tpu.core_type = #tpu.core_type<tc>, window_params = [{transform_indices = @transform_0, window_bounds = array<i64: 1, 1, 90, 4>}, {transform_indices = @transform_1, window_bounds = array<i64: 1, 1, 81, 4>}, {transform_indices = @transform_2, window_bounds = array<i64: 1, 1, 81, 4>}, {transform_indices = @transform_3, window_bounds = array<i64: 1, 1, 72, 4>}, {pipeline_mode = #tpu.pipeline_mode<synchronous>, transform_indices = @transform_4, window_bounds = array<i64: 4, 4, 128>}, {pipeline_mode = #tpu.pipeline_mode<synchronous>, transform_indices = @transform_5, window_bounds = array<i64: 2, 4, 128>}, {pipeline_mode = #tpu.pipeline_mode<synchronous>, transform_indices = @transform_6, window_bounds = array<i64: 2, 4, 128>}, {pipeline_mode = #tpu.pipeline_mode<synchronous>, transform_indices = @transform_7, window_bounds = array<i64: 1, 4, 128>}, {pipeline_mode = #tpu.pipeline_mode<synchronous>, transform_indices = @transform_8, window_bounds = array<i64: 1, 128>}, {transform_indices = @transform_9, window_bounds = array<i64: 1, 1, 72, 128>}]} {
    %c0 = arith.constant 0 : index
    %c0_0 = arith.constant 0 : index
    %c0_1 = arith.constant 0 : index
    %c0_2 = arith.constant 0 : index
    %0 = vector.load %arg2[%c0, %c0_0, %c0_1, %c0_2] : memref<1x1x90x4xbf16, #tpu.memory_space<vmem>>, vector<1x1x72x4xbf16>
    %1 = vector.shape_cast %0 : vector<1x1x72x4xbf16> to vector<72x4xbf16>
    %c0_3 = arith.constant 0 : index
    %c0_4 = arith.constant 0 : index
    %c0_5 = arith.constant 0 : index
    %2 = vector.load %arg6[%c0_3, %c0_4, %c0_5] : memref<4x4x128xbf16, #tpu.memory_space<vmem>>, vector<1x4x128xbf16>
    %3 = vector.shape_cast %2 : vector<1x4x128xbf16> to vector<4x128xbf16>
    %cst = arith.constant dense<0.000000e+00> : vector<72x128xf32>
    %4 = tpu.matmul %1, %3, %cst {dimension_numbers = #tpu.dot_dimension_numbers<[1], [0], [0], [1], [0, 0, 1, 1], [], []>} : vector<72x4xbf16>, vector<4x128xbf16>, vector<72x128xf32> -> vector<72x128xf32>
    %c0_6 = arith.constant 0 : index
    %c0_7 = arith.constant 0 : index
    %c1 = arith.constant 1 : index
    %c0_8 = arith.constant 0 : index
    %5 = vector.load %arg2[%c0_6, %c0_7, %c1, %c0_8] : memref<1x1x90x4xbf16, #tpu.memory_space<vmem>>, vector<1x1x72x4xbf16>
    %6 = vector.shape_cast %5 : vector<1x1x72x4xbf16> to vector<72x4xbf16>
    %c1_9 = arith.constant 1 : index
    %c0_10 = arith.constant 0 : index
    %c0_11 = arith.constant 0 : index
    %7 = vector.load %arg6[%c1_9, %c0_10, %c0_11] : memref<4x4x128xbf16, #tpu.memory_space<vmem>>, vector<1x4x128xbf16>
    %8 = vector.shape_cast %7 : vector<1x4x128xbf16> to vector<4x128xbf16>
    %cst_12 = arith.constant dense<0.000000e+00> : vector<72x128xf32>
    %9 = tpu.matmul %6, %8, %cst_12 {dimension_numbers = #tpu.dot_dimension_numbers<[1], [0], [0], [1], [0, 0, 1, 1], [], []>} : vector<72x4xbf16>, vector<4x128xbf16>, vector<72x128xf32> -> vector<72x128xf32>
    %10 = arith.addf %4, %9 : vector<72x128xf32>
    %c0_13 = arith.constant 0 : index
    %c0_14 = arith.constant 0 : index
    %c9 = arith.constant 9 : index
    %c0_15 = arith.constant 0 : index
    %11 = vector.load %arg2[%c0_13, %c0_14, %c9, %c0_15] : memref<1x1x90x4xbf16, #tpu.memory_space<vmem>>, vector<1x1x72x4xbf16>
    %12 = vector.shape_cast %11 : vector<1x1x72x4xbf16> to vector<72x4xbf16>
    %c2 = arith.constant 2 : index
    %c0_16 = arith.constant 0 : index
    %c0_17 = arith.constant 0 : index
    %13 = vector.load %arg6[%c2, %c0_16, %c0_17] : memref<4x4x128xbf16, #tpu.memory_space<vmem>>, vector<1x4x128xbf16>
    %14 = vector.shape_cast %13 : vector<1x4x128xbf16> to vector<4x128xbf16>
    %cst_18 = arith.constant dense<0.000000e+00> : vector<72x128xf32>
    %15 = tpu.matmul %12, %14, %cst_18 {dimension_numbers = #tpu.dot_dimension_numbers<[1], [0], [0], [1], [0, 0, 1, 1], [], []>} : vector<72x4xbf16>, vector<4x128xbf16>, vector<72x128xf32> -> vector<72x128xf32>
    %16 = arith.addf %10, %15 : vector<72x128xf32>
    %c0_19 = arith.constant 0 : index
    %c0_20 = arith.constant 0 : index
    %c10 = arith.constant 10 : index
    %c0_21 = arith.constant 0 : index
    %17 = vector.load %arg2[%c0_19, %c0_20, %c10, %c0_21] : memref<1x1x90x4xbf16, #tpu.memory_space<vmem>>, vector<1x1x72x4xbf16>
    %18 = vector.shape_cast %17 : vector<1x1x72x4xbf16> to vector<72x4xbf16>
    %c3 = arith.constant 3 : index
    %c0_22 = arith.constant 0 : index
    %c0_23 = arith.constant 0 : index
    %19 = vector.load %arg6[%c3, %c0_22, %c0_23] : memref<4x4x128xbf16, #tpu.memory_space<vmem>>, vector<1x4x128xbf16>
    %20 = vector.shape_cast %19 : vector<1x4x128xbf16> to vector<4x128xbf16>
    %cst_24 = arith.constant dense<0.000000e+00> : vector<72x128xf32>
    %21 = tpu.matmul %18, %20, %cst_24 {dimension_numbers = #tpu.dot_dimension_numbers<[1], [0], [0], [1], [0, 0, 1, 1], [], []>} : vector<72x4xbf16>, vector<4x128xbf16>, vector<72x128xf32> -> vector<72x128xf32>
    %22 = arith.addf %16, %21 : vector<72x128xf32>
    %c0_25 = arith.constant 0 : index
    %c0_26 = arith.constant 0 : index
    %c0_27 = arith.constant 0 : index
    %c0_28 = arith.constant 0 : index
    %23 = vector.load %arg3[%c0_25, %c0_26, %c0_27, %c0_28] : memref<1x1x81x4xbf16, #tpu.memory_space<vmem>>, vector<1x1x72x4xbf16>
    %24 = vector.shape_cast %23 : vector<1x1x72x4xbf16> to vector<72x4xbf16>
    %c0_29 = arith.constant 0 : index
    %c0_30 = arith.constant 0 : index
    %c0_31 = arith.constant 0 : index
    %25 = vector.load %arg7[%c0_29, %c0_30, %c0_31] : memref<2x4x128xbf16, #tpu.memory_space<vmem>>, vector<1x4x128xbf16>
    %26 = vector.shape_cast %25 : vector<1x4x128xbf16> to vector<4x128xbf16>
    %cst_32 = arith.constant dense<0.000000e+00> : vector<72x128xf32>
    %27 = tpu.matmul %24, %26, %cst_32 {dimension_numbers = #tpu.dot_dimension_numbers<[1], [0], [0], [1], [0, 0, 1, 1], [], []>} : vector<72x4xbf16>, vector<4x128xbf16>, vector<72x128xf32> -> vector<72x128xf32>
    %28 = arith.addf %22, %27 : vector<72x128xf32>
    %c0_33 = arith.constant 0 : index
    %c0_34 = arith.constant 0 : index
    %c9_35 = arith.constant 9 : index
    %c0_36 = arith.constant 0 : index
    %29 = vector.load %arg3[%c0_33, %c0_34, %c9_35, %c0_36] : memref<1x1x81x4xbf16, #tpu.memory_space<vmem>>, vector<1x1x72x4xbf16>
    %30 = vector.shape_cast %29 : vector<1x1x72x4xbf16> to vector<72x4xbf16>
    %c1_37 = arith.constant 1 : index
    %c0_38 = arith.constant 0 : index
    %c0_39 = arith.constant 0 : index
    %31 = vector.load %arg7[%c1_37, %c0_38, %c0_39] : memref<2x4x128xbf16, #tpu.memory_space<vmem>>, vector<1x4x128xbf16>
    %32 = vector.shape_cast %31 : vector<1x4x128xbf16> to vector<4x128xbf16>
    %cst_40 = arith.constant dense<0.000000e+00> : vector<72x128xf32>
    %33 = tpu.matmul %30, %32, %cst_40 {dimension_numbers = #tpu.dot_dimension_numbers<[1], [0], [0], [1], [0, 0, 1, 1], [], []>} : vector<72x4xbf16>, vector<4x128xbf16>, vector<72x128xf32> -> vector<72x128xf32>
    %34 = arith.addf %28, %33 : vector<72x128xf32>
    %c0_41 = arith.constant 0 : index
    %c0_42 = arith.constant 0 : index
    %c0_43 = arith.constant 0 : index
    %c0_44 = arith.constant 0 : index
    %35 = vector.load %arg4[%c0_41, %c0_42, %c0_43, %c0_44] : memref<1x1x81x4xbf16, #tpu.memory_space<vmem>>, vector<1x1x72x4xbf16>
    %36 = vector.shape_cast %35 : vector<1x1x72x4xbf16> to vector<72x4xbf16>
    %c0_45 = arith.constant 0 : index
    %c0_46 = arith.constant 0 : index
    %c0_47 = arith.constant 0 : index
    %37 = vector.load %arg8[%c0_45, %c0_46, %c0_47] : memref<2x4x128xbf16, #tpu.memory_space<vmem>>, vector<1x4x128xbf16>
    %38 = vector.shape_cast %37 : vector<1x4x128xbf16> to vector<4x128xbf16>
    %cst_48 = arith.constant dense<0.000000e+00> : vector<72x128xf32>
    %39 = tpu.matmul %36, %38, %cst_48 {dimension_numbers = #tpu.dot_dimension_numbers<[1], [0], [0], [1], [0, 0, 1, 1], [], []>} : vector<72x4xbf16>, vector<4x128xbf16>, vector<72x128xf32> -> vector<72x128xf32>
    %40 = arith.addf %34, %39 : vector<72x128xf32>
    %c0_49 = arith.constant 0 : index
    %c0_50 = arith.constant 0 : index
    %c1_51 = arith.constant 1 : index
    %c0_52 = arith.constant 0 : index
    %41 = vector.load %arg4[%c0_49, %c0_50, %c1_51, %c0_52] : memref<1x1x81x4xbf16, #tpu.memory_space<vmem>>, vector<1x1x72x4xbf16>
    %42 = vector.shape_cast %41 : vector<1x1x72x4xbf16> to vector<72x4xbf16>
    %c1_53 = arith.constant 1 : index
    %c0_54 = arith.constant 0 : index
    %c0_55 = arith.constant 0 : index
    %43 = vector.load %arg8[%c1_53, %c0_54, %c0_55] : memref<2x4x128xbf16, #tpu.memory_space<vmem>>, vector<1x4x128xbf16>
    %44 = vector.shape_cast %43 : vector<1x4x128xbf16> to vector<4x128xbf16>
    %cst_56 = arith.constant dense<0.000000e+00> : vector<72x128xf32>
    %45 = tpu.matmul %42, %44, %cst_56 {dimension_numbers = #tpu.dot_dimension_numbers<[1], [0], [0], [1], [0, 0, 1, 1], [], []>} : vector<72x4xbf16>, vector<4x128xbf16>, vector<72x128xf32> -> vector<72x128xf32>
    %46 = arith.addf %40, %45 : vector<72x128xf32>
    %c0_57 = arith.constant 0 : index
    %c0_58 = arith.constant 0 : index
    %c0_59 = arith.constant 0 : index
    %c0_60 = arith.constant 0 : index
    %47 = vector.load %arg5[%c0_57, %c0_58, %c0_59, %c0_60] : memref<1x1x72x4xbf16, #tpu.memory_space<vmem>>, vector<1x1x72x4xbf16>
    %48 = vector.shape_cast %47 : vector<1x1x72x4xbf16> to vector<72x4xbf16>
    %c0_61 = arith.constant 0 : index
    %c0_62 = arith.constant 0 : index
    %c0_63 = arith.constant 0 : index
    %49 = vector.load %arg9[%c0_61, %c0_62, %c0_63] : memref<1x4x128xbf16, #tpu.memory_space<vmem>>, vector<1x4x128xbf16>
    %50 = vector.shape_cast %49 : vector<1x4x128xbf16> to vector<4x128xbf16>
    %cst_64 = arith.constant dense<0.000000e+00> : vector<72x128xf32>
    %51 = tpu.matmul %48, %50, %cst_64 {dimension_numbers = #tpu.dot_dimension_numbers<[1], [0], [0], [1], [0, 0, 1, 1], [], []>} : vector<72x4xbf16>, vector<4x128xbf16>, vector<72x128xf32> -> vector<72x128xf32>
    %52 = arith.addf %46, %51 : vector<72x128xf32>
    %c0_65 = arith.constant 0 : index
    %c0_66 = arith.constant 0 : index
    %53 = vector.load %arg10[%c0_65, %c0_66] : memref<1x128xf32, #tpu.memory_space<vmem>>, vector<1x128xf32>
    %54 = vector.broadcast %53 : vector<1x128xf32> to vector<72x128xf32>
    %55 = arith.addf %52, %54 : vector<72x128xf32>
    %cst_67 = arith.constant 0.000000e+00 : f32
    %56 = vector.broadcast %cst_67 : f32 to vector<72x128xf32>
    %57 = arith.maximumf %55, %56 : vector<72x128xf32>
    %58 = arith.truncf %57 : vector<72x128xf32> to vector<72x128xbf16>
    %c0_68 = arith.constant 0 : index
    %c0_69 = arith.constant 0 : index
    %c0_70 = arith.constant 0 : index
    %c0_71 = arith.constant 0 : index
    %59 = vector.load %arg11[%c0_68, %c0_69, %c0_70, %c0_71] : memref<1x1x72x128xbf16, #tpu.memory_space<vmem>>, vector<1x1x72x128xbf16>
    %60 = vector.shape_cast %59 : vector<1x1x72x128xbf16> to vector<72x128xbf16>
    %61 = vector.shape_cast %58 : vector<72x128xbf16> to vector<1x1x72x128xbf16>
    tpu.vector_store %arg11[%c0_68, %c0_69, %c0_70, %c0_71], %61 {strides = array<i32>} : memref<1x1x72x128xbf16, #tpu.memory_space<vmem>>, vector<1x1x72x128xbf16>,
    return
  }
  func.func @transform_0(%arg0: i32, %arg1: i32) -> (i32, i32, i32, i32) {
    %c0_i32 = arith.constant 0 : i32
    %c0_i32_0 = arith.constant 0 : i32
    %c0_i32_1 = arith.constant 0 : i32
    return %arg0, %arg1, %c0_i32, %c0_i32_0 : i32, i32, i32, i32
  }
  func.func @transform_1(%arg0: i32, %arg1: i32) -> (i32, i32, i32, i32) {
    %c0_i32 = arith.constant 0 : i32
    %c0_i32_0 = arith.constant 0 : i32
    %c0_i32_1 = arith.constant 0 : i32
    return %arg0, %arg1, %c0_i32, %c0_i32_0 : i32, i32, i32, i32
  }
  func.func @transform_2(%arg0: i32, %arg1: i32) -> (i32, i32, i32, i32) {
    %c0_i32 = arith.constant 0 : i32
    %c0_i32_0 = arith.constant 0 : i32
    %c0_i32_1 = arith.constant 0 : i32
    return %arg0, %arg1, %c0_i32, %c0_i32_0 : i32, i32, i32, i32
  }
  func.func @transform_3(%arg0: i32, %arg1: i32) -> (i32, i32, i32, i32) {
    %c0_i32 = arith.constant 0 : i32
    %c0_i32_0 = arith.constant 0 : i32
    %c0_i32_1 = arith.constant 0 : i32
    return %arg0, %arg1, %c0_i32, %c0_i32_0 : i32, i32, i32, i32
  }
  func.func @transform_4(%arg0: i32, %arg1: i32) -> (i32, i32, i32) {
    %c0_i32 = arith.constant 0 : i32
    %c0_i32_0 = arith.constant 0 : i32
    %c0_i32_1 = arith.constant 0 : i32
    %c0_i32_2 = arith.constant 0 : i32
    return %c0_i32, %c0_i32_0, %c0_i32_1 : i32, i32, i32
  }
  func.func @transform_5(%arg0: i32, %arg1: i32) -> (i32, i32, i32) {
    %c0_i32 = arith.constant 0 : i32
    %c0_i32_0 = arith.constant 0 : i32
    %c0_i32_1 = arith.constant 0 : i32
    %c0_i32_2 = arith.constant 0 : i32
    return %c0_i32, %c0_i32_0, %c0_i32_1 : i32, i32, i32
  }
  func.func @transform_6(%arg0: i32, %arg1: i32) -> (i32, i32, i32) {
    %c0_i32 = arith.constant 0 : i32
    %c0_i32_0 = arith.constant 0 : i32
    %c0_i32_1 = arith.constant 0 : i32
    %c0_i32_2 = arith.constant 0 : i32
    return %c0_i32, %c0_i32_0, %c0_i32_1 : i32, i32, i32
  }
  func.func @transform_7(%arg0: i32, %arg1: i32) -> (i32, i32, i32) {
    %c0_i32 = arith.constant 0 : i32
    %c0_i32_0 = arith.constant 0 : i32
    %c0_i32_1 = arith.constant 0 : i32
    %c0_i32_2 = arith.constant 0 : i32
    return %c0_i32, %c0_i32_0, %c0_i32_1 : i32, i32, i32
  }
  func.func @transform_8(%arg0: i32, %arg1: i32) -> (i32, i32) {
    %c0_i32 = arith.constant 0 : i32
    %c0_i32_0 = arith.constant 0 : i32
    %c0_i32_1 = arith.constant 0 : i32
    return %c0_i32, %c0_i32_0 : i32, i32
  }
  func.func @transform_9(%arg0: i32, %arg1: i32) -> (i32, i32, i32, i32) {
    %c0_i32 = arith.constant 0 : i32
    %c0_i32_0 = arith.constant 0 : i32
    %c0_i32_1 = arith.constant 0 : i32
    return %arg0, %arg1, %c0_i32, %c0_i32_0 : i32, i32, i32, i32
  }
}

module attributes {stable_mosaic.version = 11 : i64} {
  func.func @kernel(%arg0: i32, %arg1: i32, %arg2: memref<1x1x110x8xbf16, #tpu.memory_space<vmem>>, %arg3: memref<1x1x110x8xbf16, #tpu.memory_space<vmem>>, %arg4: memref<9x8x128xbf16, #tpu.memory_space<vmem>>, %arg5: memref<9x8x128xbf16, #tpu.memory_space<vmem>>, %arg6: memref<1x128xf32, #tpu.memory_space<vmem>>, %arg7: memref<1x1x80x128xf32, #tpu.memory_space<vmem>>) attributes {dimension_semantics = [#tpu.dimension_semantics<parallel>, #tpu.dimension_semantics<parallel>], iteration_bounds = array<i64: 2, 1>, scalar_prefetch = 0 : i64, scratch_operands = 0 : i64, tpu.core_type = #tpu.core_type<tc>, window_params = [{transform_indices = @transform_0, window_bounds = array<i64: 1, 1, 110, 8>}, {transform_indices = @transform_1, window_bounds = array<i64: 1, 1, 110, 8>}, {pipeline_mode = #tpu.pipeline_mode<synchronous>, transform_indices = @transform_2, window_bounds = array<i64: 9, 8, 128>}, {pipeline_mode = #tpu.pipeline_mode<synchronous>, transform_indices = @transform_3, window_bounds = array<i64: 9, 8, 128>}, {pipeline_mode = #tpu.pipeline_mode<synchronous>, transform_indices = @transform_4, window_bounds = array<i64: 1, 128>}, {transform_indices = @transform_5, window_bounds = array<i64: 1, 1, 80, 128>}]} {
    %c0 = arith.constant 0 : index
    %c0_0 = arith.constant 0 : index
    %c0_1 = arith.constant 0 : index
    %c0_2 = arith.constant 0 : index
    %0 = vector.load %arg2[%c0, %c0_0, %c0_1, %c0_2] : memref<1x1x110x8xbf16, #tpu.memory_space<vmem>>, vector<1x1x80x8xbf16>
    %1 = vector.shape_cast %0 : vector<1x1x80x8xbf16> to vector<80x8xbf16>
    %c0_3 = arith.constant 0 : index
    %c0_4 = arith.constant 0 : index
    %c0_5 = arith.constant 0 : index
    %2 = vector.load %arg4[%c0_3, %c0_4, %c0_5] : memref<9x8x128xbf16, #tpu.memory_space<vmem>>, vector<1x8x128xbf16>
    %3 = vector.shape_cast %2 : vector<1x8x128xbf16> to vector<8x128xbf16>
    %cst = arith.constant dense<0.000000e+00> : vector<80x128xf32>
    %4 = tpu.matmul %1, %3, %cst {dimension_numbers = #tpu.dot_dimension_numbers<[1], [0], [0], [1], [0, 0, 1, 1], [], []>} : vector<80x8xbf16>, vector<8x128xbf16>, vector<80x128xf32> -> vector<80x128xf32>
    %c0_6 = arith.constant 0 : index
    %c0_7 = arith.constant 0 : index
    %c1 = arith.constant 1 : index
    %c0_8 = arith.constant 0 : index
    %5 = vector.load %arg2[%c0_6, %c0_7, %c1, %c0_8] : memref<1x1x110x8xbf16, #tpu.memory_space<vmem>>, vector<1x1x80x8xbf16>
    %6 = vector.shape_cast %5 : vector<1x1x80x8xbf16> to vector<80x8xbf16>
    %c1_9 = arith.constant 1 : index
    %c0_10 = arith.constant 0 : index
    %c0_11 = arith.constant 0 : index
    %7 = vector.load %arg4[%c1_9, %c0_10, %c0_11] : memref<9x8x128xbf16, #tpu.memory_space<vmem>>, vector<1x8x128xbf16>
    %8 = vector.shape_cast %7 : vector<1x8x128xbf16> to vector<8x128xbf16>
    %cst_12 = arith.constant dense<0.000000e+00> : vector<80x128xf32>
    %9 = tpu.matmul %6, %8, %cst_12 {dimension_numbers = #tpu.dot_dimension_numbers<[1], [0], [0], [1], [0, 0, 1, 1], [], []>} : vector<80x8xbf16>, vector<8x128xbf16>, vector<80x128xf32> -> vector<80x128xf32>
    %10 = arith.addf %4, %9 : vector<80x128xf32>
    %c0_13 = arith.constant 0 : index
    %c0_14 = arith.constant 0 : index
    %c2 = arith.constant 2 : index
    %c0_15 = arith.constant 0 : index
    %11 = vector.load %arg2[%c0_13, %c0_14, %c2, %c0_15] : memref<1x1x110x8xbf16, #tpu.memory_space<vmem>>, vector<1x1x80x8xbf16>
    %12 = vector.shape_cast %11 : vector<1x1x80x8xbf16> to vector<80x8xbf16>
    %c2_16 = arith.constant 2 : index
    %c0_17 = arith.constant 0 : index
    %c0_18 = arith.constant 0 : index
    %13 = vector.load %arg4[%c2_16, %c0_17, %c0_18] : memref<9x8x128xbf16, #tpu.memory_space<vmem>>, vector<1x8x128xbf16>
    %14 = vector.shape_cast %13 : vector<1x8x128xbf16> to vector<8x128xbf16>
    %cst_19 = arith.constant dense<0.000000e+00> : vector<80x128xf32>
    %15 = tpu.matmul %12, %14, %cst_19 {dimension_numbers = #tpu.dot_dimension_numbers<[1], [0], [0], [1], [0, 0, 1, 1], [], []>} : vector<80x8xbf16>, vector<8x128xbf16>, vector<80x128xf32> -> vector<80x128xf32>
    %16 = arith.addf %10, %15 : vector<80x128xf32>
    %c0_20 = arith.constant 0 : index
    %c0_21 = arith.constant 0 : index
    %c10 = arith.constant 10 : index
    %c0_22 = arith.constant 0 : index
    %17 = vector.load %arg2[%c0_20, %c0_21, %c10, %c0_22] : memref<1x1x110x8xbf16, #tpu.memory_space<vmem>>, vector<1x1x80x8xbf16>
    %18 = vector.shape_cast %17 : vector<1x1x80x8xbf16> to vector<80x8xbf16>
    %c3 = arith.constant 3 : index
    %c0_23 = arith.constant 0 : index
    %c0_24 = arith.constant 0 : index
    %19 = vector.load %arg4[%c3, %c0_23, %c0_24] : memref<9x8x128xbf16, #tpu.memory_space<vmem>>, vector<1x8x128xbf16>
    %20 = vector.shape_cast %19 : vector<1x8x128xbf16> to vector<8x128xbf16>
    %cst_25 = arith.constant dense<0.000000e+00> : vector<80x128xf32>
    %21 = tpu.matmul %18, %20, %cst_25 {dimension_numbers = #tpu.dot_dimension_numbers<[1], [0], [0], [1], [0, 0, 1, 1], [], []>} : vector<80x8xbf16>, vector<8x128xbf16>, vector<80x128xf32> -> vector<80x128xf32>
    %22 = arith.addf %16, %21 : vector<80x128xf32>
    %c0_26 = arith.constant 0 : index
    %c0_27 = arith.constant 0 : index
    %c11 = arith.constant 11 : index
    %c0_28 = arith.constant 0 : index
    %23 = vector.load %arg2[%c0_26, %c0_27, %c11, %c0_28] : memref<1x1x110x8xbf16, #tpu.memory_space<vmem>>, vector<1x1x80x8xbf16>
    %24 = vector.shape_cast %23 : vector<1x1x80x8xbf16> to vector<80x8xbf16>
    %c4 = arith.constant 4 : index
    %c0_29 = arith.constant 0 : index
    %c0_30 = arith.constant 0 : index
    %25 = vector.load %arg4[%c4, %c0_29, %c0_30] : memref<9x8x128xbf16, #tpu.memory_space<vmem>>, vector<1x8x128xbf16>
    %26 = vector.shape_cast %25 : vector<1x8x128xbf16> to vector<8x128xbf16>
    %cst_31 = arith.constant dense<0.000000e+00> : vector<80x128xf32>
    %27 = tpu.matmul %24, %26, %cst_31 {dimension_numbers = #tpu.dot_dimension_numbers<[1], [0], [0], [1], [0, 0, 1, 1], [], []>} : vector<80x8xbf16>, vector<8x128xbf16>, vector<80x128xf32> -> vector<80x128xf32>
    %28 = arith.addf %22, %27 : vector<80x128xf32>
    %c0_32 = arith.constant 0 : index
    %c0_33 = arith.constant 0 : index
    %c12 = arith.constant 12 : index
    %c0_34 = arith.constant 0 : index
    %29 = vector.load %arg2[%c0_32, %c0_33, %c12, %c0_34] : memref<1x1x110x8xbf16, #tpu.memory_space<vmem>>, vector<1x1x80x8xbf16>
    %30 = vector.shape_cast %29 : vector<1x1x80x8xbf16> to vector<80x8xbf16>
    %c5 = arith.constant 5 : index
    %c0_35 = arith.constant 0 : index
    %c0_36 = arith.constant 0 : index
    %31 = vector.load %arg4[%c5, %c0_35, %c0_36] : memref<9x8x128xbf16, #tpu.memory_space<vmem>>, vector<1x8x128xbf16>
    %32 = vector.shape_cast %31 : vector<1x8x128xbf16> to vector<8x128xbf16>
    %cst_37 = arith.constant dense<0.000000e+00> : vector<80x128xf32>
    %33 = tpu.matmul %30, %32, %cst_37 {dimension_numbers = #tpu.dot_dimension_numbers<[1], [0], [0], [1], [0, 0, 1, 1], [], []>} : vector<80x8xbf16>, vector<8x128xbf16>, vector<80x128xf32> -> vector<80x128xf32>
    %34 = arith.addf %28, %33 : vector<80x128xf32>
    %c0_38 = arith.constant 0 : index
    %c0_39 = arith.constant 0 : index
    %c20 = arith.constant 20 : index
    %c0_40 = arith.constant 0 : index
    %35 = vector.load %arg2[%c0_38, %c0_39, %c20, %c0_40] : memref<1x1x110x8xbf16, #tpu.memory_space<vmem>>, vector<1x1x80x8xbf16>
    %36 = vector.shape_cast %35 : vector<1x1x80x8xbf16> to vector<80x8xbf16>
    %c6 = arith.constant 6 : index
    %c0_41 = arith.constant 0 : index
    %c0_42 = arith.constant 0 : index
    %37 = vector.load %arg4[%c6, %c0_41, %c0_42] : memref<9x8x128xbf16, #tpu.memory_space<vmem>>, vector<1x8x128xbf16>
    %38 = vector.shape_cast %37 : vector<1x8x128xbf16> to vector<8x128xbf16>
    %cst_43 = arith.constant dense<0.000000e+00> : vector<80x128xf32>
    %39 = tpu.matmul %36, %38, %cst_43 {dimension_numbers = #tpu.dot_dimension_numbers<[1], [0], [0], [1], [0, 0, 1, 1], [], []>} : vector<80x8xbf16>, vector<8x128xbf16>, vector<80x128xf32> -> vector<80x128xf32>
    %40 = arith.addf %34, %39 : vector<80x128xf32>
    %c0_44 = arith.constant 0 : index
    %c0_45 = arith.constant 0 : index
    %c21 = arith.constant 21 : index
    %c0_46 = arith.constant 0 : index
    %41 = vector.load %arg2[%c0_44, %c0_45, %c21, %c0_46] : memref<1x1x110x8xbf16, #tpu.memory_space<vmem>>, vector<1x1x80x8xbf16>
    %42 = vector.shape_cast %41 : vector<1x1x80x8xbf16> to vector<80x8xbf16>
    %c7 = arith.constant 7 : index
    %c0_47 = arith.constant 0 : index
    %c0_48 = arith.constant 0 : index
    %43 = vector.load %arg4[%c7, %c0_47, %c0_48] : memref<9x8x128xbf16, #tpu.memory_space<vmem>>, vector<1x8x128xbf16>
    %44 = vector.shape_cast %43 : vector<1x8x128xbf16> to vector<8x128xbf16>
    %cst_49 = arith.constant dense<0.000000e+00> : vector<80x128xf32>
    %45 = tpu.matmul %42, %44, %cst_49 {dimension_numbers = #tpu.dot_dimension_numbers<[1], [0], [0], [1], [0, 0, 1, 1], [], []>} : vector<80x8xbf16>, vector<8x128xbf16>, vector<80x128xf32> -> vector<80x128xf32>
    %46 = arith.addf %40, %45 : vector<80x128xf32>
    %c0_50 = arith.constant 0 : index
    %c0_51 = arith.constant 0 : index
    %c22 = arith.constant 22 : index
    %c0_52 = arith.constant 0 : index
    %47 = vector.load %arg2[%c0_50, %c0_51, %c22, %c0_52] : memref<1x1x110x8xbf16, #tpu.memory_space<vmem>>, vector<1x1x80x8xbf16>
    %48 = vector.shape_cast %47 : vector<1x1x80x8xbf16> to vector<80x8xbf16>
    %c8 = arith.constant 8 : index
    %c0_53 = arith.constant 0 : index
    %c0_54 = arith.constant 0 : index
    %49 = vector.load %arg4[%c8, %c0_53, %c0_54] : memref<9x8x128xbf16, #tpu.memory_space<vmem>>, vector<1x8x128xbf16>
    %50 = vector.shape_cast %49 : vector<1x8x128xbf16> to vector<8x128xbf16>
    %cst_55 = arith.constant dense<0.000000e+00> : vector<80x128xf32>
    %51 = tpu.matmul %48, %50, %cst_55 {dimension_numbers = #tpu.dot_dimension_numbers<[1], [0], [0], [1], [0, 0, 1, 1], [], []>} : vector<80x8xbf16>, vector<8x128xbf16>, vector<80x128xf32> -> vector<80x128xf32>
    %52 = arith.addf %46, %51 : vector<80x128xf32>
    %c0_56 = arith.constant 0 : index
    %c0_57 = arith.constant 0 : index
    %c0_58 = arith.constant 0 : index
    %c0_59 = arith.constant 0 : index
    %53 = vector.load %arg3[%c0_56, %c0_57, %c0_58, %c0_59] : memref<1x1x110x8xbf16, #tpu.memory_space<vmem>>, vector<1x1x80x8xbf16>
    %54 = vector.shape_cast %53 : vector<1x1x80x8xbf16> to vector<80x8xbf16>
    %c0_60 = arith.constant 0 : index
    %c0_61 = arith.constant 0 : index
    %c0_62 = arith.constant 0 : index
    %55 = vector.load %arg5[%c0_60, %c0_61, %c0_62] : memref<9x8x128xbf16, #tpu.memory_space<vmem>>, vector<1x8x128xbf16>
    %56 = vector.shape_cast %55 : vector<1x8x128xbf16> to vector<8x128xbf16>
    %cst_63 = arith.constant dense<0.000000e+00> : vector<80x128xf32>
    %57 = tpu.matmul %54, %56, %cst_63 {dimension_numbers = #tpu.dot_dimension_numbers<[1], [0], [0], [1], [0, 0, 1, 1], [], []>} : vector<80x8xbf16>, vector<8x128xbf16>, vector<80x128xf32> -> vector<80x128xf32>
    %58 = arith.addf %52, %57 : vector<80x128xf32>
    %c0_64 = arith.constant 0 : index
    %c0_65 = arith.constant 0 : index
    %c1_66 = arith.constant 1 : index
    %c0_67 = arith.constant 0 : index
    %59 = vector.load %arg3[%c0_64, %c0_65, %c1_66, %c0_67] : memref<1x1x110x8xbf16, #tpu.memory_space<vmem>>, vector<1x1x80x8xbf16>
    %60 = vector.shape_cast %59 : vector<1x1x80x8xbf16> to vector<80x8xbf16>
    %c1_68 = arith.constant 1 : index
    %c0_69 = arith.constant 0 : index
    %c0_70 = arith.constant 0 : index
    %61 = vector.load %arg5[%c1_68, %c0_69, %c0_70] : memref<9x8x128xbf16, #tpu.memory_space<vmem>>, vector<1x8x128xbf16>
    %62 = vector.shape_cast %61 : vector<1x8x128xbf16> to vector<8x128xbf16>
    %cst_71 = arith.constant dense<0.000000e+00> : vector<80x128xf32>
    %63 = tpu.matmul %60, %62, %cst_71 {dimension_numbers = #tpu.dot_dimension_numbers<[1], [0], [0], [1], [0, 0, 1, 1], [], []>} : vector<80x8xbf16>, vector<8x128xbf16>, vector<80x128xf32> -> vector<80x128xf32>
    %64 = arith.addf %58, %63 : vector<80x128xf32>
    %c0_72 = arith.constant 0 : index
    %c0_73 = arith.constant 0 : index
    %c2_74 = arith.constant 2 : index
    %c0_75 = arith.constant 0 : index
    %65 = vector.load %arg3[%c0_72, %c0_73, %c2_74, %c0_75] : memref<1x1x110x8xbf16, #tpu.memory_space<vmem>>, vector<1x1x80x8xbf16>
    %66 = vector.shape_cast %65 : vector<1x1x80x8xbf16> to vector<80x8xbf16>
    %c2_76 = arith.constant 2 : index
    %c0_77 = arith.constant 0 : index
    %c0_78 = arith.constant 0 : index
    %67 = vector.load %arg5[%c2_76, %c0_77, %c0_78] : memref<9x8x128xbf16, #tpu.memory_space<vmem>>, vector<1x8x128xbf16>
    %68 = vector.shape_cast %67 : vector<1x8x128xbf16> to vector<8x128xbf16>
    %cst_79 = arith.constant dense<0.000000e+00> : vector<80x128xf32>
    %69 = tpu.matmul %66, %68, %cst_79 {dimension_numbers = #tpu.dot_dimension_numbers<[1], [0], [0], [1], [0, 0, 1, 1], [], []>} : vector<80x8xbf16>, vector<8x128xbf16>, vector<80x128xf32> -> vector<80x128xf32>
    %70 = arith.addf %64, %69 : vector<80x128xf32>
    %c0_80 = arith.constant 0 : index
    %c0_81 = arith.constant 0 : index
    %c10_82 = arith.constant 10 : index
    %c0_83 = arith.constant 0 : index
    %71 = vector.load %arg3[%c0_80, %c0_81, %c10_82, %c0_83] : memref<1x1x110x8xbf16, #tpu.memory_space<vmem>>, vector<1x1x80x8xbf16>
    %72 = vector.shape_cast %71 : vector<1x1x80x8xbf16> to vector<80x8xbf16>
    %c3_84 = arith.constant 3 : index
    %c0_85 = arith.constant 0 : index
    %c0_86 = arith.constant 0 : index
    %73 = vector.load %arg5[%c3_84, %c0_85, %c0_86] : memref<9x8x128xbf16, #tpu.memory_space<vmem>>, vector<1x8x128xbf16>
    %74 = vector.shape_cast %73 : vector<1x8x128xbf16> to vector<8x128xbf16>
    %cst_87 = arith.constant dense<0.000000e+00> : vector<80x128xf32>
    %75 = tpu.matmul %72, %74, %cst_87 {dimension_numbers = #tpu.dot_dimension_numbers<[1], [0], [0], [1], [0, 0, 1, 1], [], []>} : vector<80x8xbf16>, vector<8x128xbf16>, vector<80x128xf32> -> vector<80x128xf32>
    %76 = arith.addf %70, %75 : vector<80x128xf32>
    %c0_88 = arith.constant 0 : index
    %c0_89 = arith.constant 0 : index
    %c11_90 = arith.constant 11 : index
    %c0_91 = arith.constant 0 : index
    %77 = vector.load %arg3[%c0_88, %c0_89, %c11_90, %c0_91] : memref<1x1x110x8xbf16, #tpu.memory_space<vmem>>, vector<1x1x80x8xbf16>
    %78 = vector.shape_cast %77 : vector<1x1x80x8xbf16> to vector<80x8xbf16>
    %c4_92 = arith.constant 4 : index
    %c0_93 = arith.constant 0 : index
    %c0_94 = arith.constant 0 : index
    %79 = vector.load %arg5[%c4_92, %c0_93, %c0_94] : memref<9x8x128xbf16, #tpu.memory_space<vmem>>, vector<1x8x128xbf16>
    %80 = vector.shape_cast %79 : vector<1x8x128xbf16> to vector<8x128xbf16>
    %cst_95 = arith.constant dense<0.000000e+00> : vector<80x128xf32>
    %81 = tpu.matmul %78, %80, %cst_95 {dimension_numbers = #tpu.dot_dimension_numbers<[1], [0], [0], [1], [0, 0, 1, 1], [], []>} : vector<80x8xbf16>, vector<8x128xbf16>, vector<80x128xf32> -> vector<80x128xf32>
    %82 = arith.addf %76, %81 : vector<80x128xf32>
    %c0_96 = arith.constant 0 : index
    %c0_97 = arith.constant 0 : index
    %c12_98 = arith.constant 12 : index
    %c0_99 = arith.constant 0 : index
    %83 = vector.load %arg3[%c0_96, %c0_97, %c12_98, %c0_99] : memref<1x1x110x8xbf16, #tpu.memory_space<vmem>>, vector<1x1x80x8xbf16>
    %84 = vector.shape_cast %83 : vector<1x1x80x8xbf16> to vector<80x8xbf16>
    %c5_100 = arith.constant 5 : index
    %c0_101 = arith.constant 0 : index
    %c0_102 = arith.constant 0 : index
    %85 = vector.load %arg5[%c5_100, %c0_101, %c0_102] : memref<9x8x128xbf16, #tpu.memory_space<vmem>>, vector<1x8x128xbf16>
    %86 = vector.shape_cast %85 : vector<1x8x128xbf16> to vector<8x128xbf16>
    %cst_103 = arith.constant dense<0.000000e+00> : vector<80x128xf32>
    %87 = tpu.matmul %84, %86, %cst_103 {dimension_numbers = #tpu.dot_dimension_numbers<[1], [0], [0], [1], [0, 0, 1, 1], [], []>} : vector<80x8xbf16>, vector<8x128xbf16>, vector<80x128xf32> -> vector<80x128xf32>
    %88 = arith.addf %82, %87 : vector<80x128xf32>
    %c0_104 = arith.constant 0 : index
    %c0_105 = arith.constant 0 : index
    %c20_106 = arith.constant 20 : index
    %c0_107 = arith.constant 0 : index
    %89 = vector.load %arg3[%c0_104, %c0_105, %c20_106, %c0_107] : memref<1x1x110x8xbf16, #tpu.memory_space<vmem>>, vector<1x1x80x8xbf16>
    %90 = vector.shape_cast %89 : vector<1x1x80x8xbf16> to vector<80x8xbf16>
    %c6_108 = arith.constant 6 : index
    %c0_109 = arith.constant 0 : index
    %c0_110 = arith.constant 0 : index
    %91 = vector.load %arg5[%c6_108, %c0_109, %c0_110] : memref<9x8x128xbf16, #tpu.memory_space<vmem>>, vector<1x8x128xbf16>
    %92 = vector.shape_cast %91 : vector<1x8x128xbf16> to vector<8x128xbf16>
    %cst_111 = arith.constant dense<0.000000e+00> : vector<80x128xf32>
    %93 = tpu.matmul %90, %92, %cst_111 {dimension_numbers = #tpu.dot_dimension_numbers<[1], [0], [0], [1], [0, 0, 1, 1], [], []>} : vector<80x8xbf16>, vector<8x128xbf16>, vector<80x128xf32> -> vector<80x128xf32>
    %94 = arith.addf %88, %93 : vector<80x128xf32>
    %c0_112 = arith.constant 0 : index
    %c0_113 = arith.constant 0 : index
    %c21_114 = arith.constant 21 : index
    %c0_115 = arith.constant 0 : index
    %95 = vector.load %arg3[%c0_112, %c0_113, %c21_114, %c0_115] : memref<1x1x110x8xbf16, #tpu.memory_space<vmem>>, vector<1x1x80x8xbf16>
    %96 = vector.shape_cast %95 : vector<1x1x80x8xbf16> to vector<80x8xbf16>
    %c7_116 = arith.constant 7 : index
    %c0_117 = arith.constant 0 : index
    %c0_118 = arith.constant 0 : index
    %97 = vector.load %arg5[%c7_116, %c0_117, %c0_118] : memref<9x8x128xbf16, #tpu.memory_space<vmem>>, vector<1x8x128xbf16>
    %98 = vector.shape_cast %97 : vector<1x8x128xbf16> to vector<8x128xbf16>
    %cst_119 = arith.constant dense<0.000000e+00> : vector<80x128xf32>
    %99 = tpu.matmul %96, %98, %cst_119 {dimension_numbers = #tpu.dot_dimension_numbers<[1], [0], [0], [1], [0, 0, 1, 1], [], []>} : vector<80x8xbf16>, vector<8x128xbf16>, vector<80x128xf32> -> vector<80x128xf32>
    %100 = arith.addf %94, %99 : vector<80x128xf32>
    %c0_120 = arith.constant 0 : index
    %c0_121 = arith.constant 0 : index
    %c22_122 = arith.constant 22 : index
    %c0_123 = arith.constant 0 : index
    %101 = vector.load %arg3[%c0_120, %c0_121, %c22_122, %c0_123] : memref<1x1x110x8xbf16, #tpu.memory_space<vmem>>, vector<1x1x80x8xbf16>
    %102 = vector.shape_cast %101 : vector<1x1x80x8xbf16> to vector<80x8xbf16>
    %c8_124 = arith.constant 8 : index
    %c0_125 = arith.constant 0 : index
    %c0_126 = arith.constant 0 : index
    %103 = vector.load %arg5[%c8_124, %c0_125, %c0_126] : memref<9x8x128xbf16, #tpu.memory_space<vmem>>, vector<1x8x128xbf16>
    %104 = vector.shape_cast %103 : vector<1x8x128xbf16> to vector<8x128xbf16>
    %cst_127 = arith.constant dense<0.000000e+00> : vector<80x128xf32>
    %105 = tpu.matmul %102, %104, %cst_127 {dimension_numbers = #tpu.dot_dimension_numbers<[1], [0], [0], [1], [0, 0, 1, 1], [], []>} : vector<80x8xbf16>, vector<8x128xbf16>, vector<80x128xf32> -> vector<80x128xf32>
    %106 = arith.addf %100, %105 : vector<80x128xf32>
    %c0_128 = arith.constant 0 : index
    %c0_129 = arith.constant 0 : index
    %107 = vector.load %arg6[%c0_128, %c0_129] : memref<1x128xf32, #tpu.memory_space<vmem>>, vector<1x128xf32>
    %108 = vector.broadcast %107 : vector<1x128xf32> to vector<80x128xf32>
    %109 = arith.addf %106, %108 : vector<80x128xf32>
    %cst_130 = arith.constant 0.000000e+00 : f32
    %110 = vector.broadcast %cst_130 : f32 to vector<80x128xf32>
    %111 = arith.maximumf %109, %110 : vector<80x128xf32>
    %c0_131 = arith.constant 0 : index
    %c0_132 = arith.constant 0 : index
    %c0_133 = arith.constant 0 : index
    %c0_134 = arith.constant 0 : index
    %112 = vector.load %arg7[%c0_131, %c0_132, %c0_133, %c0_134] : memref<1x1x80x128xf32, #tpu.memory_space<vmem>>, vector<1x1x80x128xf32>
    %113 = vector.shape_cast %112 : vector<1x1x80x128xf32> to vector<80x128xf32>
    %114 = vector.shape_cast %111 : vector<80x128xf32> to vector<1x1x80x128xf32>
    tpu.vector_store %arg7[%c0_131, %c0_132, %c0_133, %c0_134], %114 {strides = array<i32>} : memref<1x1x80x128xf32, #tpu.memory_space<vmem>>, vector<1x1x80x128xf32>,
    return
  }
  func.func @transform_0(%arg0: i32, %arg1: i32) -> (i32, i32, i32, i32) {
    %c0_i32 = arith.constant 0 : i32
    %c0_i32_0 = arith.constant 0 : i32
    %c0_i32_1 = arith.constant 0 : i32
    return %arg0, %arg1, %c0_i32, %c0_i32_0 : i32, i32, i32, i32
  }
  func.func @transform_1(%arg0: i32, %arg1: i32) -> (i32, i32, i32, i32) {
    %c0_i32 = arith.constant 0 : i32
    %c0_i32_0 = arith.constant 0 : i32
    %c0_i32_1 = arith.constant 0 : i32
    return %arg0, %arg1, %c0_i32, %c0_i32_0 : i32, i32, i32, i32
  }
  func.func @transform_2(%arg0: i32, %arg1: i32) -> (i32, i32, i32) {
    %c0_i32 = arith.constant 0 : i32
    %c0_i32_0 = arith.constant 0 : i32
    %c0_i32_1 = arith.constant 0 : i32
    %c0_i32_2 = arith.constant 0 : i32
    return %c0_i32, %c0_i32_0, %c0_i32_1 : i32, i32, i32
  }
  func.func @transform_3(%arg0: i32, %arg1: i32) -> (i32, i32, i32) {
    %c0_i32 = arith.constant 0 : i32
    %c0_i32_0 = arith.constant 0 : i32
    %c0_i32_1 = arith.constant 0 : i32
    %c0_i32_2 = arith.constant 0 : i32
    return %c0_i32, %c0_i32_0, %c0_i32_1 : i32, i32, i32
  }
  func.func @transform_4(%arg0: i32, %arg1: i32) -> (i32, i32) {
    %c0_i32 = arith.constant 0 : i32
    %c0_i32_0 = arith.constant 0 : i32
    %c0_i32_1 = arith.constant 0 : i32
    return %c0_i32, %c0_i32_0 : i32, i32
  }
  func.func @transform_5(%arg0: i32, %arg1: i32) -> (i32, i32, i32, i32) {
    %c0_i32 = arith.constant 0 : i32
    %c0_i32_0 = arith.constant 0 : i32
    %c0_i32_1 = arith.constant 0 : i32
    return %arg0, %arg1, %c0_i32, %c0_i32_0 : i32, i32, i32, i32
  }
}

</mosaic_0001>

<llo_original>
// kernel: conv2x_forward.2
$region0: #{conv2x_forward.2}
  #allocation0 [shape = 'u32[]', space=smem, size = 0x4, offset = 0x4, fixed_abs, tag = 'smem constant byte address 0x4 - core index']
  #allocation1 [shape = 'u32[144,128]{1,0:T(1,128)}', space=vmem, size = 0x12000, scoped, tag = 'internal scratch']
  %s0 = inlined_call_operand.hbm [shape: bf16[2,1,90,4], index: 0, kind: input, shape index: {}]
  %s1 = inlined_call_operand.hbm [shape: bf16[2,1,81,4], index: 1, kind: input, shape index: {}]
  %s2 = inlined_call_operand.hbm [shape: bf16[2,1,81,4], index: 2, kind: input, shape index: {}]
  %s3 = inlined_call_operand.hbm [shape: bf16[2,1,72,4], index: 3, kind: input, shape index: {}]
  %s4 = inlined_call_operand.hbm [shape: bf16[4,4,128], index: 4, kind: input, shape index: {}]
  %s5 = inlined_call_operand.hbm [shape: bf16[2,4,128], index: 5, kind: input, shape index: {}]
  %s6 = inlined_call_operand.hbm [shape: bf16[2,4,128], index: 6, kind: input, shape index: {}]
  %s7 = inlined_call_operand.hbm [shape: bf16[1,4,128], index: 7, kind: input, shape index: {}]
  %s8 = inlined_call_operand.hbm [shape: f32[1,128], index: 8, kind: input, shape index: {}]
  %s9 = inlined_call_operand.hbm [shape: bf16[2,1,72,128], index: 9, kind: output, shape index: {}]
  %s10 = sld [smem:[#allocation0]]
  $region105: #{conv2x_forward.2} parent=0
    _
  %s12 = ssub.s32 1, %s10
  %s13 = scalar_select 0, %s12, %s10
  $region1: #{conv2x_forward.2} parent=0
    #allocation2 [shape = 'u8[49152]{0}', space=vmem, size = 0xc000, scoped, tag = 'input window, operand 0']
    #allocation3 [shape = 's32[2]{0}', space=sflag, size = 0x8, scoped, tag = 'scoped memory for conv2x_forward.2']
    #allocation4 [shape = 's32[2]{0}', space=sflag, size = 0x8, scoped, tag = 'scoped memory for conv2x_forward.2']
    #allocation5 [shape = 'u8[45056]{0}', space=vmem, size = 0xb000, scoped, tag = 'input window, operand 1']
    #allocation6 [shape = 's32[2]{0}', space=sflag, size = 0x8, scoped, tag = 'scoped memory for conv2x_forward.2']
    #allocation7 [shape = 'u8[45056]{0}', space=vmem, size = 0xb000, scoped, tag = 'input window, operand 2']
    #allocation8 [shape = 'u8[36864]{0}', space=vmem, size = 0x9000, scoped, tag = 'input window, operand 3']
    #allocation9 [shape = 's32[2]{0}', space=sflag, size = 0x8, scoped, tag = 'scoped memory for conv2x_forward.2']
    #allocation10 [shape = 'u8[4096]{0}', space=vmem, size = 0x1000, scoped, tag = 'input window, operand 4, single buffered']
    #allocation11 [shape = 'u8[2048]{0}', space=vmem, size = 0x800, scoped, tag = 'input window, operand 5, single buffered']
    #allocation12 [shape = 's32[1]{0}', space=sflag, size = 0x4, scoped, tag = 'scoped memory for conv2x_forward.2']
    #allocation13 [shape = 'u8[2048]{0}', space=vmem, size = 0x800, scoped, tag = 'input window, operand 6, single buffered']
    #allocation14 [shape = 'u8[1024]{0}', space=vmem, size = 0x400, scoped, tag = 'input window, operand 7, single buffered']
    #allocation15 [shape = 's32[1]{0}', space=sflag, size = 0x4, scoped, tag = 'scoped memory for conv2x_forward.2']
    #allocation16 [shape = 'u8[512]{0}', space=vmem, size = 0x400, scoped, tag = 'input window, operand 8, single buffered']
    #allocation17 [shape = 'u8[36864]{0}', space=vmem, size = 0x9000, scoped, tag = 'output window, operand 0']
    %14 = vsyncpa [#allocation3], 0
    %s15 = scalar_lea.sflag [#allocation3], 1
    %16 = vsyncpa %s15, 0
    %17 = vsyncpa [#allocation6], 0
    %s18 = scalar_lea.sflag [#allocation6], 1
    %19 = vsyncpa %s18, 0
    %20 = vsyncpa [#allocation9], 0
    %s21 = scalar_lea.sflag [#allocation9], 1
    %22 = vsyncpa %s21, 0
    %23 = vsyncpa [#allocation12], 0
    %24 = vsyncpa [#allocation15], 0
    %25 = vsyncpa [#allocation4], 0
    %s26 = scalar_lea.sflag [#allocation4], 1
    %27 = vsyncpa %s26, 0
    loop: start=0, step=1, limit=4
    $region2: #{conv2x_forward.2} parent=1 // loop_pre_header
      _
    $region3: #{conv2x_forward.2} parent=1 // loop_header
      %s29 = sphi 0, %s33
      %p30 = scmp.ge.s32.totalorder %s29, 4
      %s36 = sphi 0, %s48
      %s37 = sphi 0, %s44
      %s38 = sphi 0, %s36
      %s39 = sphi 0, %s37
      %s40 = sphi 0, %s38
      %s41 = sphi 0, %s39
      %s53 = sphi 0, %s55
      %s56 = sphi 0, %s53
      %s57 = sphi 0, %s56
      %s73 = sphi 0, %s57
      %s81 = sphi 0, %s83
      %s84 = sphi 0, %s81
      %s85 = sphi 0, %s84
      %s101 = sphi 0, %s85
      %s109 = sphi 0, %s111
      %s112 = sphi 0, %s109
      %s113 = sphi 0, %s112
      %s129 = sphi 0, %s113
      %s137 = sphi 0, %s139
      %s140 = sphi 0, %s137
      %s141 = sphi 0, %s140
      %s157 = sphi 0, %s141
      %s161 = sphi 0, %s161
      %s163 = sphi 0, %s161
      %s164 = sphi 0, %s163
      %s178 = sphi 0, %s164
      %s182 = sphi 0, %s182
      %s184 = sphi 0, %s182
      %s185 = sphi 0, %s184
      %s199 = sphi 0, %s185
      %s203 = sphi 0, %s203
      %s205 = sphi 0, %s203
      %s206 = sphi 0, %s205
      %s220 = sphi 0, %s206
      %s224 = sphi 0, %s224
      %s226 = sphi 0, %s224
      %s227 = sphi 0, %s226
      %s241 = sphi 0, %s227
      %s245 = sphi 0, %s245
      %s247 = sphi 0, %s245
      %s248 = sphi 0, %s247
      %s262 = sphi 0, %s248
      %s270 = sphi 0, %s272
      %s273 = sphi 0, %s270
      %s274 = sphi 0, %s273
      %s290 = sphi 0, %s274
    $region4: #{conv2x_forward.2} parent=1 // loop_header_branch
      %32 = sbr.rel (%p30) target = $region8
    $region5: #{conv2x_forward.2} parent=1 // loop_body
      %s34 = ssub.s32 %s29, 1
      %s35 = ssub.s32 %s29, 2
      %s42 = sadd.s32 1, %s37
      %p43 = scmp.ge.s32.totalorder %s42, 1
      %s44 = scalar_select %p43, 0, %s42
      %s45 = sadd.s32 1, %s36
      %s46 = scalar_select %p43, %s45, %s36
      %p47 = scmp.ge.s32.totalorder %s46, 2
      %s48 = scalar_select %p47, 0, %s46
      %s49 = ssub.s32 %s36, %s48
      %s50 = ssub.s32 %s37, %s44
      %s51 = sor.u32 %s49, %s50
      %p52 = scmp.eq.s32.totalorder %s51, 0
      %s54 = sadd.s32 %s53, 1
      %s55 = scalar_select %p52, %s53, %s54
      %p58 = pneg %p52
      %p59 = scmp.eq.s32.totalorder %s29, 1
      %p60 = por %p58, %p59
      %p61 = scmp.ne.s32.totalorder %s53, %s56
      %p62 = scmp.eq.s32.totalorder %s29, 0
      %p63 = por %p61, %p62
      %p64 = scmp.ne.s32.totalorder %s53, %s56
      %p65 = scmp.eq.s32.totalorder %s34, 1
      %p66 = por %p64, %p65
      %p67 = scmp.ne.s32.totalorder %s56, %s57
      %p68 = scmp.eq.s32.totalorder %s34, 0
      %p69 = por %p67, %p68
      %p70 = scmp.ne.s32.totalorder %s56, %s57
      %p71 = scmp.eq.s32.totalorder %s35, 1
      %p72 = por %p70, %p71
      %p74 = scmp.ne.s32.totalorder %s57, %s73
      %p75 = scmp.eq.s32.totalorder %s35, 0
      %p76 = por %p74, %p75
      %s77 = ssub.s32 %s36, %s48
      %s78 = ssub.s32 %s37, %s44
      %s79 = sor.u32 %s77, %s78
      %p80 = scmp.eq.s32.totalorder %s79, 0
      %s82 = sadd.s32 %s81, 1
      %s83 = scalar_select %p80, %s81, %s82
      %p86 = pneg %p80
      %p87 = scmp.eq.s32.totalorder %s29, 1
      %p88 = por %p86, %p87
      %p89 = scmp.ne.s32.totalorder %s81, %s84
      %p90 = scmp.eq.s32.totalorder %s29, 0
      %p91 = por %p89, %p90
      %p92 = scmp.ne.s32.totalorder %s81, %s84
      %p93 = scmp.eq.s32.totalorder %s34, 1
      %p94 = por %p92, %p93
      %p95 = scmp.ne.s32.totalorder %s84, %s85
      %p96 = scmp.eq.s32.totalorder %s34, 0
      %p97 = por %p95, %p96
      %p98 = scmp.ne.s32.totalorder %s84, %s85
      %p99 = scmp.eq.s32.totalorder %s35, 1
      %p100 = por %p98, %p99
      %p102 = scmp.ne.s32.totalorder %s85, %s101
      %p103 = scmp.eq.s32.totalorder %s35, 0
      %p104 = por %p102, %p103
      %s105 = ssub.s32 %s36, %s48
      %s106 = ssub.s32 %s37, %s44
      %s107 = sor.u32 %s105, %s106
      %p108 = scmp.eq.s32.totalorder %s107, 0
      %s110 = sadd.s32 %s109, 1
      %s111 = scalar_select %p108, %s109, %s110
      %p114 = pneg %p108
      %p115 = scmp.eq.s32.totalorder %s29, 1
      %p116 = por %p114, %p115
      %p117 = scmp.ne.s32.totalorder %s109, %s112
      %p118 = scmp.eq.s32.totalorder %s29, 0
      %p119 = por %p117, %p118
      %p120 = scmp.ne.s32.totalorder %s109, %s112
      %p121 = scmp.eq.s32.totalorder %s34, 1
      %p122 = por %p120, %p121
      %p123 = scmp.ne.s32.totalorder %s112, %s113
      %p124 = scmp.eq.s32.totalorder %s34, 0
      %p125 = por %p123, %p124
      %p126 = scmp.ne.s32.totalorder %s112, %s113
      %p127 = scmp.eq.s32.totalorder %s35, 1
      %p128 = por %p126, %p127
      %p130 = scmp.ne.s32.totalorder %s113, %s129
      %p131 = scmp.eq.s32.totalorder %s35, 0
      %p132 = por %p130, %p131
      %s133 = ssub.s32 %s36, %s48
      %s134 = ssub.s32 %s37, %s44
      %s135 = sor.u32 %s133, %s134
      %p136 = scmp.eq.s32.totalorder %s135, 0
      %s138 = sadd.s32 %s137, 1
      %s139 = scalar_select %p136, %s137, %s138
      %p142 = pneg %p136
      %p143 = scmp.eq.s32.totalorder %s29, 1
      %p144 = por %p142, %p143
      %p145 = scmp.ne.s32.totalorder %s137, %s140
      %p146 = scmp.eq.s32.totalorder %s29, 0
      %p147 = por %p145, %p146
      %p148 = scmp.ne.s32.totalorder %s137, %s140
      %p149 = scmp.eq.s32.totalorder %s34, 1
      %p150 = por %p148, %p149
      %p151 = scmp.ne.s32.totalorder %s140, %s141
      %p152 = scmp.eq.s32.totalorder %s34, 0
      %p153 = por %p151, %p152
      %p154 = scmp.ne.s32.totalorder %s140, %s141
      %p155 = scmp.eq.s32.totalorder %s35, 1
      %p156 = por %p154, %p155
      %p158 = scmp.ne.s32.totalorder %s141, %s157
      %p159 = scmp.eq.s32.totalorder %s35, 0
      %p160 = por %p158, %p159
      %s162 = sadd.s32 %s161, 1
      %p165 = scmp.eq.s32.totalorder %s29, 1
      %p166 = scmp.ne.s32.totalorder %s161, %s163
      %p167 = scmp.eq.s32.totalorder %s29, 0
      %p168 = por %p166, %p167
      %p169 = scmp.ne.s32.totalorder %s161, %s163
      %p170 = scmp.eq.s32.totalorder %s34, 1
      %p171 = por %p169, %p170
      %p172 = scmp.ne.s32.totalorder %s163, %s164
      %p173 = scmp.eq.s32.totalorder %s34, 0
      %p174 = por %p172, %p173
      %p175 = scmp.ne.s32.totalorder %s163, %s164
      %p176 = scmp.eq.s32.totalorder %s35, 1
      %p177 = por %p175, %p176
      %p179 = scmp.ne.s32.totalorder %s164, %s178
      %p180 = scmp.eq.s32.totalorder %s35, 0
      %p181 = por %p179, %p180
      %s183 = sadd.s32 %s182, 1
      %p186 = scmp.eq.s32.totalorder %s29, 1
      %p187 = scmp.ne.s32.totalorder %s182, %s184
      %p188 = scmp.eq.s32.totalorder %s29, 0
      %p189 = por %p187, %p188
      %p190 = scmp.ne.s32.totalorder %s182, %s184
      %p191 = scmp.eq.s32.totalorder %s34, 1
      %p192 = por %p190, %p191
      %p193 = scmp.ne.s32.totalorder %s184, %s185
      %p194 = scmp.eq.s32.totalorder %s34, 0
      %p195 = por %p193, %p194
      %p196 = scmp.ne.s32.totalorder %s184, %s185
      %p197 = scmp.eq.s32.totalorder %s35, 1
      %p198 = por %p196, %p197
      %p200 = scmp.ne.s32.totalorder %s185, %s199
      %p201 = scmp.eq.s32.totalorder %s35, 0
      %p202 = por %p200, %p201
      %s204 = sadd.s32 %s203, 1
      %p207 = scmp.eq.s32.totalorder %s29, 1
      %p208 = scmp.ne.s32.totalorder %s203, %s205
      %p209 = scmp.eq.s32.totalorder %s29, 0
      %p210 = por %p208, %p209
      %p211 = scmp.ne.s32.totalorder %s203, %s205
      %p212 = scmp.eq.s32.totalorder %s34, 1
      %p213 = por %p211, %p212
      %p214 = scmp.ne.s32.totalorder %s205, %s206
      %p215 = scmp.eq.s32.totalorder %s34, 0
      %p216 = por %p214, %p215
      %p217 = scmp.ne.s32.totalorder %s205, %s206
      %p218 = scmp.eq.s32.totalorder %s35, 1
      %p219 = por %p217, %p218
      %p221 = scmp.ne.s32.totalorder %s206, %s220
      %p222 = scmp.eq.s32.totalorder %s35, 0
      %p223 = por %p221, %p222
      %s225 = sadd.s32 %s224, 1
      %p228 = scmp.eq.s32.totalorder %s29, 1
      %p229 = scmp.ne.s32.totalorder %s224, %s226
      %p230 = scmp.eq.s32.totalorder %s29, 0
      %p231 = por %p229, %p230
      %p232 = scmp.ne.s32.totalorder %s224, %s226
      %p233 = scmp.eq.s32.totalorder %s34, 1
      %p234 = por %p232, %p233
      %p235 = scmp.ne.s32.totalorder %s226, %s227
      %p236 = scmp.eq.s32.totalorder %s34, 0
      %p237 = por %p235, %p236
      %p238 = scmp.ne.s32.totalorder %s226, %s227
      %p239 = scmp.eq.s32.totalorder %s35, 1
      %p240 = por %p238, %p239
      %p242 = scmp.ne.s32.totalorder %s227, %s241
      %p243 = scmp.eq.s32.totalorder %s35, 0
      %p244 = por %p242, %p243
      %s246 = sadd.s32 %s245, 1
      %p249 = scmp.eq.s32.totalorder %s29, 1
      %p250 = scmp.ne.s32.totalorder %s245, %s247
      %p251 = scmp.eq.s32.totalorder %s29, 0
      %p252 = por %p250, %p251
      %p253 = scmp.ne.s32.totalorder %s245, %s247
      %p254 = scmp.eq.s32.totalorder %s34, 1
      %p255 = por %p253, %p254
      %p256 = scmp.ne.s32.totalorder %s247, %s248
      %p257 = scmp.eq.s32.totalorder %s34, 0
      %p258 = por %p256, %p257
      %p259 = scmp.ne.s32.totalorder %s247, %s248
      %p260 = scmp.eq.s32.totalorder %s35, 1
      %p261 = por %p259, %p260
      %p263 = scmp.ne.s32.totalorder %s248, %s262
      %p264 = scmp.eq.s32.totalorder %s35, 0
      %p265 = por %p263, %p264
      %s266 = ssub.s32 %s36, %s48
      %s267 = ssub.s32 %s37, %s44
      %s268 = sor.u32 %s266, %s267
      %p269 = scmp.eq.s32.totalorder %s268, 0
      %s271 = sadd.s32 %s270, 1
      %s272 = scalar_select %p269, %s270, %s271
      %p275 = pneg %p269
      %p276 = scmp.eq.s32.totalorder %s29, 1
      %p277 = por %p275, %p276
      %p278 = scmp.ne.s32.totalorder %s270, %s273
      %p279 = scmp.eq.s32.totalorder %s29, 0
      %p280 = por %p278, %p279
      %p281 = scmp.ne.s32.totalorder %s270, %s273
      %p282 = scmp.eq.s32.totalorder %s34, 1
      %p283 = por %p281, %p282
      %p284 = scmp.ne.s32.totalorder %s273, %s274
      %p285 = scmp.eq.s32.totalorder %s34, 0
      %p286 = por %p284, %p285
      %p287 = scmp.ne.s32.totalorder %s273, %s274
      %p288 = scmp.eq.s32.totalorder %s35, 1
      %p289 = por %p287, %p288
      %p291 = scmp.ne.s32.totalorder %s274, %s290
      %p292 = scmp.eq.s32.totalorder %s35, 0
      %p293 = por %p291, %p292
      %p294 = scmp.le.s32.totalorder 1, %s29
      %p295 = scmp.lt.s32.totalorder %s29, 3
      %p296 = pnand %p294, %p295
      %p297 = pneg %p296
      // Predicated region
      $region9: #{conv2x_forward.2} parent=5 // pred_check
        _
      $region10: #{conv2x_forward.2} parent=5 // pred_check_branch
        %299 = sbr.rel (%p296) target = $region12
      $region11: #{conv2x_forward.2} parent=5 // pred_region
        %s300 = ssub.s32 %s29, 1
        // Predicated region
        $region13: #{conv2x_forward.2} parent=11 // pred_check
          %p301 = pneg %p174
        $region14: #{conv2x_forward.2} parent=11 // pred_check_branch
          %303 = sbr.rel (%p301) target = $region16
        $region15: #{conv2x_forward.2} parent=11 // pred_region
          %s305 = ssub.s32 128, 128
          %306 = vsyncadd [#allocation9], %s305
          %s307 = sshll.u32 [#allocation10], 4
          %s308 = int_to_ptr.vmem [resolvable:$true] %s307
          %313 = dma.hbm_to_vmem [thread:$0]  %s4, 128, %s308, [#allocation9], 32, 32, 2
        $region16: #{conv2x_forward.2} parent=11 // pred_fallthru
          _
        // Predicated region
        $region17: #{conv2x_forward.2} parent=11 // pred_check
          %p314 = pneg %p195
        $region18: #{conv2x_forward.2} parent=11 // pred_check_branch
          %316 = sbr.rel (%p314) target = $region20
        $region19: #{conv2x_forward.2} parent=11 // pred_region
          %s318 = ssub.s32 64, 64
          %319 = vsyncadd [#allocation12], %s318
          %s320 = sshll.u32 [#allocation11], 4
          %s321 = int_to_ptr.vmem [resolvable:$true] %s320
          %326 = dma.hbm_to_vmem [thread:$0]  %s5, 64, %s321, [#allocation12], 32, 32, 2
        $region20: #{conv2x_forward.2} parent=11 // pred_fallthru
          _
        // Predicated region
        $region21: #{conv2x_forward.2} parent=11 // pred_check
          %p327 = pneg %p216
        $region22: #{conv2x_forward.2} parent=11 // pred_check_branch
          %329 = sbr.rel (%p327) target = $region24
        $region23: #{conv2x_forward.2} parent=11 // pred_region
          %s331 = ssub.s32 64, 64
          %332 = vsyncadd [#allocation12], %s331
          %s333 = sshll.u32 [#allocation13], 4
          %s334 = int_to_ptr.vmem [resolvable:$true] %s333
          %339 = dma.hbm_to_vmem [thread:$0]  %s6, 64, %s334, [#allocation12], 32, 32, 2
        $region24: #{conv2x_forward.2} parent=11 // pred_fallthru
          _
        // Predicated region
        $region25: #{conv2x_forward.2} parent=11 // pred_check
          %p340 = pneg %p237
        $region26: #{conv2x_forward.2} parent=11 // pred_check_branch
          %342 = sbr.rel (%p340) target = $region28
        $region27: #{conv2x_forward.2} parent=11 // pred_region
          %s344 = ssub.s32 32, 32
          %345 = vsyncadd [#allocation15], %s344
          %s347 = sshll.u32 [#allocation14], 4
          %s348 = int_to_ptr.vmem [resolvable:$true] %s347
          %350 = dma.hbm_to_vmem [thread:$0]  %s7, 32, %s348, [#allocation15]
        $region28: #{conv2x_forward.2} parent=11 // pred_fallthru
          _
        // Predicated region
        $region29: #{conv2x_forward.2} parent=11 // pred_check
          %p351 = pneg %p258
        $region30: #{conv2x_forward.2} parent=11 // pred_check_branch
          %353 = sbr.rel (%p351) target = $region32
        $region31: #{conv2x_forward.2} parent=11 // pred_region
          %s355 = ssub.s32 16, 16
          %356 = vsyncadd [#allocation15], %s355
          %s358 = sshll.u32 [#allocation16], 4
          %s359 = int_to_ptr.vmem [resolvable:$true] %s358
          %361 = dma.hbm_to_vmem [thread:$0]  %s8, 16, %s359, [#allocation15]
        $region32: #{conv2x_forward.2} parent=11 // pred_fallthru
          _
      $region12: #{conv2x_forward.2} parent=5 // pred_fallthru
        _
      %p362 = scmp.lt.s32.totalorder %s29, 2
      // Predicated region
      $region33: #{conv2x_forward.2} parent=5 // pred_check
        %p363 = pneg %p362
      $region34: #{conv2x_forward.2} parent=5 // pred_check_branch
        %365 = sbr.rel (%p363) target = $region36
      $region35: #{conv2x_forward.2} parent=5 // pred_region
        // Predicated region
        $region37: #{conv2x_forward.2} parent=35 // pred_check
          %p366 = pneg %p63
        $region38: #{conv2x_forward.2} parent=35 // pred_check_branch
          %368 = sbr.rel (%p366) target = $region40
        $region39: #{conv2x_forward.2} parent=35 // pred_region
          %s369 = sand.u32 %s53, 1
          %s370 = scalar_lea.sflag [#allocation3], %s369
          %s371 = sand.u32 %s53, 1
          %s372 = smul.addr %s371, 48
          %s373 = scalar_lea.vmem [#allocation2], %s372
          %s375 = ssub.s32 768, 768
          %376 = vsyncadd %s370, %s375
          %s377 = smul.addr %s37, 12
          %s378 = smul.addr %s36, 12
          %s379 = sadd.s32 %s377, %s378
          %s380 = smul.addr %s379, 64
          %s381 = scalar_lea.hbm %s0, %s380
          %s382 = sshll.u32 %s373, 4
          %s383 = int_to_ptr.vmem [resolvable:$true] %s382
          %388 = dma.hbm_to_vmem [thread:$0]  %s381, 768, %s383, %s370, 64, 64, 4
        $region40: #{conv2x_forward.2} parent=35 // pred_fallthru
          _
        // Predicated region
        $region41: #{conv2x_forward.2} parent=35 // pred_check
          %p389 = pneg %p91
        $region42: #{conv2x_forward.2} parent=35 // pred_check_branch
          %391 = sbr.rel (%p389) target = $region44
        $region43: #{conv2x_forward.2} parent=35 // pred_region
          %s392 = sand.u32 %s29, 1
          %s393 = scalar_lea.sflag [#allocation6], %s392
          %s394 = sand.u32 %s81, 1
          %s395 = smul.addr %s394, 44
          %s396 = scalar_lea.vmem [#allocation5], %s395
          %s398 = ssub.s32 704, 704
          %399 = vsyncadd %s393, %s398
          %s400 = smul.addr %s37, 11
          %s401 = smul.addr %s36, 11
          %s402 = sadd.s32 %s400, %s401
          %s403 = smul.addr %s402, 64
          %s404 = scalar_lea.hbm %s1, %s403
          %s405 = sshll.u32 %s396, 4
          %s406 = int_to_ptr.vmem [resolvable:$true] %s405
          %411 = dma.hbm_to_vmem [thread:$0]  %s404, 704, %s406, %s393, 64, 64, 4
        $region44: #{conv2x_forward.2} parent=35 // pred_fallthru
          _
        // Predicated region
        $region45: #{conv2x_forward.2} parent=35 // pred_check
          %p412 = pneg %p119
        $region46: #{conv2x_forward.2} parent=35 // pred_check_branch
          %414 = sbr.rel (%p412) target = $region48
        $region47: #{conv2x_forward.2} parent=35 // pred_region
          %s415 = sand.u32 %s29, 1
          %s416 = scalar_lea.sflag [#allocation6], %s415
          %s417 = sand.u32 %s109, 1
          %s418 = smul.addr %s417, 44
          %s419 = scalar_lea.vmem [#allocation7], %s418
          %s421 = ssub.s32 704, 704
          %422 = vsyncadd %s416, %s421
          %s423 = smul.addr %s37, 11
          %s424 = smul.addr %s36, 11
          %s425 = sadd.s32 %s423, %s424
          %s426 = smul.addr %s425, 64
          %s427 = scalar_lea.hbm %s2, %s426
          %s428 = sshll.u32 %s419, 4
          %s429 = int_to_ptr.vmem [resolvable:$true] %s428
          %434 = dma.hbm_to_vmem [thread:$0]  %s427, 704, %s429, %s416, 64, 64, 4
        $region48: #{conv2x_forward.2} parent=35 // pred_fallthru
          _
        // Predicated region
        $region49: #{conv2x_forward.2} parent=35 // pred_check
          %p435 = pneg %p147
        $region50: #{conv2x_forward.2} parent=35 // pred_check_branch
          %437 = sbr.rel (%p435) target = $region52
        $region51: #{conv2x_forward.2} parent=35 // pred_region
          %s438 = sand.u32 %s29, 1
          %s439 = scalar_lea.sflag [#allocation9], %s438
          %s440 = sand.u32 %s137, 1
          %s441 = smul.addr %s440, 36
          %s442 = scalar_lea.vmem [#allocation8], %s441
          %s444 = ssub.s32 576, 576
          %445 = vsyncadd %s439, %s444
          %s446 = smul.addr %s37, 9
          %s447 = smul.addr %s36, 9
          %s448 = sadd.s32 %s446, %s447
          %s449 = smul.addr %s448, 64
          %s450 = scalar_lea.hbm %s3, %s449
          %s451 = sshll.u32 %s442, 4
          %s452 = int_to_ptr.vmem [resolvable:$true] %s451
          %457 = dma.hbm_to_vmem [thread:$0]  %s450, 576, %s452, %s439, 64, 64, 4
        $region52: #{conv2x_forward.2} parent=35 // pred_fallthru
          _
      $region36: #{conv2x_forward.2} parent=5 // pred_fallthru
        _
      %p458 = scmp.le.s32.totalorder 1, %s29
      %p459 = scmp.lt.s32.totalorder %s29, 3
      %p460 = pnand %p458, %p459
      %p461 = pneg %p460
      // Predicated region
      $region53: #{conv2x_forward.2} parent=5 // pred_check
        _
      $region54: #{conv2x_forward.2} parent=5 // pred_check_branch
        %463 = sbr.rel (%p460) target = $region56
      $region55: #{conv2x_forward.2} parent=5 // pred_region
        %s464 = ssub.s32 %s29, 1
        %s465 = sand.u32 %s56, 1
        %s466 = scalar_lea.sflag [#allocation3], %s465
        %s467 = sand.u32 %s56, 1
        %s468 = smul.addr %s467, 48
        %s469 = scalar_lea.vmem [#allocation2], %s468
        // Predicated region
        $region57: #{conv2x_forward.2} parent=55 // pred_check
          %p470 = pneg %p69
        $region58: #{conv2x_forward.2} parent=55 // pred_check_branch
          %472 = sbr.rel (%p470) target = $region60
        $region59: #{conv2x_forward.2} parent=55 // pred_region
          %473 = dma.done %s466, 768
        $region60: #{conv2x_forward.2} parent=55 // pred_fallthru
          _
        %s474 = sand.u32 %s34, 1
        %s475 = scalar_lea.sflag [#allocation6], %s474
        %s476 = sand.u32 %s84, 1
        %s477 = smul.addr %s476, 44
        %s478 = scalar_lea.vmem [#allocation5], %s477
        // Predicated region
        $region61: #{conv2x_forward.2} parent=55 // pred_check
          %p479 = pneg %p97
        $region62: #{conv2x_forward.2} parent=55 // pred_check_branch
          %481 = sbr.rel (%p479) target = $region64
        $region63: #{conv2x_forward.2} parent=55 // pred_region
          %482 = dma.done %s475, 704
        $region64: #{conv2x_forward.2} parent=55 // pred_fallthru
          _
        %s483 = sand.u32 %s34, 1
        %s484 = scalar_lea.sflag [#allocation6], %s483
        %s485 = sand.u32 %s112, 1
        %s486 = smul.addr %s485, 44
        %s487 = scalar_lea.vmem [#allocation7], %s486
        // Predicated region
        $region65: #{conv2x_forward.2} parent=55 // pred_check
          %p488 = pneg %p125
        $region66: #{conv2x_forward.2} parent=55 // pred_check_branch
          %490 = sbr.rel (%p488) target = $region68
        $region67: #{conv2x_forward.2} parent=55 // pred_region
          %491 = dma.done %s484, 704
        $region68: #{conv2x_forward.2} parent=55 // pred_fallthru
          _
        %s492 = sand.u32 %s34, 1
        %s493 = scalar_lea.sflag [#allocation9], %s492
        %s494 = sand.u32 %s140, 1
        %s495 = smul.addr %s494, 36
        %s496 = scalar_lea.vmem [#allocation8], %s495
        // Predicated region
        $region69: #{conv2x_forward.2} parent=55 // pred_check
          %p497 = pneg %p153
        $region70: #{conv2x_forward.2} parent=55 // pred_check_branch
          %499 = sbr.rel (%p497) target = $region72
        $region71: #{conv2x_forward.2} parent=55 // pred_region
          %500 = dma.done %s493, 576
        $region72: #{conv2x_forward.2} parent=55 // pred_fallthru
          _
        // Predicated region
        $region73: #{conv2x_forward.2} parent=55 // pred_check
          %p501 = pneg %p174
        $region74: #{conv2x_forward.2} parent=55 // pred_check_branch
          %503 = sbr.rel (%p501) target = $region76
        $region75: #{conv2x_forward.2} parent=55 // pred_region
          %504 = dma.done [#allocation9], 128
        $region76: #{conv2x_forward.2} parent=55 // pred_fallthru
          _
        // Predicated region
        $region77: #{conv2x_forward.2} parent=55 // pred_check
          %p505 = pneg %p195
        $region78: #{conv2x_forward.2} parent=55 // pred_check_branch
          %507 = sbr.rel (%p505) target = $region80
        $region79: #{conv2x_forward.2} parent=55 // pred_region
          %508 = dma.done [#allocation12], 64
        $region80: #{conv2x_forward.2} parent=55 // pred_fallthru
          _
        // Predicated region
        $region81: #{conv2x_forward.2} parent=55 // pred_check
          %p509 = pneg %p216
        $region82: #{conv2x_forward.2} parent=55 // pred_check_branch
          %511 = sbr.rel (%p509) target = $region84
        $region83: #{conv2x_forward.2} parent=55 // pred_region
          %512 = dma.done [#allocation12], 64
        $region84: #{conv2x_forward.2} parent=55 // pred_fallthru
          _
        // Predicated region
        $region85: #{conv2x_forward.2} parent=55 // pred_check
          %p513 = pneg %p237
        $region86: #{conv2x_forward.2} parent=55 // pred_check_branch
          %515 = sbr.rel (%p513) target = $region88
        $region87: #{conv2x_forward.2} parent=55 // pred_region
          %516 = dma.done [#allocation15], 32
        $region88: #{conv2x_forward.2} parent=55 // pred_fallthru
          _
        // Predicated region
        $region89: #{conv2x_forward.2} parent=55 // pred_check
          %p517 = pneg %p258
        $region90: #{conv2x_forward.2} parent=55 // pred_check_branch
          %519 = sbr.rel (%p517) target = $region92
        $region91: #{conv2x_forward.2} parent=55 // pred_region
          %520 = dma.done [#allocation15], 16
        $region92: #{conv2x_forward.2} parent=55 // pred_fallthru
          _
        %s521 = sand.u32 %s56, 1
        %s522 = scalar_lea.sflag [#allocation3], %s521
        %s523 = sand.u32 %s56, 1
        %s524 = smul.addr %s523, 48
        %s525 = scalar_lea.vmem [#allocation2], %s524
        %p526 = pneg %p69
        %p527 = pneg %p66
        %s528 = sand.u32 %s34, 1
        %s529 = scalar_lea.sflag [#allocation6], %s528
        %s530 = sand.u32 %s84, 1
        %s531 = smul.addr %s530, 44
        %s532 = scalar_lea.vmem [#allocation5], %s531
        %p533 = pneg %p97
        %p534 = pneg %p94
        %s535 = sand.u32 %s34, 1
        %s536 = scalar_lea.sflag [#allocation6], %s535
        %s537 = sand.u32 %s112, 1
        %s538 = smul.addr %s537, 44
        %s539 = scalar_lea.vmem [#allocation7], %s538
        %p540 = pneg %p125
        %p541 = pneg %p122
        %s542 = sand.u32 %s34, 1
        %s543 = scalar_lea.sflag [#allocation9], %s542
        %s544 = sand.u32 %s140, 1
        %s545 = smul.addr %s544, 36
        %s546 = scalar_lea.vmem [#allocation8], %s545
        %p547 = pneg %p153
        %p548 = pneg %p150
        %p549 = pneg %p174
        %p550 = pneg %p171
        %p551 = pneg %p195
        %p552 = pneg %p192
        %p553 = pneg %p216
        %p554 = pneg %p213
        %p555 = pneg %p237
        %p556 = pneg %p234
        %p557 = pneg %p258
        %p558 = pneg %p255
        %p559 = pneg %p286
        %p560 = pneg %p283
        %s561 = sand.u32 %s273, 1
        %s562 = scalar_lea.sflag [#allocation4], %s561
        %s563 = sand.u32 %s273, 1
        %s564 = smul.addr %s563, 36
        %s565 = scalar_lea.vmem [#allocation17], %s564
        %v567 = vld [vmem:[%s469] sm:$0xf]
        %v568 = vld [vmem:[%s469 + $0x4] sm:$0xf]
        %v569 = vld [vmem:[%s469 + $0x8] sm:$0xf]
        %v570 = vld [vmem:[%s469 + $0xc] sm:$0xf]
        %v571 = vld [vmem:[%s469 + $0x10] sm:$0xf]
        %v572 = vld [vmem:[%s469 + $0x14] sm:$0xf]
        %v573 = vld [vmem:[%s469 + $0x18] sm:$0xf]
        %v574 = vld [vmem:[%s469 + $0x1c] sm:$0xf]
        %v575 = vld [vmem:[%s469 + $0x20] sm:$0xf]
        %v576 = vld [vmem:[#allocation10] sm:$0x3]
        %v577 = vld [vmem:[%s469 + $0x24] sm:$0x1]
        %s578 = scalar_lea.vmem [#allocation10], 2
        %v579 = vld [vmem:[%s578] sm:$0x3]
        %v590 = vunpack.c.l.b16 %v567
        %v591 = vunpack.c.l.b16 %v568
        %v592 = vunpack.c.l.b16 %v569
        %v593 = vunpack.c.l.b16 %v570
        %v594 = vunpack.c.l.b16 %v571
        %v595 = vunpack.c.l.b16 %v572
        %v596 = vunpack.c.l.b16 %v573
        %v597 = vunpack.c.l.b16 %v574
        %v598 = vunpack.c.l.b16 %v575
        %v599 = vunpack.c.l.b16 %v577
        %v600 = vpack.c.b16 %v591, %v590
        %v601 = vpack.c.b16 %v593, %v592
        %v602 = vpack.c.b16 %v595, %v594
        %v603 = vpack.c.b16 %v597, %v596
        %v604 = vpack.c.b16 %v599, %v598
        %vm605 = vsmask.f32 7424
        %v607 = vshrl.u32 %v600, 16
        %v609 = vshll.u32 %v600, 16
        %v611 = vrot.slane %v609, 1
        %v612 = vor.u32 %v607, %v611
        %v614 = vshll.u32 %v601, 16
        %v616 = vrot.slane %v614, 1
        %v617 = vsel %vm605, %v612, %v616
        %v618 = vshrl.u32 %v601, 16
        %v620 = vor.u32 %v618, %v616
        %v622 = vshll.u32 %v602, 16
        %v624 = vrot.slane %v622, 1
        %v625 = vsel %vm605, %v620, %v624
        %v626 = vshrl.u32 %v602, 16
        %v628 = vor.u32 %v626, %v624
        %v630 = vshll.u32 %v603, 16
        %v632 = vrot.slane %v630, 1
        %v633 = vsel %vm605, %v628, %v632
        %v634 = vshrl.u32 %v603, 16
        %v636 = vor.u32 %v634, %v632
        %v638 = vshll.u32 %v604, 16
        %v640 = vrot.slane %v638, 1
        %v641 = vsel %vm605, %v636, %v640
        %v642 = vshrl.u32 %v604, 16
        %v644 = vor.u32 %v642, %v640
        %vm645 = vcmask 31744
        %v647 = vsel %vm645, %v617, 0
        %v650 = vsel %vm645, %v625, 0
        %v653 = vsel %vm645, %v633, 0
        %v656 = vsel %vm645, %v641, 0
        %v659 = vsel %vm645, %v644, 0
        %vm661 = vcmask 1041408
        %v663 = vsel %vm661, %v579, 0
        %665 = vmatprep.subr.bf16.mxu0 0
        %666 = vmatpush1.bf16.msra.mxu0 %v663
        %667 = vmatprep.subr.bf16.mxu0 0
        %668 = vmatpush1.bf16.msra.mxu0 0
        %669 = vmatprep.subr.bf16.mxu0 0
        %670 = vmatpush1.bf16.msra.mxu0 0
        %671 = vmatprep.subr.bf16.mxu0 0
        %672 = vmatpush1.bf16.msra.mxu0 0
        %673 = vmatprep.subr.bf16.mxu0 0
        %674 = vmatpush1.bf16.msra.mxu0 0
        %675 = vmatprep.subr.bf16.mxu0 0
        %676 = vmatpush1.bf16.msra.mxu0 0
        %677 = vmatprep.subr.bf16.mxu0 0
        %678 = vmatpush1.bf16.msra.mxu0 0
        %679 = vmatprep.subr.bf16.mxu0 0
        %680 = vmatpush1.bf16.msra.mxu0 0
        %681 = vmatprep.subr.bf16.mxu0 0
        %682 = vmatpush1.bf16.msra.mxu0 0
        %683 = vmatprep.subr.bf16.mxu0 0
        %684 = vmatpush1.bf16.msra.mxu0 0
        %685 = vmatprep.subr.bf16.mxu0 0
        %686 = vmatpush1.bf16.msra.mxu0 0
        %687 = vmatprep.subr.bf16.mxu0 0
        %688 = vmatpush1.bf16.msra.mxu0 0
        %689 = vmatprep.subr.bf16.mxu0 0
        %690 = vmatpush1.bf16.msra.mxu0 0
        %691 = vmatprep.subr.bf16.mxu0 0
        %692 = vmatpush1.bf16.msra.mxu0 0
        %693 = vmatprep.subr.bf16.mxu0 0
        %694 = vmatpush1.bf16.msra.mxu0 0
        %695 = vmatprep.subr.bf16.mxu0 0
        %696 = vmatpush1.bf16.msra.mxu0 0
        %697 = vmatprep.mubr.bf16.mxu0 0
        %698 = vmatmul.mubr.bf16.gmra.mrb[0].mxu0 %v647
        %v699 = vpop.f32.mrb[0].mxu0
        %v700 = vadd.f32 0.0, %v699
        %v701 = vpop.f32.mrb[0].mxu0
        %v702 = vpop.f32.mrb[0].mxu0
        %v703 = vadd.f32 0.0, %v702
        %v704 = vpop.f32.mrb[0].mxu0
        %705 = vmatprep.mubr.bf16.mxu0 0
        %706 = vmatmul.mubr.bf16.gmra.mrb[0].mxu0 %v650
        %v707 = vpop.f32.mrb[0].mxu0
        %v708 = vadd.f32 0.0, %v707
        %v709 = vpop.f32.mrb[0].mxu0
        %v710 = vpop.f32.mrb[0].mxu0
        %v711 = vadd.f32 0.0, %v710
        %v712 = vpop.f32.mrb[0].mxu0
        %713 = vmatprep.mubr.bf16.mxu0 0
        %714 = vmatmul.mubr.bf16.gmra.mrb[0].mxu0 %v653
        %v715 = vpop.f32.mrb[0].mxu0
        %v716 = vadd.f32 0.0, %v715
        %v717 = vpop.f32.mrb[0].mxu0
        %v718 = vpop.f32.mrb[0].mxu0
        %v719 = vadd.f32 0.0, %v718
        %v720 = vpop.f32.mrb[0].mxu0
        %721 = vmatprep.mubr.bf16.mxu0 0
        %722 = vmatmul.mubr.bf16.gmra.mrb[0].mxu0 %v656
        %v723 = vpop.f32.mrb[0].mxu0
        %v724 = vadd.f32 0.0, %v723
        %v725 = vpop.f32.mrb[0].mxu0
        %v726 = vpop.f32.mrb[0].mxu0
        %v727 = vadd.f32 0.0, %v726
        %v728 = vpop.f32.mrb[0].mxu0
        %729 = vmatprep.mubr.bf16.mxu0 0
        %730 = vmatmul.mubr.bf16.gmra.mrb[0].mxu0 %v659
        %v731 = vpop.f32.mrb[0].mxu0
        %v732 = vadd.f32 0.0, %v731
        %v733 = vpop.f32.mrb[0].mxu0
        %v734 = vpop.f32.mrb[0].mxu0
        %v735 = vpop.f32.mrb[0].mxu0
        %736 = vdwg.mxu0
        %v737 = vpack.c.b16 %v598, %v598
        %v738 = vsel %vm645, %v600, 0
        %v740 = vsel %vm645, %v601, 0
        %v742 = vsel %vm645, %v602, 0
        %v744 = vsel %vm645, %v603, 0
        %v747 = vsel %vm645, %v737, 0
        %v750 = vsel %vm661, %v576, 0
        %752 = vmatprep.subr.bf16.mxu0 0
        %753 = vmatpush1.bf16.msra.mxu0 %v750
        %754 = vmatprep.subr.bf16.mxu0 0
        %755 = vmatpush1.bf16.msra.mxu0 0
        %756 = vmatprep.subr.bf16.mxu0 0
        %757 = vmatpush1.bf16.msra.mxu0 0
        %758 = vmatprep.subr.bf16.mxu0 0
        %759 = vmatpush1.bf16.msra.mxu0 0
        %760 = vmatprep.subr.bf16.mxu0 0
        %761 = vmatpush1.bf16.msra.mxu0 0
        %762 = vmatprep.subr.bf16.mxu0 0
        %763 = vmatpush1.bf16.msra.mxu0 0
        %764 = vmatprep.subr.bf16.mxu0 0
        %765 = vmatpush1.bf16.msra.mxu0 0
        %766 = vmatprep.subr.bf16.mxu0 0
        %767 = vmatpush1.bf16.msra.mxu0 0
        %768 = vmatprep.subr.bf16.mxu0 0
        %769 = vmatpush1.bf16.msra.mxu0 0
        %770 = vmatprep.subr.bf16.mxu0 0
        %771 = vmatpush1.bf16.msra.mxu0 0
        %772 = vmatprep.subr.bf16.mxu0 0
        %773 = vmatpush1.bf16.msra.mxu0 0
        %774 = vmatprep.subr.bf16.mxu0 0
        %775 = vmatpush1.bf16.msra.mxu0 0
        %776 = vmatprep.subr.bf16.mxu0 0
        %777 = vmatpush1.bf16.msra.mxu0 0
        %778 = vmatprep.subr.bf16.mxu0 0
        %779 = vmatpush1.bf16.msra.mxu0 0
        %780 = vmatprep.subr.bf16.mxu0 0
        %781 = vmatpush1.bf16.msra.mxu0 0
        %782 = vmatprep.subr.bf16.mxu0 0
        %783 = vmatpush1.bf16.msra.mxu0 0
        %784 = vmatprep.mubr.bf16.mxu0 0
        %785 = vmatmul.mubr.bf16.gmra.mrb[0].mxu0 %v738
        %v786 = vpop.f32.mrb[0].mxu0
        %v787 = vadd.f32 %v700, %v786
        %v788 = vpop.f32.mrb[0].mxu0
        %v789 = vpop.f32.mrb[0].mxu0
        %v790 = vadd.f32 %v703, %v789
        %v791 = vpop.f32.mrb[0].mxu0
        %792 = vmatprep.mubr.bf16.mxu0 0
        %793 = vmatmul.mubr.bf16.gmra.mrb[0].mxu0 %v740
        %v794 = vpop.f32.mrb[0].mxu0
        %v795 = vadd.f32 %v708, %v794
        %v796 = vpop.f32.mrb[0].mxu0
        %v797 = vpop.f32.mrb[0].mxu0
        %v798 = vadd.f32 %v711, %v797
        %v799 = vpop.f32.mrb[0].mxu0
        %800 = vmatprep.mubr.bf16.mxu0 0
        %801 = vmatmul.mubr.bf16.gmra.mrb[0].mxu0 %v742
        %v802 = vpop.f32.mrb[0].mxu0
        %v803 = vadd.f32 %v716, %v802
        %v804 = vpop.f32.mrb[0].mxu0
        %v805 = vpop.f32.mrb[0].mxu0
        %v806 = vadd.f32 %v719, %v805
        %v807 = vpop.f32.mrb[0].mxu0
        %808 = vmatprep.mubr.bf16.mxu0 0
        %809 = vmatmul.mubr.bf16.gmra.mrb[0].mxu0 %v744
        %v810 = vpop.f32.mrb[0].mxu0
        %v811 = vadd.f32 %v724, %v810
        %v812 = vpop.f32.mrb[0].mxu0
        %v813 = vpop.f32.mrb[0].mxu0
        %v814 = vadd.f32 %v727, %v813
        %v815 = vpop.f32.mrb[0].mxu0
        %816 = vmatprep.mubr.bf16.mxu0 0
        %817 = vmatmul.mubr.bf16.gmra.mrb[0].mxu0 %v747
        %v818 = vpop.f32.mrb[0].mxu0
        %v819 = vadd.f32 %v732, %v818
        %v820 = vpop.f32.mrb[0].mxu0
        %v821 = vpop.f32.mrb[0].mxu0
        %v822 = vpop.f32.mrb[0].mxu0
        %823 = vdwg.mxu0
        %v824 = vld [vmem:[%s469 + $0x4] sm:$0xf]
        %v825 = vld [vmem:[%s469 + $0x8] sm:$0xf]
        %v826 = vld [vmem:[%s469 + $0xc] sm:$0xf]
        %v827 = vld [vmem:[%s469 + $0x10] sm:$0xf]
        %v828 = vld [vmem:[%s469 + $0x14] sm:$0xf]
        %v829 = vld [vmem:[%s469 + $0x18] sm:$0xf]
        %v830 = vld [vmem:[%s469 + $0x1c] sm:$0xf]
        %v831 = vld [vmem:[%s469 + $0x20] sm:$0xf]
        %v832 = vld [vmem:[%s469 + $0x24] sm:$0xf]
        %v833 = vld [vmem:[%s469 + $0x28] sm:$0x1]
        %s834 = scalar_lea.vmem [#allocation10], 4
        %v835 = vld [vmem:[%s834] sm:$0x3]
        %v846 = vunpack.c.l.b16 %v824
        %v847 = vunpack.c.l.b16 %v825
        %v848 = vunpack.c.l.b16 %v826
        %v849 = vunpack.c.l.b16 %v827
        %v850 = vunpack.c.l.b16 %v828
        %v851 = vunpack.c.l.b16 %v829
        %v852 = vunpack.c.l.b16 %v830
        %v853 = vunpack.c.l.b16 %v831
        %v854 = vunpack.c.l.b16 %v832
        %v855 = vunpack.c.l.b16 %v833
        %v856 = vpack.c.b16 %v847, %v846
        %v857 = vpack.c.b16 %v849, %v848
        %v858 = vpack.c.b16 %v851, %v850
        %v859 = vpack.c.b16 %v853, %v852
        %v860 = vpack.c.b16 %v855, %v854
        %v862 = vshrl.u32 %v856, 16
        %v864 = vshll.u32 %v856, 16
        %v866 = vrot.slane %v864, 1
        %v867 = vor.u32 %v862, %v866
        %v869 = vshll.u32 %v857, 16
        %v871 = vrot.slane %v869, 1
        %v872 = vsel %vm605, %v867, %v871
        %v873 = vshrl.u32 %v857, 16
        %v875 = vor.u32 %v873, %v871
        %v877 = vshll.u32 %v858, 16
        %v879 = vrot.slane %v877, 1
        %v880 = vsel %vm605, %v875, %v879
        %v881 = vshrl.u32 %v858, 16
        %v883 = vor.u32 %v881, %v879
        %v885 = vshll.u32 %v859, 16
        %v887 = vrot.slane %v885, 1
        %v888 = vsel %vm605, %v883, %v887
        %v889 = vshrl.u32 %v859, 16
        %v891 = vor.u32 %v889, %v887
        %v893 = vshll.u32 %v860, 16
        %v895 = vrot.slane %v893, 1
        %v896 = vsel %vm605, %v891, %v895
        %v897 = vshrl.u32 %v860, 16
        %v899 = vor.u32 %v897, %v895
        %v901 = vsel %vm645, %v872, 0
        %v904 = vsel %vm645, %v880, 0
        %v907 = vsel %vm645, %v888, 0
        %v910 = vsel %vm645, %v896, 0
        %v913 = vsel %vm645, %v899, 0
        %v916 = vsel %vm661, %v835, 0
        %918 = vmatprep.subr.bf16.mxu0 0
        %919 = vmatpush1.bf16.msra.mxu0 %v916
        %920 = vmatprep.subr.bf16.mxu0 0
        %921 = vmatpush1.bf16.msra.mxu0 0
        %922 = vmatprep.subr.bf16.mxu0 0
        %923 = vmatpush1.bf16.msra.mxu0 0
        %924 = vmatprep.subr.bf16.mxu0 0
        %925 = vmatpush1.bf16.msra.mxu0 0
        %926 = vmatprep.subr.bf16.mxu0 0
        %927 = vmatpush1.bf16.msra.mxu0 0
        %928 = vmatprep.subr.bf16.mxu0 0
        %929 = vmatpush1.bf16.msra.mxu0 0
        %930 = vmatprep.subr.bf16.mxu0 0
        %931 = vmatpush1.bf16.msra.mxu0 0
        %932 = vmatprep.subr.bf16.mxu0 0
        %933 = vmatpush1.bf16.msra.mxu0 0
        %934 = vmatprep.subr.bf16.mxu0 0
        %935 = vmatpush1.bf16.msra.mxu0 0
        %936 = vmatprep.subr.bf16.mxu0 0
        %937 = vmatpush1.bf16.msra.mxu0 0
        %938 = vmatprep.subr.bf16.mxu0 0
        %939 = vmatpush1.bf16.msra.mxu0 0
        %940 = vmatprep.subr.bf16.mxu0 0
        %941 = vmatpush1.bf16.msra.mxu0 0
        %942 = vmatprep.subr.bf16.mxu0 0
        %943 = vmatpush1.bf16.msra.mxu0 0
        %944 = vmatprep.subr.bf16.mxu0 0
        %945 = vmatpush1.bf16.msra.mxu0 0
        %946 = vmatprep.subr.bf16.mxu0 0
        %947 = vmatpush1.bf16.msra.mxu0 0
        %948 = vmatprep.subr.bf16.mxu0 0
        %949 = vmatpush1.bf16.msra.mxu0 0
        %950 = vmatprep.mubr.bf16.mxu0 0
        %951 = vmatmul.mubr.bf16.gmra.mrb[0].mxu0 %v901
        %v952 = vpop.f32.mrb[0].mxu0
        %v953 = vadd.f32 0.0, %v952
        %v954 = vpop.f32.mrb[0].mxu0
        %v955 = vpop.f32.mrb[0].mxu0
        %v956 = vadd.f32 0.0, %v955
        %v957 = vpop.f32.mrb[0].mxu0
        %958 = vmatprep.mubr.bf16.mxu0 0
        %959 = vmatmul.mubr.bf16.gmra.mrb[0].mxu0 %v904
        %v960 = vpop.f32.mrb[0].mxu0
        %v961 = vadd.f32 0.0, %v960
        %v962 = vpop.f32.mrb[0].mxu0
        %v963 = vpop.f32.mrb[0].mxu0
        %v964 = vadd.f32 0.0, %v963
        %v965 = vpop.f32.mrb[0].mxu0
        %966 = vmatprep.mubr.bf16.mxu0 0
        %967 = vmatmul.mubr.bf16.gmra.mrb[0].mxu0 %v907
        %v968 = vpop.f32.mrb[0].mxu0
        %v969 = vadd.f32 0.0, %v968
        %v970 = vpop.f32.mrb[0].mxu0
        %v971 = vpop.f32.mrb[0].mxu0
        %v972 = vadd.f32 0.0, %v971
        %v973 = vpop.f32.mrb[0].mxu0
        %974 = vmatprep.mubr.bf16.mxu0 0
        %975 = vmatmul.mubr.bf16.gmra.mrb[0].mxu0 %v910
        %v976 = vpop.f32.mrb[0].mxu0
        %v977 = vadd.f32 0.0, %v976
        %v978 = vpop.f32.mrb[0].mxu0
        %v979 = vpop.f32.mrb[0].mxu0
        %v980 = vadd.f32 0.0, %v979
        %v981 = vpop.f32.mrb[0].mxu0
        %982 = vmatprep.mubr.bf16.mxu0 0
        %983 = vmatmul.mubr.bf16.gmra.mrb[0].mxu0 %v913
        %v984 = vpop.f32.mrb[0].mxu0
        %v985 = vadd.f32 0.0, %v984
        %v986 = vpop.f32.mrb[0].mxu0
        %v987 = vpop.f32.mrb[0].mxu0
        %v988 = vpop.f32.mrb[0].mxu0
        %989 = vdwg.mxu0
        %v990 = vadd.f32 %v787, %v953
        %v991 = vadd.f32 %v790, %v956
        %v992 = vadd.f32 %v795, %v961
        %v993 = vadd.f32 %v798, %v964
        %v994 = vadd.f32 %v803, %v969
        %v995 = vadd.f32 %v806, %v972
        %v996 = vadd.f32 %v811, %v977
        %v997 = vadd.f32 %v814, %v980
        %v998 = vadd.f32 %v819, %v985
        %v999 = vld [vmem:[%s469 + $0x4] sm:$0xe]
        %s1000 = scalar_lea.vmem [#allocation10], 6
        %v1001 = vld [vmem:[%s1000] sm:$0x3]
        %v1003 = vunpack.c.l.b16 %v999
        %v1004 = vpack.c.b16 %v847, %v1003
        %vm1005 = vcmask 1046528
        %v1006 = vrot.slane %v1004, 1
        %v1007 = vrot.slane %v857, 1
        %v1008 = vsel %vm1005, %v1006, %v1007
        %v1009 = vrot.slane %v858, 1
        %v1010 = vsel %vm1005, %v1007, %v1009
        %v1011 = vrot.slane %v859, 1
        %v1012 = vsel %vm1005, %v1009, %v1011
        %v1013 = vrot.slane %v860, 1
        %v1014 = vsel %vm1005, %v1011, %v1013
        %v1016 = vsel %vm645, %v1008, 0
        %v1019 = vsel %vm645, %v1010, 0
        %v1022 = vsel %vm645, %v1012, 0
        %v1025 = vsel %vm645, %v1014, 0
        %v1028 = vsel %vm645, %v1013, 0
        %v1031 = vsel %vm661, %v1001, 0
        %1033 = vmatprep.subr.bf16.mxu0 0
        %1034 = vmatpush1.bf16.msra.mxu0 %v1031
        %1035 = vmatprep.subr.bf16.mxu0 0
        %1036 = vmatpush1.bf16.msra.mxu0 0
        %1037 = vmatprep.subr.bf16.mxu0 0
        %1038 = vmatpush1.bf16.msra.mxu0 0
        %1039 = vmatprep.subr.bf16.mxu0 0
        %1040 = vmatpush1.bf16.msra.mxu0 0
        %1041 = vmatprep.subr.bf16.mxu0 0
        %1042 = vmatpush1.bf16.msra.mxu0 0
        %1043 = vmatprep.subr.bf16.mxu0 0
        %1044 = vmatpush1.bf16.msra.mxu0 0
        %1045 = vmatprep.subr.bf16.mxu0 0
        %1046 = vmatpush1.bf16.msra.mxu0 0
        %1047 = vmatprep.subr.bf16.mxu0 0
        %1048 = vmatpush1.bf16.msra.mxu0 0
        %1049 = vmatprep.subr.bf16.mxu0 0
        %1050 = vmatpush1.bf16.msra.mxu0 0
        %1051 = vmatprep.subr.bf16.mxu0 0
        %1052 = vmatpush1.bf16.msra.mxu0 0
        %1053 = vmatprep.subr.bf16.mxu0 0
        %1054 = vmatpush1.bf16.msra.mxu0 0
        %1055 = vmatprep.subr.bf16.mxu0 0
        %1056 = vmatpush1.bf16.msra.mxu0 0
        %1057 = vmatprep.subr.bf16.mxu0 0
        %1058 = vmatpush1.bf16.msra.mxu0 0
        %1059 = vmatprep.subr.bf16.mxu0 0
        %1060 = vmatpush1.bf16.msra.mxu0 0
        %1061 = vmatprep.subr.bf16.mxu0 0
        %1062 = vmatpush1.bf16.msra.mxu0 0
        %1063 = vmatprep.subr.bf16.mxu0 0
        %1064 = vmatpush1.bf16.msra.mxu0 0
        %1065 = vmatprep.mubr.bf16.mxu0 0
        %1066 = vmatmul.mubr.bf16.gmra.mrb[0].mxu0 %v1016
        %v1067 = vpop.f32.mrb[0].mxu0
        %v1068 = vadd.f32 0.0, %v1067
        %v1069 = vpop.f32.mrb[0].mxu0
        %v1070 = vpop.f32.mrb[0].mxu0
        %v1071 = vadd.f32 0.0, %v1070
        %v1072 = vpop.f32.mrb[0].mxu0
        %1073 = vmatprep.mubr.bf16.mxu0 0
        %1074 = vmatmul.mubr.bf16.gmra.mrb[0].mxu0 %v1019
        %v1075 = vpop.f32.mrb[0].mxu0
        %v1076 = vadd.f32 0.0, %v1075
        %v1077 = vpop.f32.mrb[0].mxu0
        %v1078 = vpop.f32.mrb[0].mxu0
        %v1079 = vadd.f32 0.0, %v1078
        %v1080 = vpop.f32.mrb[0].mxu0
        %1081 = vmatprep.mubr.bf16.mxu0 0
        %1082 = vmatmul.mubr.bf16.gmra.mrb[0].mxu0 %v1022
        %v1083 = vpop.f32.mrb[0].mxu0
        %v1084 = vadd.f32 0.0, %v1083
        %v1085 = vpop.f32.mrb[0].mxu0
        %v1086 = vpop.f32.mrb[0].mxu0
        %v1087 = vadd.f32 0.0, %v1086
        %v1088 = vpop.f32.mrb[0].mxu0
        %1089 = vmatprep.mubr.bf16.mxu0 0
        %1090 = vmatmul.mubr.bf16.gmra.mrb[0].mxu0 %v1025
        %v1091 = vpop.f32.mrb[0].mxu0
        %v1092 = vadd.f32 0.0, %v1091
        %v1093 = vpop.f32.mrb[0].mxu0
        %v1094 = vpop.f32.mrb[0].mxu0
        %v1095 = vadd.f32 0.0, %v1094
        %v1096 = vpop.f32.mrb[0].mxu0
        %1097 = vmatprep.mubr.bf16.mxu0 0
        %1098 = vmatmul.mubr.bf16.gmra.mrb[0].mxu0 %v1028
        %v1099 = vpop.f32.mrb[0].mxu0
        %v1100 = vadd.f32 0.0, %v1099
        %v1101 = vpop.f32.mrb[0].mxu0
        %v1102 = vpop.f32.mrb[0].mxu0
        %v1103 = vpop.f32.mrb[0].mxu0
        %1104 = vdwg.mxu0
        %v1105 = vadd.f32 %v990, %v1068
        %v1106 = vadd.f32 %v991, %v1071
        %v1107 = vadd.f32 %v992, %v1076
        %v1108 = vadd.f32 %v993, %v1079
        %v1109 = vadd.f32 %v994, %v1084
        %v1110 = vadd.f32 %v995, %v1087
        %v1111 = vadd.f32 %v996, %v1092
        %v1112 = vadd.f32 %v997, %v1095
        %v1113 = vadd.f32 %v998, %v1100
        %v1114 = vld [vmem:[%s478] sm:$0xf]
        %v1115 = vld [vmem:[%s478 + $0x4] sm:$0xf]
        %v1116 = vld [vmem:[%s478 + $0x8] sm:$0xf]
        %v1117 = vld [vmem:[%s478 + $0xc] sm:$0xf]
        %v1118 = vld [vmem:[%s478 + $0x10] sm:$0xf]
        %v1119 = vld [vmem:[%s478 + $0x14] sm:$0xf]
        %v1120 = vld [vmem:[%s478 + $0x18] sm:$0xf]
        %v1121 = vld [vmem:[%s478 + $0x1c] sm:$0xf]
        %v1122 = vld [vmem:[%s478 + $0x20] sm:$0xf]
        %v1123 = vld [vmem:[#allocation11] sm:$0x3]
        %v1133 = vunpack.c.l.b16 %v1114
        %v1134 = vunpack.c.l.b16 %v1115
        %v1135 = vunpack.c.l.b16 %v1116
        %v1136 = vunpack.c.l.b16 %v1117
        %v1137 = vunpack.c.l.b16 %v1118
        %v1138 = vunpack.c.l.b16 %v1119
        %v1139 = vunpack.c.l.b16 %v1120
        %v1140 = vunpack.c.l.b16 %v1121
        %v1141 = vunpack.c.l.b16 %v1122
        %v1142 = vpack.c.b16 %v1134, %v1133
        %v1143 = vpack.c.b16 %v1136, %v1135
        %v1144 = vpack.c.b16 %v1138, %v1137
        %v1145 = vpack.c.b16 %v1140, %v1139
        %v1146 = vpack.c.b16 %v1141, %v1141
        %v1148 = vsel %vm645, %v1142, 0
        %v1151 = vsel %vm645, %v1143, 0
        %v1154 = vsel %vm645, %v1144, 0
        %v1157 = vsel %vm645, %v1145, 0
        %v1160 = vsel %vm645, %v1146, 0
        %v1163 = vsel %vm661, %v1123, 0
        %1165 = vmatprep.subr.bf16.mxu0 0
        %1166 = vmatpush1.bf16.msra.mxu0 %v1163
        %1167 = vmatprep.subr.bf16.mxu0 0
        %1168 = vmatpush1.bf16.msra.mxu0 0
        %1169 = vmatprep.subr.bf16.mxu0 0
        %1170 = vmatpush1.bf16.msra.mxu0 0
        %1171 = vmatprep.subr.bf16.mxu0 0
        %1172 = vmatpush1.bf16.msra.mxu0 0
        %1173 = vmatprep.subr.bf16.mxu0 0
        %1174 = vmatpush1.bf16.msra.mxu0 0
        %1175 = vmatprep.subr.bf16.mxu0 0
        %1176 = vmatpush1.bf16.msra.mxu0 0
        %1177 = vmatprep.subr.bf16.mxu0 0
        %1178 = vmatpush1.bf16.msra.mxu0 0
        %1179 = vmatprep.subr.bf16.mxu0 0
        %1180 = vmatpush1.bf16.msra.mxu0 0
        %1181 = vmatprep.subr.bf16.mxu0 0
        %1182 = vmatpush1.bf16.msra.mxu0 0
        %1183 = vmatprep.subr.bf16.mxu0 0
        %1184 = vmatpush1.bf16.msra.mxu0 0
        %1185 = vmatprep.subr.bf16.mxu0 0
        %1186 = vmatpush1.bf16.msra.mxu0 0
        %1187 = vmatprep.subr.bf16.mxu0 0
        %1188 = vmatpush1.bf16.msra.mxu0 0
        %1189 = vmatprep.subr.bf16.mxu0 0
        %1190 = vmatpush1.bf16.msra.mxu0 0
        %1191 = vmatprep.subr.bf16.mxu0 0
        %1192 = vmatpush1.bf16.msra.mxu0 0
        %1193 = vmatprep.subr.bf16.mxu0 0
        %1194 = vmatpush1.bf16.msra.mxu0 0
        %1195 = vmatprep.subr.bf16.mxu0 0
        %1196 = vmatpush1.bf16.msra.mxu0 0
        %1197 = vmatprep.mubr.bf16.mxu0 0
        %1198 = vmatmul.mubr.bf16.gmra.mrb[0].mxu0 %v1148
        %v1199 = vpop.f32.mrb[0].mxu0
        %v1200 = vadd.f32 0.0, %v1199
        %v1201 = vpop.f32.mrb[0].mxu0
        %v1202 = vpop.f32.mrb[0].mxu0
        %v1203 = vadd.f32 0.0, %v1202
        %v1204 = vpop.f32.mrb[0].mxu0
        %1205 = vmatprep.mubr.bf16.mxu0 0
        %1206 = vmatmul.mubr.bf16.gmra.mrb[0].mxu0 %v1151
        %v1207 = vpop.f32.mrb[0].mxu0
        %v1208 = vadd.f32 0.0, %v1207
        %v1209 = vpop.f32.mrb[0].mxu0
        %v1210 = vpop.f32.mrb[0].mxu0
        %v1211 = vadd.f32 0.0, %v1210
        %v1212 = vpop.f32.mrb[0].mxu0
        %1213 = vmatprep.mubr.bf16.mxu0 0
        %1214 = vmatmul.mubr.bf16.gmra.mrb[0].mxu0 %v1154
        %v1215 = vpop.f32.mrb[0].mxu0
        %v1216 = vadd.f32 0.0, %v1215
        %v1217 = vpop.f32.mrb[0].mxu0
        %v1218 = vpop.f32.mrb[0].mxu0
        %v1219 = vadd.f32 0.0, %v1218
        %v1220 = vpop.f32.mrb[0].mxu0
        %1221 = vmatprep.mubr.bf16.mxu0 0
        %1222 = vmatmul.mubr.bf16.gmra.mrb[0].mxu0 %v1157
        %v1223 = vpop.f32.mrb[0].mxu0
        %v1224 = vadd.f32 0.0, %v1223
        %v1225 = vpop.f32.mrb[0].mxu0
        %v1226 = vpop.f32.mrb[0].mxu0
        %v1227 = vadd.f32 0.0, %v1226
        %v1228 = vpop.f32.mrb[0].mxu0
        %1229 = vmatprep.mubr.bf16.mxu0 0
        %1230 = vmatmul.mubr.bf16.gmra.mrb[0].mxu0 %v1160
        %v1231 = vpop.f32.mrb[0].mxu0
        %v1232 = vadd.f32 0.0, %v1231
        %v1233 = vpop.f32.mrb[0].mxu0
        %v1234 = vpop.f32.mrb[0].mxu0
        %v1235 = vpop.f32.mrb[0].mxu0
        %1236 = vdwg.mxu0
        %v1237 = vadd.f32 %v1105, %v1200
        %v1238 = vadd.f32 %v1106, %v1203
        %v1239 = vadd.f32 %v1107, %v1208
        %v1240 = vadd.f32 %v1108, %v1211
        %v1241 = vadd.f32 %v1109, %v1216
        %v1242 = vadd.f32 %v1110, %v1219
        %v1243 = vadd.f32 %v1111, %v1224
        %v1244 = vadd.f32 %v1112, %v1227
        %v1245 = vadd.f32 %v1113, %v1232
        %v1246 = vld [vmem:[%s478 + $0x4] sm:$0xf]
        %v1247 = vld [vmem:[%s478 + $0x8] sm:$0xf]
        %v1248 = vld [vmem:[%s478 + $0xc] sm:$0xf]
        %v1249 = vld [vmem:[%s478 + $0x10] sm:$0xf]
        %v1250 = vld [vmem:[%s478 + $0x14] sm:$0xf]
        %v1251 = vld [vmem:[%s478 + $0x18] sm:$0xf]
        %v1252 = vld [vmem:[%s478 + $0x1c] sm:$0xf]
        %v1253 = vld [vmem:[%s478 + $0x20] sm:$0xf]
        %v1254 = vld [vmem:[%s478 + $0x24] sm:$0xf]
        %v1255 = vld [vmem:[%s478 + $0x28] sm:$0x1]
        %s1256 = scalar_lea.vmem [#allocation11], 2
        %v1257 = vld [vmem:[%s1256] sm:$0x3]
        %v1268 = vunpack.c.l.b16 %v1246
        %v1269 = vunpack.c.l.b16 %v1247
        %v1270 = vunpack.c.l.b16 %v1248
        %v1271 = vunpack.c.l.b16 %v1249
        %v1272 = vunpack.c.l.b16 %v1250
        %v1273 = vunpack.c.l.b16 %v1251
        %v1274 = vunpack.c.l.b16 %v1252
        %v1275 = vunpack.c.l.b16 %v1253
        %v1276 = vunpack.c.l.b16 %v1254
        %v1277 = vunpack.c.l.b16 %v1255
        %v1278 = vpack.c.b16 %v1269, %v1268
        %v1279 = vpack.c.b16 %v1271, %v1270
        %v1280 = vpack.c.b16 %v1273, %v1272
        %v1281 = vpack.c.b16 %v1275, %v1274
        %v1282 = vpack.c.b16 %v1277, %v1276
        %v1284 = vshrl.u32 %v1278, 16
        %v1286 = vshll.u32 %v1278, 16
        %v1288 = vrot.slane %v1286, 1
        %v1289 = vor.u32 %v1284, %v1288
        %v1291 = vshll.u32 %v1279, 16
        %v1293 = vrot.slane %v1291, 1
        %v1294 = vsel %vm605, %v1289, %v1293
        %v1295 = vshrl.u32 %v1279, 16
        %v1297 = vor.u32 %v1295, %v1293
        %v1299 = vshll.u32 %v1280, 16
        %v1301 = vrot.slane %v1299, 1
        %v1302 = vsel %vm605, %v1297, %v1301
        %v1303 = vshrl.u32 %v1280, 16
        %v1305 = vor.u32 %v1303, %v1301
        %v1307 = vshll.u32 %v1281, 16
        %v1309 = vrot.slane %v1307, 1
        %v1310 = vsel %vm605, %v1305, %v1309
        %v1311 = vshrl.u32 %v1281, 16
        %v1313 = vor.u32 %v1311, %v1309
        %v1315 = vshll.u32 %v1282, 16
        %v1317 = vrot.slane %v1315, 1
        %v1318 = vsel %vm605, %v1313, %v1317
        %v1319 = vshrl.u32 %v1282, 16
        %v1321 = vor.u32 %v1319, %v1317
        %v1323 = vsel %vm645, %v1294, 0
        %v1326 = vsel %vm645, %v1302, 0
        %v1329 = vsel %vm645, %v1310, 0
        %v1332 = vsel %vm645, %v1318, 0
        %v1335 = vsel %vm645, %v1321, 0
        %v1338 = vsel %vm661, %v1257, 0
        %1340 = vmatprep.subr.bf16.mxu0 0
        %1341 = vmatpush1.bf16.msra.mxu0 %v1338
        %1342 = vmatprep.subr.bf16.mxu0 0
        %1343 = vmatpush1.bf16.msra.mxu0 0
        %1344 = vmatprep.subr.bf16.mxu0 0
        %1345 = vmatpush1.bf16.msra.mxu0 0
        %1346 = vmatprep.subr.bf16.mxu0 0
        %1347 = vmatpush1.bf16.msra.mxu0 0
        %1348 = vmatprep.subr.bf16.mxu0 0
        %1349 = vmatpush1.bf16.msra.mxu0 0
        %1350 = vmatprep.subr.bf16.mxu0 0
        %1351 = vmatpush1.bf16.msra.mxu0 0
        %1352 = vmatprep.subr.bf16.mxu0 0
        %1353 = vmatpush1.bf16.msra.mxu0 0
        %1354 = vmatprep.subr.bf16.mxu0 0
        %1355 = vmatpush1.bf16.msra.mxu0 0
        %1356 = vmatprep.subr.bf16.mxu0 0
        %1357 = vmatpush1.bf16.msra.mxu0 0
        %1358 = vmatprep.subr.bf16.mxu0 0
        %1359 = vmatpush1.bf16.msra.mxu0 0
        %1360 = vmatprep.subr.bf16.mxu0 0
        %1361 = vmatpush1.bf16.msra.mxu0 0
        %1362 = vmatprep.subr.bf16.mxu0 0
        %1363 = vmatpush1.bf16.msra.mxu0 0
        %1364 = vmatprep.subr.bf16.mxu0 0
        %1365 = vmatpush1.bf16.msra.mxu0 0
        %1366 = vmatprep.subr.bf16.mxu0 0
        %1367 = vmatpush1.bf16.msra.mxu0 0
        %1368 = vmatprep.subr.bf16.mxu0 0
        %1369 = vmatpush1.bf16.msra.mxu0 0
        %1370 = vmatprep.subr.bf16.mxu0 0
        %1371 = vmatpush1.bf16.msra.mxu0 0
        %1372 = vmatprep.mubr.bf16.mxu0 0
        %1373 = vmatmul.mubr.bf16.gmra.mrb[0].mxu0 %v1323
        %v1374 = vpop.f32.mrb[0].mxu0
        %v1375 = vadd.f32 0.0, %v1374
        %v1376 = vpop.f32.mrb[0].mxu0
        %v1377 = vpop.f32.mrb[0].mxu0
        %v1378 = vadd.f32 0.0, %v1377
        %v1379 = vpop.f32.mrb[0].mxu0
        %1380 = vmatprep.mubr.bf16.mxu0 0
        %1381 = vmatmul.mubr.bf16.gmra.mrb[0].mxu0 %v1326
        %v1382 = vpop.f32.mrb[0].mxu0
        %v1383 = vadd.f32 0.0, %v1382
        %v1384 = vpop.f32.mrb[0].mxu0
        %v1385 = vpop.f32.mrb[0].mxu0
        %v1386 = vadd.f32 0.0, %v1385
        %v1387 = vpop.f32.mrb[0].mxu0
        %1388 = vmatprep.mubr.bf16.mxu0 0
        %1389 = vmatmul.mubr.bf16.gmra.mrb[0].mxu0 %v1329
        %v1390 = vpop.f32.mrb[0].mxu0
        %v1391 = vadd.f32 0.0, %v1390
        %v1392 = vpop.f32.mrb[0].mxu0
        %v1393 = vpop.f32.mrb[0].mxu0
        %v1394 = vadd.f32 0.0, %v1393
        %v1395 = vpop.f32.mrb[0].mxu0
        %1396 = vmatprep.mubr.bf16.mxu0 0
        %1397 = vmatmul.mubr.bf16.gmra.mrb[0].mxu0 %v1332
        %v1398 = vpop.f32.mrb[0].mxu0
        %v1399 = vadd.f32 0.0, %v1398
        %v1400 = vpop.f32.mrb[0].mxu0
        %v1401 = vpop.f32.mrb[0].mxu0
        %v1402 = vadd.f32 0.0, %v1401
        %v1403 = vpop.f32.mrb[0].mxu0
        %1404 = vmatprep.mubr.bf16.mxu0 0
        %1405 = vmatmul.mubr.bf16.gmra.mrb[0].mxu0 %v1335
        %v1406 = vpop.f32.mrb[0].mxu0
        %v1407 = vadd.f32 0.0, %v1406
        %v1408 = vpop.f32.mrb[0].mxu0
        %v1409 = vpop.f32.mrb[0].mxu0
        %v1410 = vpop.f32.mrb[0].mxu0
        %1411 = vdwg.mxu0
        %v1412 = vadd.f32 %v1237, %v1375
        %v1413 = vadd.f32 %v1238, %v1378
        %v1414 = vadd.f32 %v1239, %v1383
        %v1415 = vadd.f32 %v1240, %v1386
        %v1416 = vadd.f32 %v1241, %v1391
        %v1417 = vadd.f32 %v1242, %v1394
        %v1418 = vadd.f32 %v1243, %v1399
        %v1419 = vadd.f32 %v1244, %v1402
        %v1420 = vadd.f32 %v1245, %v1407
        %v1421 = vld [vmem:[%s487] sm:$0xf]
        %v1422 = vld [vmem:[%s487 + $0x4] sm:$0xf]
        %v1423 = vld [vmem:[%s487 + $0x8] sm:$0xf]
        %v1424 = vld [vmem:[%s487 + $0xc] sm:$0xf]
        %v1425 = vld [vmem:[%s487 + $0x10] sm:$0xf]
        %v1426 = vld [vmem:[%s487 + $0x14] sm:$0xf]
        %v1427 = vld [vmem:[%s487 + $0x18] sm:$0xf]
        %v1428 = vld [vmem:[%s487 + $0x1c] sm:$0xf]
        %v1429 = vld [vmem:[%s487 + $0x20] sm:$0xf]
        %v1430 = vld [vmem:[#allocation13] sm:$0x3]
        %v1440 = vunpack.c.l.b16 %v1421
        %v1441 = vunpack.c.l.b16 %v1422
        %v1442 = vunpack.c.l.b16 %v1423
        %v1443 = vunpack.c.l.b16 %v1424
        %v1444 = vunpack.c.l.b16 %v1425
        %v1445 = vunpack.c.l.b16 %v1426
        %v1446 = vunpack.c.l.b16 %v1427
        %v1447 = vunpack.c.l.b16 %v1428
        %v1448 = vunpack.c.l.b16 %v1429
        %v1449 = vpack.c.b16 %v1441, %v1440
        %v1450 = vpack.c.b16 %v1443, %v1442
        %v1451 = vpack.c.b16 %v1445, %v1444
        %v1452 = vpack.c.b16 %v1447, %v1446
        %v1453 = vpack.c.b16 %v1448, %v1448
        %v1455 = vsel %vm645, %v1449, 0
        %v1458 = vsel %vm645, %v1450, 0
        %v1461 = vsel %vm645, %v1451, 0
        %v1464 = vsel %vm645, %v1452, 0
        %v1467 = vsel %vm645, %v1453, 0
        %v1470 = vsel %vm661, %v1430, 0
        %1472 = vmatprep.subr.bf16.mxu0 0
        %1473 = vmatpush1.bf16.msra.mxu0 %v1470
        %1474 = vmatprep.subr.bf16.mxu0 0
        %1475 = vmatpush1.bf16.msra.mxu0 0
        %1476 = vmatprep.subr.bf16.mxu0 0
        %1477 = vmatpush1.bf16.msra.mxu0 0
        %1478 = vmatprep.subr.bf16.mxu0 0
        %1479 = vmatpush1.bf16.msra.mxu0 0
        %1480 = vmatprep.subr.bf16.mxu0 0
        %1481 = vmatpush1.bf16.msra.mxu0 0
        %1482 = vmatprep.subr.bf16.mxu0 0
        %1483 = vmatpush1.bf16.msra.mxu0 0
        %1484 = vmatprep.subr.bf16.mxu0 0
        %1485 = vmatpush1.bf16.msra.mxu0 0
        %1486 = vmatprep.subr.bf16.mxu0 0
        %1487 = vmatpush1.bf16.msra.mxu0 0
        %1488 = vmatprep.subr.bf16.mxu0 0
        %1489 = vmatpush1.bf16.msra.mxu0 0
        %1490 = vmatprep.subr.bf16.mxu0 0
        %1491 = vmatpush1.bf16.msra.mxu0 0
        %1492 = vmatprep.subr.bf16.mxu0 0
        %1493 = vmatpush1.bf16.msra.mxu0 0
        %1494 = vmatprep.subr.bf16.mxu0 0
        %1495 = vmatpush1.bf16.msra.mxu0 0
        %1496 = vmatprep.subr.bf16.mxu0 0
        %1497 = vmatpush1.bf16.msra.mxu0 0
        %1498 = vmatprep.subr.bf16.mxu0 0
        %1499 = vmatpush1.bf16.msra.mxu0 0
        %1500 = vmatprep.subr.bf16.mxu0 0
        %1501 = vmatpush1.bf16.msra.mxu0 0
        %1502 = vmatprep.subr.bf16.mxu0 0
        %1503 = vmatpush1.bf16.msra.mxu0 0
        %1504 = vmatprep.mubr.bf16.mxu0 0
        %1505 = vmatmul.mubr.bf16.gmra.mrb[0].mxu0 %v1455
        %v1506 = vpop.f32.mrb[0].mxu0
        %v1507 = vadd.f32 0.0, %v1506
        %v1508 = vpop.f32.mrb[0].mxu0
        %v1509 = vpop.f32.mrb[0].mxu0
        %v1510 = vadd.f32 0.0, %v1509
        %v1511 = vpop.f32.mrb[0].mxu0
        %1512 = vmatprep.mubr.bf16.mxu0 0
        %1513 = vmatmul.mubr.bf16.gmra.mrb[0].mxu0 %v1458
        %v1514 = vpop.f32.mrb[0].mxu0
        %v1515 = vadd.f32 0.0, %v1514
        %v1516 = vpop.f32.mrb[0].mxu0
        %v1517 = vpop.f32.mrb[0].mxu0
        %v1518 = vadd.f32 0.0, %v1517
        %v1519 = vpop.f32.mrb[0].mxu0
        %1520 = vmatprep.mubr.bf16.mxu0 0
        %1521 = vmatmul.mubr.bf16.gmra.mrb[0].mxu0 %v1461
        %v1522 = vpop.f32.mrb[0].mxu0
        %v1523 = vadd.f32 0.0, %v1522
        %v1524 = vpop.f32.mrb[0].mxu0
        %v1525 = vpop.f32.mrb[0].mxu0
        %v1526 = vadd.f32 0.0, %v1525
        %v1527 = vpop.f32.mrb[0].mxu0
        %1528 = vmatprep.mubr.bf16.mxu0 0
        %1529 = vmatmul.mubr.bf16.gmra.mrb[0].mxu0 %v1464
        %v1530 = vpop.f32.mrb[0].mxu0
        %v1531 = vadd.f32 0.0, %v1530
        %v1532 = vpop.f32.mrb[0].mxu0
        %v1533 = vpop.f32.mrb[0].mxu0
        %v1534 = vadd.f32 0.0, %v1533
        %v1535 = vpop.f32.mrb[0].mxu0
        %1536 = vmatprep.mubr.bf16.mxu0 0
        %1537 = vmatmul.mubr.bf16.gmra.mrb[0].mxu0 %v1467
        %v1538 = vpop.f32.mrb[0].mxu0
        %v1539 = vadd.f32 0.0, %v1538
        %v1540 = vpop.f32.mrb[0].mxu0
        %v1541 = vpop.f32.mrb[0].mxu0
        %v1542 = vpop.f32.mrb[0].mxu0
        %1543 = vdwg.mxu0
        %v1544 = vadd.f32 %v1412, %v1507
        %v1545 = vadd.f32 %v1413, %v1510
        %v1546 = vadd.f32 %v1414, %v1515
        %v1547 = vadd.f32 %v1415, %v1518
        %v1548 = vadd.f32 %v1416, %v1523
        %v1549 = vadd.f32 %v1417, %v1526
        %v1550 = vadd.f32 %v1418, %v1531
        %v1551 = vadd.f32 %v1419, %v1534
        %v1552 = vadd.f32 %v1420, %v1539
        %v1553 = vld [vmem:[%s487] sm:$0xf]
        %v1554 = vld [vmem:[%s487 + $0x4] sm:$0xf]
        %v1555 = vld [vmem:[%s487 + $0x8] sm:$0xf]
        %v1556 = vld [vmem:[%s487 + $0xc] sm:$0xf]
        %v1557 = vld [vmem:[%s487 + $0x10] sm:$0xf]
        %v1558 = vld [vmem:[%s487 + $0x14] sm:$0xf]
        %v1559 = vld [vmem:[%s487 + $0x18] sm:$0xf]
        %v1560 = vld [vmem:[%s487 + $0x1c] sm:$0xf]
        %v1561 = vld [vmem:[%s487 + $0x20] sm:$0xf]
        %v1562 = vld [vmem:[%s487 + $0x24] sm:$0x1]
        %s1563 = scalar_lea.vmem [#allocation13], 2
        %v1564 = vld [vmem:[%s1563] sm:$0x3]
        %v1575 = vunpack.c.l.b16 %v1553
        %v1576 = vunpack.c.l.b16 %v1554
        %v1577 = vunpack.c.l.b16 %v1555
        %v1578 = vunpack.c.l.b16 %v1556
        %v1579 = vunpack.c.l.b16 %v1557
        %v1580 = vunpack.c.l.b16 %v1558
        %v1581 = vunpack.c.l.b16 %v1559
        %v1582 = vunpack.c.l.b16 %v1560
        %v1583 = vunpack.c.l.b16 %v1561
        %v1584 = vunpack.c.l.b16 %v1562
        %v1585 = vpack.c.b16 %v1576, %v1575
        %v1586 = vpack.c.b16 %v1578, %v1577
        %v1587 = vpack.c.b16 %v1580, %v1579
        %v1588 = vpack.c.b16 %v1582, %v1581
        %v1589 = vpack.c.b16 %v1584, %v1583
        %v1591 = vshrl.u32 %v1585, 16
        %v1593 = vshll.u32 %v1585, 16
        %v1595 = vrot.slane %v1593, 1
        %v1596 = vor.u32 %v1591, %v1595
        %v1598 = vshll.u32 %v1586, 16
        %v1600 = vrot.slane %v1598, 1
        %v1601 = vsel %vm605, %v1596, %v1600
        %v1602 = vshrl.u32 %v1586, 16
        %v1604 = vor.u32 %v1602, %v1600
        %v1606 = vshll.u32 %v1587, 16
        %v1608 = vrot.slane %v1606, 1
        %v1609 = vsel %vm605, %v1604, %v1608
        %v1610 = vshrl.u32 %v1587, 16
        %v1612 = vor.u32 %v1610, %v1608
        %v1614 = vshll.u32 %v1588, 16
        %v1616 = vrot.slane %v1614, 1
        %v1617 = vsel %vm605, %v1612, %v1616
        %v1618 = vshrl.u32 %v1588, 16
        %v1620 = vor.u32 %v1618, %v1616
        %v1622 = vshll.u32 %v1589, 16
        %v1624 = vrot.slane %v1622, 1
        %v1625 = vsel %vm605, %v1620, %v1624
        %v1626 = vshrl.u32 %v1589, 16
        %v1628 = vor.u32 %v1626, %v1624
        %v1630 = vsel %vm645, %v1601, 0
        %v1633 = vsel %vm645, %v1609, 0
        %v1636 = vsel %vm645, %v1617, 0
        %v1639 = vsel %vm645, %v1625, 0
        %v1642 = vsel %vm645, %v1628, 0
        %v1645 = vsel %vm661, %v1564, 0
        %1647 = vmatprep.subr.bf16.mxu0 0
        %1648 = vmatpush1.bf16.msra.mxu0 %v1645
        %1649 = vmatprep.subr.bf16.mxu0 0
        %1650 = vmatpush1.bf16.msra.mxu0 0
        %1651 = vmatprep.subr.bf16.mxu0 0
        %1652 = vmatpush1.bf16.msra.mxu0 0
        %1653 = vmatprep.subr.bf16.mxu0 0
        %1654 = vmatpush1.bf16.msra.mxu0 0
        %1655 = vmatprep.subr.bf16.mxu0 0
        %1656 = vmatpush1.bf16.msra.mxu0 0
        %1657 = vmatprep.subr.bf16.mxu0 0
        %1658 = vmatpush1.bf16.msra.mxu0 0
        %1659 = vmatprep.subr.bf16.mxu0 0
        %1660 = vmatpush1.bf16.msra.mxu0 0
        %1661 = vmatprep.subr.bf16.mxu0 0
        %1662 = vmatpush1.bf16.msra.mxu0 0
        %1663 = vmatprep.subr.bf16.mxu0 0
        %1664 = vmatpush1.bf16.msra.mxu0 0
        %1665 = vmatprep.subr.bf16.mxu0 0
        %1666 = vmatpush1.bf16.msra.mxu0 0
        %1667 = vmatprep.subr.bf16.mxu0 0
        %1668 = vmatpush1.bf16.msra.mxu0 0
        %1669 = vmatprep.subr.bf16.mxu0 0
        %1670 = vmatpush1.bf16.msra.mxu0 0
        %1671 = vmatprep.subr.bf16.mxu0 0
        %1672 = vmatpush1.bf16.msra.mxu0 0
        %1673 = vmatprep.subr.bf16.mxu0 0
        %1674 = vmatpush1.bf16.msra.mxu0 0
        %1675 = vmatprep.subr.bf16.mxu0 0
        %1676 = vmatpush1.bf16.msra.mxu0 0
        %1677 = vmatprep.subr.bf16.mxu0 0
        %1678 = vmatpush1.bf16.msra.mxu0 0
        %1679 = vmatprep.mubr.bf16.mxu0 0
        %1680 = vmatmul.mubr.bf16.gmra.mrb[0].mxu0 %v1630
        %v1681 = vpop.f32.mrb[0].mxu0
        %v1682 = vadd.f32 0.0, %v1681
        %v1683 = vpop.f32.mrb[0].mxu0
        %v1684 = vpop.f32.mrb[0].mxu0
        %v1685 = vadd.f32 0.0, %v1684
        %v1686 = vpop.f32.mrb[0].mxu0
        %1687 = vmatprep.mubr.bf16.mxu0 0
        %1688 = vmatmul.mubr.bf16.gmra.mrb[0].mxu0 %v1633
        %v1689 = vpop.f32.mrb[0].mxu0
        %v1690 = vadd.f32 0.0, %v1689
        %v1691 = vpop.f32.mrb[0].mxu0
        %v1692 = vpop.f32.mrb[0].mxu0
        %v1693 = vadd.f32 0.0, %v1692
        %v1694 = vpop.f32.mrb[0].mxu0
        %1695 = vmatprep.mubr.bf16.mxu0 0
        %1696 = vmatmul.mubr.bf16.gmra.mrb[0].mxu0 %v1636
        %v1697 = vpop.f32.mrb[0].mxu0
        %v1698 = vadd.f32 0.0, %v1697
        %v1699 = vpop.f32.mrb[0].mxu0
        %v1700 = vpop.f32.mrb[0].mxu0
        %v1701 = vadd.f32 0.0, %v1700
        %v1702 = vpop.f32.mrb[0].mxu0
        %1703 = vmatprep.mubr.bf16.mxu0 0
        %1704 = vmatmul.mubr.bf16.gmra.mrb[0].mxu0 %v1639
        %v1705 = vpop.f32.mrb[0].mxu0
        %v1706 = vadd.f32 0.0, %v1705
        %v1707 = vpop.f32.mrb[0].mxu0
        %v1708 = vpop.f32.mrb[0].mxu0
        %v1709 = vadd.f32 0.0, %v1708
        %v1710 = vpop.f32.mrb[0].mxu0
        %1711 = vmatprep.mubr.bf16.mxu0 0
        %1712 = vmatmul.mubr.bf16.gmra.mrb[0].mxu0 %v1642
        %v1713 = vpop.f32.mrb[0].mxu0
        %v1714 = vadd.f32 0.0, %v1713
        %v1715 = vpop.f32.mrb[0].mxu0
        %v1716 = vpop.f32.mrb[0].mxu0
        %v1717 = vpop.f32.mrb[0].mxu0
        %1718 = vdwg.mxu0
        %v1719 = vadd.f32 %v1544, %v1682
        %v1720 = vadd.f32 %v1545, %v1685
        %v1721 = vadd.f32 %v1546, %v1690
        %v1722 = vadd.f32 %v1547, %v1693
        %v1723 = vadd.f32 %v1548, %v1698
        %v1724 = vadd.f32 %v1549, %v1701
        %v1725 = vadd.f32 %v1550, %v1706
        %v1726 = vadd.f32 %v1551, %v1709
        %v1727 = vadd.f32 %v1552, %v1714
        %v1728 = vld [vmem:[%s496] sm:$0xf]
        %v1729 = vld [vmem:[%s496 + $0x4] sm:$0xf]
        %v1730 = vld [vmem:[%s496 + $0x8] sm:$0xf]
        %v1731 = vld [vmem:[%s496 + $0xc] sm:$0xf]
        %v1732 = vld [vmem:[%s496 + $0x10] sm:$0xf]
        %v1733 = vld [vmem:[%s496 + $0x14] sm:$0xf]
        %v1734 = vld [vmem:[%s496 + $0x18] sm:$0xf]
        %v1735 = vld [vmem:[%s496 + $0x1c] sm:$0xf]
        %v1736 = vld [vmem:[%s496 + $0x20] sm:$0xf]
        %v1737 = vld [vmem:[#allocation14] sm:$0x3]
        %v1747 = vunpack.c.l.b16 %v1728
        %v1748 = vunpack.c.l.b16 %v1729
        %v1749 = vunpack.c.l.b16 %v1730
        %v1750 = vunpack.c.l.b16 %v1731
        %v1751 = vunpack.c.l.b16 %v1732
        %v1752 = vunpack.c.l.b16 %v1733
        %v1753 = vunpack.c.l.b16 %v1734
        %v1754 = vunpack.c.l.b16 %v1735
        %v1755 = vunpack.c.l.b16 %v1736
        %v1756 = vpack.c.b16 %v1748, %v1747
        %v1757 = vpack.c.b16 %v1750, %v1749
        %v1758 = vpack.c.b16 %v1752, %v1751
        %v1759 = vpack.c.b16 %v1754, %v1753
        %v1760 = vpack.c.b16 %v1755, %v1755
        %v1762 = vsel %vm645, %v1756, 0
        %v1765 = vsel %vm645, %v1757, 0
        %v1768 = vsel %vm645, %v1758, 0
        %v1771 = vsel %vm645, %v1759, 0
        %v1774 = vsel %vm645, %v1760, 0
        %v1777 = vsel %vm661, %v1737, 0
        %1779 = vmatprep.subr.bf16.mxu0 0
        %1780 = vmatpush1.bf16.msra.mxu0 %v1777
        %1781 = vmatprep.subr.bf16.mxu0 0
        %1782 = vmatpush1.bf16.msra.mxu0 0
        %1783 = vmatprep.subr.bf16.mxu0 0
        %1784 = vmatpush1.bf16.msra.mxu0 0
        %1785 = vmatprep.subr.bf16.mxu0 0
        %1786 = vmatpush1.bf16.msra.mxu0 0
        %1787 = vmatprep.subr.bf16.mxu0 0
        %1788 = vmatpush1.bf16.msra.mxu0 0
        %1789 = vmatprep.subr.bf16.mxu0 0
        %1790 = vmatpush1.bf16.msra.mxu0 0
        %1791 = vmatprep.subr.bf16.mxu0 0
        %1792 = vmatpush1.bf16.msra.mxu0 0
        %1793 = vmatprep.subr.bf16.mxu0 0
        %1794 = vmatpush1.bf16.msra.mxu0 0
        %1795 = vmatprep.subr.bf16.mxu0 0
        %1796 = vmatpush1.bf16.msra.mxu0 0
        %1797 = vmatprep.subr.bf16.mxu0 0
        %1798 = vmatpush1.bf16.msra.mxu0 0
        %1799 = vmatprep.subr.bf16.mxu0 0
        %1800 = vmatpush1.bf16.msra.mxu0 0
        %1801 = vmatprep.subr.bf16.mxu0 0
        %1802 = vmatpush1.bf16.msra.mxu0 0
        %1803 = vmatprep.subr.bf16.mxu0 0
        %1804 = vmatpush1.bf16.msra.mxu0 0
        %1805 = vmatprep.subr.bf16.mxu0 0
        %1806 = vmatpush1.bf16.msra.mxu0 0
        %1807 = vmatprep.subr.bf16.mxu0 0
        %1808 = vmatpush1.bf16.msra.mxu0 0
        %1809 = vmatprep.subr.bf16.mxu0 0
        %1810 = vmatpush1.bf16.msra.mxu0 0
        %1811 = vmatprep.mubr.bf16.mxu0 0
        %1812 = vmatmul.mubr.bf16.gmra.mrb[0].mxu0 %v1762
        %v1813 = vpop.f32.mrb[0].mxu0
        %v1814 = vadd.f32 0.0, %v1813
        %v1815 = vpop.f32.mrb[0].mxu0
        %v1816 = vpop.f32.mrb[0].mxu0
        %v1817 = vadd.f32 0.0, %v1816
        %v1818 = vpop.f32.mrb[0].mxu0
        %1819 = vmatprep.mubr.bf16.mxu0 0
        %1820 = vmatmul.mubr.bf16.gmra.mrb[0].mxu0 %v1765
        %v1821 = vpop.f32.mrb[0].mxu0
        %v1822 = vadd.f32 0.0, %v1821
        %v1823 = vpop.f32.mrb[0].mxu0
        %v1824 = vpop.f32.mrb[0].mxu0
        %v1825 = vadd.f32 0.0, %v1824
        %v1826 = vpop.f32.mrb[0].mxu0
        %1827 = vmatprep.mubr.bf16.mxu0 0
        %1828 = vmatmul.mubr.bf16.gmra.mrb[0].mxu0 %v1768
        %v1829 = vpop.f32.mrb[0].mxu0
        %v1830 = vadd.f32 0.0, %v1829
        %v1831 = vpop.f32.mrb[0].mxu0
        %v1832 = vpop.f32.mrb[0].mxu0
        %v1833 = vadd.f32 0.0, %v1832
        %v1834 = vpop.f32.mrb[0].mxu0
        %1835 = vmatprep.mubr.bf16.mxu0 0
        %1836 = vmatmul.mubr.bf16.gmra.mrb[0].mxu0 %v1771
        %v1837 = vpop.f32.mrb[0].mxu0
        %v1838 = vadd.f32 0.0, %v1837
        %v1839 = vpop.f32.mrb[0].mxu0
        %v1840 = vpop.f32.mrb[0].mxu0
        %v1841 = vadd.f32 0.0, %v1840
        %v1842 = vpop.f32.mrb[0].mxu0
        %1843 = vmatprep.mubr.bf16.mxu0 0
        %1844 = vmatmul.mubr.bf16.gmra.mrb[0].mxu0 %v1774
        %v1845 = vpop.f32.mrb[0].mxu0
        %v1846 = vadd.f32 0.0, %v1845
        %v1847 = vpop.f32.mrb[0].mxu0
        %v1848 = vpop.f32.mrb[0].mxu0
        %v1849 = vpop.f32.mrb[0].mxu0
        %1850 = vdwg.mxu0
        %v1851 = vadd.f32 %v1719, %v1814
        %v1852 = vadd.f32 %v1720, %v1817
        %v1853 = vadd.f32 %v1721, %v1822
        %v1854 = vadd.f32 %v1722, %v1825
        %v1855 = vadd.f32 %v1723, %v1830
        %v1856 = vadd.f32 %v1724, %v1833
        %v1857 = vadd.f32 %v1725, %v1838
        %v1858 = vadd.f32 %v1726, %v1841
        %v1859 = vadd.f32 %v1727, %v1846
        %v1860 = vld [vmem:[#allocation16] sm:$0x1]
        %v1862 = vlaneseq
        %v1863 = vshrl.u32 %v1862, 7
        %v1864 = vsub.s32 0, %v1863
        %v1865 = vrot.slane %v1860, %v1864
        %v1867 = vadd.f32 %v1851, %v1865
        %v1868 = vadd.f32 %v1852, %v1865
        %v1869 = vadd.f32 %v1853, %v1865
        %v1870 = vadd.f32 %v1854, %v1865
        %v1871 = vadd.f32 %v1855, %v1865
        %v1872 = vadd.f32 %v1856, %v1865
        %v1873 = vadd.f32 %v1857, %v1865
        %v1874 = vadd.f32 %v1858, %v1865
        %v1875 = vadd.f32 %v1859, %v1865
        %v1876 = vmax.f32 %v1867, 0.0
        %v1877 = vmax.f32 %v1868, 0.0
        %v1878 = vmax.f32 %v1869, 0.0
        %v1879 = vmax.f32 %v1870, 0.0
        %v1880 = vmax.f32 %v1871, 0.0
        %v1881 = vmax.f32 %v1872, 0.0
        %v1882 = vmax.f32 %v1873, 0.0
        %v1883 = vmax.f32 %v1874, 0.0
        %v1884 = vmax.f32 %v1875, 0.0
        %v1885 = vpack.c.bf16 %v1877, %v1876
        %v1886 = vpack.c.bf16 %v1879, %v1878
        %v1887 = vpack.c.bf16 %v1881, %v1880
        %v1888 = vpack.c.bf16 %v1883, %v1882
        %v1889 = vpack.c.bf16 %v1884, %v1884
        %v1895 = vunpack.c.l.b16 %v1885
        %v1896 = vunpack.c.h.b16 %v1885
        %v1897 = vunpack.c.l.b16 %v1886
        %v1898 = vunpack.c.h.b16 %v1886
        %v1899 = vunpack.c.l.b16 %v1887
        %v1900 = vunpack.c.h.b16 %v1887
        %v1901 = vunpack.c.l.b16 %v1888
        %v1902 = vunpack.c.h.b16 %v1888
        %v1903 = vunpack.c.l.b16 %v1889
        %v1904 = vpack.c.b16 %v1895, %v1895
        %v1905 = vpack.c.b16 %v1896, %v1896
        %v1906 = vpack.c.b16 %v1897, %v1897
        %v1907 = vpack.c.b16 %v1898, %v1898
        %v1908 = vpack.c.b16 %v1899, %v1899
        %v1909 = vpack.c.b16 %v1900, %v1900
        %v1910 = vpack.c.b16 %v1901, %v1901
        %v1911 = vpack.c.b16 %v1902, %v1902
        %v1912 = vpack.c.b16 %v1903, %v1903
        %1922 = vst [vmem:[%s565] sm:$0xf] %v1904
        %1923 = vst [vmem:[%s565 + $0x4] sm:$0xf] %v1905
        %1924 = vst [vmem:[%s565 + $0x8] sm:$0xf] %v1906
        %1925 = vst [vmem:[%s565 + $0xc] sm:$0xf] %v1907
        %1926 = vst [vmem:[%s565 + $0x10] sm:$0xf] %v1908
        %1927 = vst [vmem:[%s565 + $0x14] sm:$0xf] %v1909
        %1928 = vst [vmem:[%s565 + $0x18] sm:$0xf] %v1910
        %1929 = vst [vmem:[%s565 + $0x1c] sm:$0xf] %v1911
        %1930 = vst [vmem:[%s565 + $0x20] sm:$0xf] %v1912
        %s1931 = sand.u32 %s273, 1
        %s1932 = scalar_lea.sflag [#allocation4], %s1931
        %s1933 = sand.u32 %s273, 1
        %s1934 = smul.addr %s1933, 36
        %s1935 = scalar_lea.vmem [#allocation17], %s1934
        // Predicated region
        $region93: #{conv2x_forward.2} parent=55 // pred_check
          %p1936 = pneg %p283
        $region94: #{conv2x_forward.2} parent=55 // pred_check_branch
          %1938 = sbr.rel (%p1936) target = $region96
        $region95: #{conv2x_forward.2} parent=55 // pred_region
          %s1940 = ssub.s32 576, 576
          %1941 = vsyncadd %s1932, %s1940
          %s1942 = smul.addr %s39, 9
          %s1943 = smul.addr %s38, 9
          %s1944 = sadd.s32 %s1942, %s1943
          %s1945 = smul.addr %s1944, 64
          %s1946 = scalar_lea.hbm %s9, %s1945
          %s1947 = sshll.u32 %s1935, 4
          %s1948 = int_to_ptr.vmem [resolvable:$true] %s1947
          %1953 = dma.vmem_to_hbm [thread:$0]  %s1948, 576, %s1946, %s1932, 64, 64, 4
        $region96: #{conv2x_forward.2} parent=55 // pred_fallthru
          _
      $region56: #{conv2x_forward.2} parent=5 // pred_fallthru
        _
      %p1954 = scmp.le.s32.totalorder 2, %s29
      // Predicated region
      $region97: #{conv2x_forward.2} parent=5 // pred_check
        %p1955 = pneg %p1954
      $region98: #{conv2x_forward.2} parent=5 // pred_check_branch
        %1957 = sbr.rel (%p1955) target = $region100
      $region99: #{conv2x_forward.2} parent=5 // pred_region
        %s1958 = ssub.s32 %s29, 2
        // Predicated region
        $region101: #{conv2x_forward.2} parent=99 // pred_check
          %p1959 = pneg %p289
        $region102: #{conv2x_forward.2} parent=99 // pred_check_branch
          %1961 = sbr.rel (%p1959) target = $region104
        $region103: #{conv2x_forward.2} parent=99 // pred_region
          %s1962 = sand.u32 %s274, 1
          %s1963 = scalar_lea.sflag [#allocation4], %s1962
          %s1964 = sand.u32 %s274, 1
          %s1965 = smul.addr %s1964, 36
          %s1966 = scalar_lea.vmem [#allocation17], %s1965
          %1967 = dma.done %s1963, 576
        $region104: #{conv2x_forward.2} parent=99 // pred_fallthru
          _
      $region100: #{conv2x_forward.2} parent=5 // pred_fallthru
        _
    $region6: #{conv2x_forward.2} parent=1 // loop_footer
      %s33 = sadd.s32 1, %s29
    $region7: #{conv2x_forward.2} parent=1 // loop_footer_branch
      %28 = sbr.rel target = $region3
    $region8: #{conv2x_forward.2} parent=1 // loop_exit
      _
    %1968 = vsyncpa [#allocation3], 1
    %s1969 = scalar_lea.sflag [#allocation3], 1
    %1970 = vsyncpa %s1969, 1
    %1971 = vsyncpa [#allocation6], 1
    %s1972 = scalar_lea.sflag [#allocation6], 1
    %1973 = vsyncpa %s1972, 1
    %1974 = vsyncpa [#allocation9], 1
    %s1975 = scalar_lea.sflag [#allocation9], 1
    %1976 = vsyncpa %s1975, 1
    %1977 = vsyncpa [#allocation12], 1
    %1978 = vsyncpa [#allocation15], 1
    %1979 = vsyncpa [#allocation4], 1
    %s1980 = scalar_lea.sflag [#allocation4], 1
    %1981 = vsyncpa %s1980, 1

// kernel: conv2x_forward.3
$region0: #{conv2x_forward.3}
  #allocation0 [shape = 'u32[]', space=smem, size = 0x4, offset = 0x4, fixed_abs, tag = 'smem constant byte address 0x4 - core index']
  #allocation1 [shape = 'u32[144,128]{1,0:T(1,128)}', space=vmem, size = 0x12000, scoped, tag = 'internal scratch']
  %s0 = inlined_call_operand.hbm [shape: bf16[2,1,110,8], index: 0, kind: input, shape index: {}]
  %s1 = inlined_call_operand.hbm [shape: bf16[2,1,110,8], index: 1, kind: input, shape index: {}]
  %s2 = inlined_call_operand.hbm [shape: bf16[9,8,128], index: 2, kind: input, shape index: {}]
  %s3 = inlined_call_operand.hbm [shape: bf16[9,8,128], index: 3, kind: input, shape index: {}]
  %s4 = inlined_call_operand.hbm [shape: f32[1,128], index: 4, kind: input, shape index: {}]
  %s5 = inlined_call_operand.hbm [shape: f32[2,1,80,128], index: 5, kind: output, shape index: {}]
  %s6 = sld [smem:[#allocation0]]
  $region73: #{conv2x_forward.3} parent=0
    _
  %s8 = ssub.s32 1, %s6
  %s9 = scalar_select 0, %s8, %s6
  $region1: #{conv2x_forward.3} parent=0
    #allocation2 [shape = 'u8[57344]{0}', space=vmem, size = 0xe000, scoped, tag = 'input window, operand 0']
    #allocation3 [shape = 's32[2]{0}', space=sflag, size = 0x8, scoped, tag = 'scoped memory for conv2x_forward.3']
    #allocation4 [shape = 's32[2]{0}', space=sflag, size = 0x8, scoped, tag = 'scoped memory for conv2x_forward.3']
    #allocation5 [shape = 'u8[57344]{0}', space=vmem, size = 0xe000, scoped, tag = 'input window, operand 1']
    #allocation6 [shape = 's32[2]{0}', space=sflag, size = 0x8, scoped, tag = 'scoped memory for conv2x_forward.3']
    #allocation7 [shape = 'u8[18432]{0}', space=vmem, size = 0x4800, scoped, tag = 'input window, operand 2, single buffered']
    #allocation8 [shape = 'u8[18432]{0}', space=vmem, size = 0x4800, scoped, tag = 'input window, operand 3, single buffered']
    #allocation9 [shape = 's32[1]{0}', space=sflag, size = 0x4, scoped, tag = 'scoped memory for conv2x_forward.3']
    #allocation10 [shape = 'u8[512]{0}', space=vmem, size = 0x400, scoped, tag = 'input window, operand 4, single buffered']
    #allocation11 [shape = 'u8[81920]{0}', space=vmem, size = 0x14000, scoped, tag = 'output window, operand 0']
    %10 = vsyncpa [#allocation3], 0
    %s11 = scalar_lea.sflag [#allocation3], 1
    %12 = vsyncpa %s11, 0
    %13 = vsyncpa [#allocation6], 0
    %s14 = scalar_lea.sflag [#allocation6], 1
    %15 = vsyncpa %s14, 0
    %16 = vsyncpa [#allocation9], 0
    %17 = vsyncpa [#allocation4], 0
    %s18 = scalar_lea.sflag [#allocation4], 1
    %19 = vsyncpa %s18, 0
    loop: start=0, step=1, limit=4
    $region2: #{conv2x_forward.3} parent=1 // loop_pre_header
      _
    $region3: #{conv2x_forward.3} parent=1 // loop_header
      %s21 = sphi 0, %s25
      %p22 = scmp.ge.s32.totalorder %s21, 4
      %s28 = sphi 0, %s40
      %s29 = sphi 0, %s36
      %s30 = sphi 0, %s28
      %s31 = sphi 0, %s29
      %s32 = sphi 0, %s30
      %s33 = sphi 0, %s31
      %s45 = sphi 0, %s47
      %s48 = sphi 0, %s45
      %s49 = sphi 0, %s48
      %s65 = sphi 0, %s49
      %s73 = sphi 0, %s75
      %s76 = sphi 0, %s73
      %s77 = sphi 0, %s76
      %s93 = sphi 0, %s77
      %s97 = sphi 0, %s97
      %s99 = sphi 0, %s97
      %s100 = sphi 0, %s99
      %s114 = sphi 0, %s100
      %s118 = sphi 0, %s118
      %s120 = sphi 0, %s118
      %s121 = sphi 0, %s120
      %s135 = sphi 0, %s121
      %s139 = sphi 0, %s139
      %s141 = sphi 0, %s139
      %s142 = sphi 0, %s141
      %s156 = sphi 0, %s142
      %s164 = sphi 0, %s166
      %s167 = sphi 0, %s164
      %s168 = sphi 0, %s167
      %s184 = sphi 0, %s168
    $region4: #{conv2x_forward.3} parent=1 // loop_header_branch
      %24 = sbr.rel (%p22) target = $region8
    $region5: #{conv2x_forward.3} parent=1 // loop_body
      %s26 = ssub.s32 %s21, 1
      %s27 = ssub.s32 %s21, 2
      %s34 = sadd.s32 1, %s29
      %p35 = scmp.ge.s32.totalorder %s34, 1
      %s36 = scalar_select %p35, 0, %s34
      %s37 = sadd.s32 1, %s28
      %s38 = scalar_select %p35, %s37, %s28
      %p39 = scmp.ge.s32.totalorder %s38, 2
      %s40 = scalar_select %p39, 0, %s38
      %s41 = ssub.s32 %s28, %s40
      %s42 = ssub.s32 %s29, %s36
      %s43 = sor.u32 %s41, %s42
      %p44 = scmp.eq.s32.totalorder %s43, 0
      %s46 = sadd.s32 %s45, 1
      %s47 = scalar_select %p44, %s45, %s46
      %p50 = pneg %p44
      %p51 = scmp.eq.s32.totalorder %s21, 1
      %p52 = por %p50, %p51
      %p53 = scmp.ne.s32.totalorder %s45, %s48
      %p54 = scmp.eq.s32.totalorder %s21, 0
      %p55 = por %p53, %p54
      %p56 = scmp.ne.s32.totalorder %s45, %s48
      %p57 = scmp.eq.s32.totalorder %s26, 1
      %p58 = por %p56, %p57
      %p59 = scmp.ne.s32.totalorder %s48, %s49
      %p60 = scmp.eq.s32.totalorder %s26, 0
      %p61 = por %p59, %p60
      %p62 = scmp.ne.s32.totalorder %s48, %s49
      %p63 = scmp.eq.s32.totalorder %s27, 1
      %p64 = por %p62, %p63
      %p66 = scmp.ne.s32.totalorder %s49, %s65
      %p67 = scmp.eq.s32.totalorder %s27, 0
      %p68 = por %p66, %p67
      %s69 = ssub.s32 %s28, %s40
      %s70 = ssub.s32 %s29, %s36
      %s71 = sor.u32 %s69, %s70
      %p72 = scmp.eq.s32.totalorder %s71, 0
      %s74 = sadd.s32 %s73, 1
      %s75 = scalar_select %p72, %s73, %s74
      %p78 = pneg %p72
      %p79 = scmp.eq.s32.totalorder %s21, 1
      %p80 = por %p78, %p79
      %p81 = scmp.ne.s32.totalorder %s73, %s76
      %p82 = scmp.eq.s32.totalorder %s21, 0
      %p83 = por %p81, %p82
      %p84 = scmp.ne.s32.totalorder %s73, %s76
      %p85 = scmp.eq.s32.totalorder %s26, 1
      %p86 = por %p84, %p85
      %p87 = scmp.ne.s32.totalorder %s76, %s77
      %p88 = scmp.eq.s32.totalorder %s26, 0
      %p89 = por %p87, %p88
      %p90 = scmp.ne.s32.totalorder %s76, %s77
      %p91 = scmp.eq.s32.totalorder %s27, 1
      %p92 = por %p90, %p91
      %p94 = scmp.ne.s32.totalorder %s77, %s93
      %p95 = scmp.eq.s32.totalorder %s27, 0
      %p96 = por %p94, %p95
      %s98 = sadd.s32 %s97, 1
      %p101 = scmp.eq.s32.totalorder %s21, 1
      %p102 = scmp.ne.s32.totalorder %s97, %s99
      %p103 = scmp.eq.s32.totalorder %s21, 0
      %p104 = por %p102, %p103
      %p105 = scmp.ne.s32.totalorder %s97, %s99
      %p106 = scmp.eq.s32.totalorder %s26, 1
      %p107 = por %p105, %p106
      %p108 = scmp.ne.s32.totalorder %s99, %s100
      %p109 = scmp.eq.s32.totalorder %s26, 0
      %p110 = por %p108, %p109
      %p111 = scmp.ne.s32.totalorder %s99, %s100
      %p112 = scmp.eq.s32.totalorder %s27, 1
      %p113 = por %p111, %p112
      %p115 = scmp.ne.s32.totalorder %s100, %s114
      %p116 = scmp.eq.s32.totalorder %s27, 0
      %p117 = por %p115, %p116
      %s119 = sadd.s32 %s118, 1
      %p122 = scmp.eq.s32.totalorder %s21, 1
      %p123 = scmp.ne.s32.totalorder %s118, %s120
      %p124 = scmp.eq.s32.totalorder %s21, 0
      %p125 = por %p123, %p124
      %p126 = scmp.ne.s32.totalorder %s118, %s120
      %p127 = scmp.eq.s32.totalorder %s26, 1
      %p128 = por %p126, %p127
      %p129 = scmp.ne.s32.totalorder %s120, %s121
      %p130 = scmp.eq.s32.totalorder %s26, 0
      %p131 = por %p129, %p130
      %p132 = scmp.ne.s32.totalorder %s120, %s121
      %p133 = scmp.eq.s32.totalorder %s27, 1
      %p134 = por %p132, %p133
      %p136 = scmp.ne.s32.totalorder %s121, %s135
      %p137 = scmp.eq.s32.totalorder %s27, 0
      %p138 = por %p136, %p137
      %s140 = sadd.s32 %s139, 1
      %p143 = scmp.eq.s32.totalorder %s21, 1
      %p144 = scmp.ne.s32.totalorder %s139, %s141
      %p145 = scmp.eq.s32.totalorder %s21, 0
      %p146 = por %p144, %p145
      %p147 = scmp.ne.s32.totalorder %s139, %s141
      %p148 = scmp.eq.s32.totalorder %s26, 1
      %p149 = por %p147, %p148
      %p150 = scmp.ne.s32.totalorder %s141, %s142
      %p151 = scmp.eq.s32.totalorder %s26, 0
      %p152 = por %p150, %p151
      %p153 = scmp.ne.s32.totalorder %s141, %s142
      %p154 = scmp.eq.s32.totalorder %s27, 1
      %p155 = por %p153, %p154
      %p157 = scmp.ne.s32.totalorder %s142, %s156
      %p158 = scmp.eq.s32.totalorder %s27, 0
      %p159 = por %p157, %p158
      %s160 = ssub.s32 %s28, %s40
      %s161 = ssub.s32 %s29, %s36
      %s162 = sor.u32 %s160, %s161
      %p163 = scmp.eq.s32.totalorder %s162, 0
      %s165 = sadd.s32 %s164, 1
      %s166 = scalar_select %p163, %s164, %s165
      %p169 = pneg %p163
      %p170 = scmp.eq.s32.totalorder %s21, 1
      %p171 = por %p169, %p170
      %p172 = scmp.ne.s32.totalorder %s164, %s167
      %p173 = scmp.eq.s32.totalorder %s21, 0
      %p174 = por %p172, %p173
      %p175 = scmp.ne.s32.totalorder %s164, %s167
      %p176 = scmp.eq.s32.totalorder %s26, 1
      %p177 = por %p175, %p176
      %p178 = scmp.ne.s32.totalorder %s167, %s168
      %p179 = scmp.eq.s32.totalorder %s26, 0
      %p180 = por %p178, %p179
      %p181 = scmp.ne.s32.totalorder %s167, %s168
      %p182 = scmp.eq.s32.totalorder %s27, 1
      %p183 = por %p181, %p182
      %p185 = scmp.ne.s32.totalorder %s168, %s184
      %p186 = scmp.eq.s32.totalorder %s27, 0
      %p187 = por %p185, %p186
      %p188 = scmp.le.s32.totalorder 1, %s21
      %p189 = scmp.lt.s32.totalorder %s21, 3
      %p190 = pnand %p188, %p189
      %p191 = pneg %p190
      // Predicated region
      $region9: #{conv2x_forward.3} parent=5 // pred_check
        _
      $region10: #{conv2x_forward.3} parent=5 // pred_check_branch
        %193 = sbr.rel (%p190) target = $region12
      $region11: #{conv2x_forward.3} parent=5 // pred_region
        %s194 = ssub.s32 %s21, 1
        // Predicated region
        $region13: #{conv2x_forward.3} parent=11 // pred_check
          %p195 = pneg %p110
        $region14: #{conv2x_forward.3} parent=11 // pred_check_branch
          %197 = sbr.rel (%p195) target = $region16
        $region15: #{conv2x_forward.3} parent=11 // pred_region
          %s199 = ssub.s32 576, 576
          %200 = vsyncadd [#allocation6], %s199
          %s201 = sshll.u32 [#allocation7], 4
          %s202 = int_to_ptr.vmem [resolvable:$true] %s201
          %207 = dma.hbm_to_vmem [thread:$0]  %s2, 576, %s202, [#allocation6], 64, 64, 4
        $region16: #{conv2x_forward.3} parent=11 // pred_fallthru
          _
        // Predicated region
        $region17: #{conv2x_forward.3} parent=11 // pred_check
          %p208 = pneg %p131
        $region18: #{conv2x_forward.3} parent=11 // pred_check_branch
          %210 = sbr.rel (%p208) target = $region20
        $region19: #{conv2x_forward.3} parent=11 // pred_region
          %s212 = ssub.s32 576, 576
          %213 = vsyncadd [#allocation9], %s212
          %s214 = sshll.u32 [#allocation8], 4
          %s215 = int_to_ptr.vmem [resolvable:$true] %s214
          %220 = dma.hbm_to_vmem [thread:$0]  %s3, 576, %s215, [#allocation9], 64, 64, 4
        $region20: #{conv2x_forward.3} parent=11 // pred_fallthru
          _
        // Predicated region
        $region21: #{conv2x_forward.3} parent=11 // pred_check
          %p221 = pneg %p152
        $region22: #{conv2x_forward.3} parent=11 // pred_check_branch
          %223 = sbr.rel (%p221) target = $region24
        $region23: #{conv2x_forward.3} parent=11 // pred_region
          %s225 = ssub.s32 16, 16
          %226 = vsyncadd [#allocation9], %s225
          %s228 = sshll.u32 [#allocation10], 4
          %s229 = int_to_ptr.vmem [resolvable:$true] %s228
          %231 = dma.hbm_to_vmem [thread:$0]  %s4, 16, %s229, [#allocation9]
        $region24: #{conv2x_forward.3} parent=11 // pred_fallthru
          _
      $region12: #{conv2x_forward.3} parent=5 // pred_fallthru
        _
      %p232 = scmp.lt.s32.totalorder %s21, 2
      // Predicated region
      $region25: #{conv2x_forward.3} parent=5 // pred_check
        %p233 = pneg %p232
      $region26: #{conv2x_forward.3} parent=5 // pred_check_branch
        %235 = sbr.rel (%p233) target = $region28
      $region27: #{conv2x_forward.3} parent=5 // pred_region
        // Predicated region
        $region29: #{conv2x_forward.3} parent=27 // pred_check
          %p236 = pneg %p55
        $region30: #{conv2x_forward.3} parent=27 // pred_check_branch
          %238 = sbr.rel (%p236) target = $region32
        $region31: #{conv2x_forward.3} parent=27 // pred_region
          %s239 = sand.u32 %s45, 1
          %s240 = scalar_lea.sflag [#allocation3], %s239
          %s241 = sand.u32 %s45, 1
          %s242 = smul.addr %s241, 56
          %s243 = scalar_lea.vmem [#allocation2], %s242
          %s245 = ssub.s32 896, 896
          %246 = vsyncadd %s240, %s245
          %s247 = smul.addr %s29, 14
          %s248 = smul.addr %s28, 14
          %s249 = sadd.s32 %s247, %s248
          %s250 = smul.addr %s249, 64
          %s251 = scalar_lea.hbm %s0, %s250
          %s252 = sshll.u32 %s243, 4
          %s253 = int_to_ptr.vmem [resolvable:$true] %s252
          %258 = dma.hbm_to_vmem [thread:$0]  %s251, 896, %s253, %s240, 64, 64, 4
        $region32: #{conv2x_forward.3} parent=27 // pred_fallthru
          _
        // Predicated region
        $region33: #{conv2x_forward.3} parent=27 // pred_check
          %p259 = pneg %p83
        $region34: #{conv2x_forward.3} parent=27 // pred_check_branch
          %261 = sbr.rel (%p259) target = $region36
        $region35: #{conv2x_forward.3} parent=27 // pred_region
          %s262 = sand.u32 %s21, 1
          %s263 = scalar_lea.sflag [#allocation6], %s262
          %s264 = sand.u32 %s73, 1
          %s265 = smul.addr %s264, 56
          %s266 = scalar_lea.vmem [#allocation5], %s265
          %s268 = ssub.s32 896, 896
          %269 = vsyncadd %s263, %s268
          %s270 = smul.addr %s29, 14
          %s271 = smul.addr %s28, 14
          %s272 = sadd.s32 %s270, %s271
          %s273 = smul.addr %s272, 64
          %s274 = scalar_lea.hbm %s1, %s273
          %s275 = sshll.u32 %s266, 4
          %s276 = int_to_ptr.vmem [resolvable:$true] %s275
          %281 = dma.hbm_to_vmem [thread:$0]  %s274, 896, %s276, %s263, 64, 64, 4
        $region36: #{conv2x_forward.3} parent=27 // pred_fallthru
          _
      $region28: #{conv2x_forward.3} parent=5 // pred_fallthru
        _
      %p282 = scmp.le.s32.totalorder 1, %s21
      %p283 = scmp.lt.s32.totalorder %s21, 3
      %p284 = pnand %p282, %p283
      %p285 = pneg %p284
      // Predicated region
      $region37: #{conv2x_forward.3} parent=5 // pred_check
        _
      $region38: #{conv2x_forward.3} parent=5 // pred_check_branch
        %287 = sbr.rel (%p284) target = $region40
      $region39: #{conv2x_forward.3} parent=5 // pred_region
        %s288 = ssub.s32 %s21, 1
        %s289 = sand.u32 %s48, 1
        %s290 = scalar_lea.sflag [#allocation3], %s289
        %s291 = sand.u32 %s48, 1
        %s292 = smul.addr %s291, 56
        %s293 = scalar_lea.vmem [#allocation2], %s292
        // Predicated region
        $region41: #{conv2x_forward.3} parent=39 // pred_check
          %p294 = pneg %p61
        $region42: #{conv2x_forward.3} parent=39 // pred_check_branch
          %296 = sbr.rel (%p294) target = $region44
        $region43: #{conv2x_forward.3} parent=39 // pred_region
          %297 = dma.done %s290, 896
        $region44: #{conv2x_forward.3} parent=39 // pred_fallthru
          _
        %s298 = sand.u32 %s26, 1
        %s299 = scalar_lea.sflag [#allocation6], %s298
        %s300 = sand.u32 %s76, 1
        %s301 = smul.addr %s300, 56
        %s302 = scalar_lea.vmem [#allocation5], %s301
        // Predicated region
        $region45: #{conv2x_forward.3} parent=39 // pred_check
          %p303 = pneg %p89
        $region46: #{conv2x_forward.3} parent=39 // pred_check_branch
          %305 = sbr.rel (%p303) target = $region48
        $region47: #{conv2x_forward.3} parent=39 // pred_region
          %306 = dma.done %s299, 896
        $region48: #{conv2x_forward.3} parent=39 // pred_fallthru
          _
        // Predicated region
        $region49: #{conv2x_forward.3} parent=39 // pred_check
          %p307 = pneg %p110
        $region50: #{conv2x_forward.3} parent=39 // pred_check_branch
          %309 = sbr.rel (%p307) target = $region52
        $region51: #{conv2x_forward.3} parent=39 // pred_region
          %310 = dma.done [#allocation6], 576
        $region52: #{conv2x_forward.3} parent=39 // pred_fallthru
          _
        // Predicated region
        $region53: #{conv2x_forward.3} parent=39 // pred_check
          %p311 = pneg %p131
        $region54: #{conv2x_forward.3} parent=39 // pred_check_branch
          %313 = sbr.rel (%p311) target = $region56
        $region55: #{conv2x_forward.3} parent=39 // pred_region
          %314 = dma.done [#allocation9], 576
        $region56: #{conv2x_forward.3} parent=39 // pred_fallthru
          _
        // Predicated region
        $region57: #{conv2x_forward.3} parent=39 // pred_check
          %p315 = pneg %p152
        $region58: #{conv2x_forward.3} parent=39 // pred_check_branch
          %317 = sbr.rel (%p315) target = $region60
        $region59: #{conv2x_forward.3} parent=39 // pred_region
          %318 = dma.done [#allocation9], 16
        $region60: #{conv2x_forward.3} parent=39 // pred_fallthru
          _
        %s319 = sand.u32 %s48, 1
        %s320 = scalar_lea.sflag [#allocation3], %s319
        %s321 = sand.u32 %s48, 1
        %s322 = smul.addr %s321, 56
        %s323 = scalar_lea.vmem [#allocation2], %s322
        %p324 = pneg %p61
        %p325 = pneg %p58
        %s326 = sand.u32 %s26, 1
        %s327 = scalar_lea.sflag [#allocation6], %s326
        %s328 = sand.u32 %s76, 1
        %s329 = smul.addr %s328, 56
        %s330 = scalar_lea.vmem [#allocation5], %s329
        %p331 = pneg %p89
        %p332 = pneg %p86
        %p333 = pneg %p110
        %p334 = pneg %p107
        %p335 = pneg %p131
        %p336 = pneg %p128
        %p337 = pneg %p152
        %p338 = pneg %p149
        %p339 = pneg %p180
        %p340 = pneg %p177
        %s341 = sand.u32 %s167, 1
        %s342 = scalar_lea.sflag [#allocation4], %s341
        %s343 = sand.u32 %s167, 1
        %s344 = smul.addr %s343, 80
        %s345 = scalar_lea.vmem [#allocation11], %s344
        %v347 = vld [vmem:[%s293] sm:$0xf]
        %v348 = vld [vmem:[%s293 + $0x4] sm:$0xf]
        %v349 = vld [vmem:[%s293 + $0x8] sm:$0xf]
        %v350 = vld [vmem:[%s293 + $0xc] sm:$0xf]
        %v351 = vld [vmem:[%s293 + $0x10] sm:$0xf]
        %v352 = vld [vmem:[%s293 + $0x14] sm:$0xf]
        %v353 = vld [vmem:[%s293 + $0x18] sm:$0xf]
        %v354 = vld [vmem:[%s293 + $0x1c] sm:$0xf]
        %v355 = vld [vmem:[%s293 + $0x20] sm:$0xf]
        %v356 = vld [vmem:[%s293 + $0x24] sm:$0xf]
        %v357 = vld [vmem:[#allocation7] sm:$0xf]
        %v358 = vld [vmem:[%s293 + $0x28] sm:$0x1]
        %s359 = scalar_lea.vmem [#allocation7], 4
        %v360 = vld [vmem:[%s359] sm:$0xf]
        %v372 = vunpack.c.l.b16 %v347
        %v373 = vunpack.c.l.b16 %v348
        %v374 = vunpack.c.l.b16 %v349
        %v375 = vunpack.c.l.b16 %v350
        %v376 = vunpack.c.l.b16 %v351
        %v377 = vunpack.c.l.b16 %v352
        %v378 = vunpack.c.l.b16 %v353
        %v379 = vunpack.c.l.b16 %v354
        %v380 = vunpack.c.l.b16 %v355
        %v381 = vunpack.c.l.b16 %v356
        %v382 = vunpack.c.l.b16 %v358
        %v383 = vpack.c.b16 %v373, %v372
        %v384 = vpack.c.b16 %v375, %v374
        %v385 = vpack.c.b16 %v377, %v376
        %v386 = vpack.c.b16 %v379, %v378
        %v387 = vpack.c.b16 %v381, %v380
        %v388 = vpack.c.b16 %v382, %v382
        %vm389 = vsmask.f32 7424
        %v391 = vshrl.u32 %v383, 16
        %v393 = vshll.u32 %v383, 16
        %v395 = vrot.slane %v393, 1
        %v396 = vor.u32 %v391, %v395
        %v398 = vshll.u32 %v384, 16
        %v400 = vrot.slane %v398, 1
        %v401 = vsel %vm389, %v396, %v400
        %v402 = vshrl.u32 %v384, 16
        %v404 = vor.u32 %v402, %v400
        %v406 = vshll.u32 %v385, 16
        %v408 = vrot.slane %v406, 1
        %v409 = vsel %vm389, %v404, %v408
        %v410 = vshrl.u32 %v385, 16
        %v412 = vor.u32 %v410, %v408
        %v414 = vshll.u32 %v386, 16
        %v416 = vrot.slane %v414, 1
        %v417 = vsel %vm389, %v412, %v416
        %v418 = vshrl.u32 %v386, 16
        %v420 = vor.u32 %v418, %v416
        %v422 = vshll.u32 %v387, 16
        %v424 = vrot.slane %v422, 1
        %v425 = vsel %vm389, %v420, %v424
        %v426 = vshrl.u32 %v387, 16
        %v428 = vor.u32 %v426, %v424
        %v430 = vshll.u32 %v388, 16
        %v432 = vrot.slane %v430, 1
        %v433 = vsel %vm389, %v428, %v432
        %vm434 = vcmask 64512
        %v436 = vsel %vm434, %v401, 0
        %v439 = vsel %vm434, %v409, 0
        %v442 = vsel %vm434, %v417, 0
        %v445 = vsel %vm434, %v425, 0
        %v448 = vsel %vm434, %v433, 0
        %vm450 = vcmask 1043456
        %v452 = vsel %vm450, %v360, 0
        %454 = vmatprep.subr.bf16.mxu0 0
        %455 = vmatpush1.bf16.msra.mxu0 %v452
        %456 = vmatprep.subr.bf16.mxu0 0
        %457 = vmatpush1.bf16.msra.mxu0 0
        %458 = vmatprep.subr.bf16.mxu0 0
        %459 = vmatpush1.bf16.msra.mxu0 0
        %460 = vmatprep.subr.bf16.mxu0 0
        %461 = vmatpush1.bf16.msra.mxu0 0
        %462 = vmatprep.subr.bf16.mxu0 0
        %463 = vmatpush1.bf16.msra.mxu0 0
        %464 = vmatprep.subr.bf16.mxu0 0
        %465 = vmatpush1.bf16.msra.mxu0 0
        %466 = vmatprep.subr.bf16.mxu0 0
        %467 = vmatpush1.bf16.msra.mxu0 0
        %468 = vmatprep.subr.bf16.mxu0 0
        %469 = vmatpush1.bf16.msra.mxu0 0
        %470 = vmatprep.subr.bf16.mxu0 0
        %471 = vmatpush1.bf16.msra.mxu0 0
        %472 = vmatprep.subr.bf16.mxu0 0
        %473 = vmatpush1.bf16.msra.mxu0 0
        %474 = vmatprep.subr.bf16.mxu0 0
        %475 = vmatpush1.bf16.msra.mxu0 0
        %476 = vmatprep.subr.bf16.mxu0 0
        %477 = vmatpush1.bf16.msra.mxu0 0
        %478 = vmatprep.subr.bf16.mxu0 0
        %479 = vmatpush1.bf16.msra.mxu0 0
        %480 = vmatprep.subr.bf16.mxu0 0
        %481 = vmatpush1.bf16.msra.mxu0 0
        %482 = vmatprep.subr.bf16.mxu0 0
        %483 = vmatpush1.bf16.msra.mxu0 0
        %484 = vmatprep.subr.bf16.mxu0 0
        %485 = vmatpush1.bf16.msra.mxu0 0
        %486 = vmatprep.mubr.bf16.mxu0 0
        %487 = vmatmul.mubr.bf16.gmra.mrb[0].mxu0 %v436
        %v488 = vpop.f32.mrb[0].mxu0
        %v489 = vadd.f32 0.0, %v488
        %v490 = vpop.f32.mrb[0].mxu0
        %v491 = vpop.f32.mrb[0].mxu0
        %v492 = vadd.f32 0.0, %v491
        %v493 = vpop.f32.mrb[0].mxu0
        %494 = vmatprep.mubr.bf16.mxu0 0
        %495 = vmatmul.mubr.bf16.gmra.mrb[0].mxu0 %v439
        %v496 = vpop.f32.mrb[0].mxu0
        %v497 = vadd.f32 0.0, %v496
        %v498 = vpop.f32.mrb[0].mxu0
        %v499 = vpop.f32.mrb[0].mxu0
        %v500 = vadd.f32 0.0, %v499
        %v501 = vpop.f32.mrb[0].mxu0
        %502 = vmatprep.mubr.bf16.mxu0 0
        %503 = vmatmul.mubr.bf16.gmra.mrb[0].mxu0 %v442
        %v504 = vpop.f32.mrb[0].mxu0
        %v505 = vadd.f32 0.0, %v504
        %v506 = vpop.f32.mrb[0].mxu0
        %v507 = vpop.f32.mrb[0].mxu0
        %v508 = vadd.f32 0.0, %v507
        %v509 = vpop.f32.mrb[0].mxu0
        %510 = vmatprep.mubr.bf16.mxu0 0
        %511 = vmatmul.mubr.bf16.gmra.mrb[0].mxu0 %v445
        %v512 = vpop.f32.mrb[0].mxu0
        %v513 = vadd.f32 0.0, %v512
        %v514 = vpop.f32.mrb[0].mxu0
        %v515 = vpop.f32.mrb[0].mxu0
        %v516 = vadd.f32 0.0, %v515
        %v517 = vpop.f32.mrb[0].mxu0
        %518 = vmatprep.mubr.bf16.mxu0 0
        %519 = vmatmul.mubr.bf16.gmra.mrb[0].mxu0 %v448
        %v520 = vpop.f32.mrb[0].mxu0
        %v521 = vadd.f32 0.0, %v520
        %v522 = vpop.f32.mrb[0].mxu0
        %v523 = vpop.f32.mrb[0].mxu0
        %v524 = vadd.f32 0.0, %v523
        %v525 = vpop.f32.mrb[0].mxu0
        %526 = vdwg.mxu0
        %v527 = vsel %vm434, %v383, 0
        %v529 = vsel %vm434, %v384, 0
        %v531 = vsel %vm434, %v385, 0
        %v533 = vsel %vm434, %v386, 0
        %v535 = vsel %vm434, %v387, 0
        %v538 = vsel %vm450, %v357, 0
        %540 = vmatprep.subr.bf16.mxu0 0
        %541 = vmatpush1.bf16.msra.mxu0 %v538
        %542 = vmatprep.subr.bf16.mxu0 0
        %543 = vmatpush1.bf16.msra.mxu0 0
        %544 = vmatprep.subr.bf16.mxu0 0
        %545 = vmatpush1.bf16.msra.mxu0 0
        %546 = vmatprep.subr.bf16.mxu0 0
        %547 = vmatpush1.bf16.msra.mxu0 0
        %548 = vmatprep.subr.bf16.mxu0 0
        %549 = vmatpush1.bf16.msra.mxu0 0
        %550 = vmatprep.subr.bf16.mxu0 0
        %551 = vmatpush1.bf16.msra.mxu0 0
        %552 = vmatprep.subr.bf16.mxu0 0
        %553 = vmatpush1.bf16.msra.mxu0 0
        %554 = vmatprep.subr.bf16.mxu0 0
        %555 = vmatpush1.bf16.msra.mxu0 0
        %556 = vmatprep.subr.bf16.mxu0 0
        %557 = vmatpush1.bf16.msra.mxu0 0
        %558 = vmatprep.subr.bf16.mxu0 0
        %559 = vmatpush1.bf16.msra.mxu0 0
        %560 = vmatprep.subr.bf16.mxu0 0
        %561 = vmatpush1.bf16.msra.mxu0 0
        %562 = vmatprep.subr.bf16.mxu0 0
        %563 = vmatpush1.bf16.msra.mxu0 0
        %564 = vmatprep.subr.bf16.mxu0 0
        %565 = vmatpush1.bf16.msra.mxu0 0
        %566 = vmatprep.subr.bf16.mxu0 0
        %567 = vmatpush1.bf16.msra.mxu0 0
        %568 = vmatprep.subr.bf16.mxu0 0
        %569 = vmatpush1.bf16.msra.mxu0 0
        %570 = vmatprep.subr.bf16.mxu0 0
        %571 = vmatpush1.bf16.msra.mxu0 0
        %572 = vmatprep.mubr.bf16.mxu0 0
        %573 = vmatmul.mubr.bf16.gmra.mrb[0].mxu0 %v527
        %v574 = vpop.f32.mrb[0].mxu0
        %v575 = vadd.f32 %v489, %v574
        %v576 = vpop.f32.mrb[0].mxu0
        %v577 = vpop.f32.mrb[0].mxu0
        %v578 = vadd.f32 %v492, %v577
        %v579 = vpop.f32.mrb[0].mxu0
        %580 = vmatprep.mubr.bf16.mxu0 0
        %581 = vmatmul.mubr.bf16.gmra.mrb[0].mxu0 %v529
        %v582 = vpop.f32.mrb[0].mxu0
        %v583 = vadd.f32 %v497, %v582
        %v584 = vpop.f32.mrb[0].mxu0
        %v585 = vpop.f32.mrb[0].mxu0
        %v586 = vadd.f32 %v500, %v585
        %v587 = vpop.f32.mrb[0].mxu0
        %588 = vmatprep.mubr.bf16.mxu0 0
        %589 = vmatmul.mubr.bf16.gmra.mrb[0].mxu0 %v531
        %v590 = vpop.f32.mrb[0].mxu0
        %v591 = vadd.f32 %v505, %v590
        %v592 = vpop.f32.mrb[0].mxu0
        %v593 = vpop.f32.mrb[0].mxu0
        %v594 = vadd.f32 %v508, %v593
        %v595 = vpop.f32.mrb[0].mxu0
        %596 = vmatprep.mubr.bf16.mxu0 0
        %597 = vmatmul.mubr.bf16.gmra.mrb[0].mxu0 %v533
        %v598 = vpop.f32.mrb[0].mxu0
        %v599 = vadd.f32 %v513, %v598
        %v600 = vpop.f32.mrb[0].mxu0
        %v601 = vpop.f32.mrb[0].mxu0
        %v602 = vadd.f32 %v516, %v601
        %v603 = vpop.f32.mrb[0].mxu0
        %604 = vmatprep.mubr.bf16.mxu0 0
        %605 = vmatmul.mubr.bf16.gmra.mrb[0].mxu0 %v535
        %v606 = vpop.f32.mrb[0].mxu0
        %v607 = vadd.f32 %v521, %v606
        %v608 = vpop.f32.mrb[0].mxu0
        %v609 = vpop.f32.mrb[0].mxu0
        %v610 = vadd.f32 %v524, %v609
        %v611 = vpop.f32.mrb[0].mxu0
        %612 = vdwg.mxu0
        %v613 = vld [vmem:[%s293] sm:$0xe]
        %s614 = scalar_lea.vmem [#allocation7], 8
        %v615 = vld [vmem:[%s614] sm:$0xf]
        %v617 = vunpack.c.l.b16 %v613
        %v618 = vpack.c.b16 %v373, %v617
        %vm619 = vcmask 1046528
        %v620 = vrot.slane %v618, 1
        %v621 = vrot.slane %v384, 1
        %v622 = vsel %vm619, %v620, %v621
        %v623 = vrot.slane %v385, 1
        %v624 = vsel %vm619, %v621, %v623
        %v625 = vrot.slane %v386, 1
        %v626 = vsel %vm619, %v623, %v625
        %v627 = vrot.slane %v387, 1
        %v628 = vsel %vm619, %v625, %v627
        %v629 = vrot.slane %v388, 1
        %v630 = vsel %vm619, %v627, %v629
        %v632 = vsel %vm434, %v622, 0
        %v635 = vsel %vm434, %v624, 0
        %v638 = vsel %vm434, %v626, 0
        %v641 = vsel %vm434, %v628, 0
        %v644 = vsel %vm434, %v630, 0
        %v647 = vsel %vm450, %v615, 0
        %649 = vmatprep.subr.bf16.mxu0 0
        %650 = vmatpush1.bf16.msra.mxu0 %v647
        %651 = vmatprep.subr.bf16.mxu0 0
        %652 = vmatpush1.bf16.msra.mxu0 0
        %653 = vmatprep.subr.bf16.mxu0 0
        %654 = vmatpush1.bf16.msra.mxu0 0
        %655 = vmatprep.subr.bf16.mxu0 0
        %656 = vmatpush1.bf16.msra.mxu0 0
        %657 = vmatprep.subr.bf16.mxu0 0
        %658 = vmatpush1.bf16.msra.mxu0 0
        %659 = vmatprep.subr.bf16.mxu0 0
        %660 = vmatpush1.bf16.msra.mxu0 0
        %661 = vmatprep.subr.bf16.mxu0 0
        %662 = vmatpush1.bf16.msra.mxu0 0
        %663 = vmatprep.subr.bf16.mxu0 0
        %664 = vmatpush1.bf16.msra.mxu0 0
        %665 = vmatprep.subr.bf16.mxu0 0
        %666 = vmatpush1.bf16.msra.mxu0 0
        %667 = vmatprep.subr.bf16.mxu0 0
        %668 = vmatpush1.bf16.msra.mxu0 0
        %669 = vmatprep.subr.bf16.mxu0 0
        %670 = vmatpush1.bf16.msra.mxu0 0
        %671 = vmatprep.subr.bf16.mxu0 0
        %672 = vmatpush1.bf16.msra.mxu0 0
        %673 = vmatprep.subr.bf16.mxu0 0
        %674 = vmatpush1.bf16.msra.mxu0 0
        %675 = vmatprep.subr.bf16.mxu0 0
        %676 = vmatpush1.bf16.msra.mxu0 0
        %677 = vmatprep.subr.bf16.mxu0 0
        %678 = vmatpush1.bf16.msra.mxu0 0
        %679 = vmatprep.subr.bf16.mxu0 0
        %680 = vmatpush1.bf16.msra.mxu0 0
        %681 = vmatprep.mubr.bf16.mxu0 0
        %682 = vmatmul.mubr.bf16.gmra.mrb[0].mxu0 %v632
        %v683 = vpop.f32.mrb[0].mxu0
        %v684 = vadd.f32 0.0, %v683
        %v685 = vpop.f32.mrb[0].mxu0
        %v686 = vpop.f32.mrb[0].mxu0
        %v687 = vadd.f32 0.0, %v686
        %v688 = vpop.f32.mrb[0].mxu0
        %689 = vmatprep.mubr.bf16.mxu0 0
        %690 = vmatmul.mubr.bf16.gmra.mrb[0].mxu0 %v635
        %v691 = vpop.f32.mrb[0].mxu0
        %v692 = vadd.f32 0.0, %v691
        %v693 = vpop.f32.mrb[0].mxu0
        %v694 = vpop.f32.mrb[0].mxu0
        %v695 = vadd.f32 0.0, %v694
        %v696 = vpop.f32.mrb[0].mxu0
        %697 = vmatprep.mubr.bf16.mxu0 0
        %698 = vmatmul.mubr.bf16.gmra.mrb[0].mxu0 %v638
        %v699 = vpop.f32.mrb[0].mxu0
        %v700 = vadd.f32 0.0, %v699
        %v701 = vpop.f32.mrb[0].mxu0
        %v702 = vpop.f32.mrb[0].mxu0
        %v703 = vadd.f32 0.0, %v702
        %v704 = vpop.f32.mrb[0].mxu0
        %705 = vmatprep.mubr.bf16.mxu0 0
        %706 = vmatmul.mubr.bf16.gmra.mrb[0].mxu0 %v641
        %v707 = vpop.f32.mrb[0].mxu0
        %v708 = vadd.f32 0.0, %v707
        %v709 = vpop.f32.mrb[0].mxu0
        %v710 = vpop.f32.mrb[0].mxu0
        %v711 = vadd.f32 0.0, %v710
        %v712 = vpop.f32.mrb[0].mxu0
        %713 = vmatprep.mubr.bf16.mxu0 0
        %714 = vmatmul.mubr.bf16.gmra.mrb[0].mxu0 %v644
        %v715 = vpop.f32.mrb[0].mxu0
        %v716 = vadd.f32 0.0, %v715
        %v717 = vpop.f32.mrb[0].mxu0
        %v718 = vpop.f32.mrb[0].mxu0
        %v719 = vadd.f32 0.0, %v718
        %v720 = vpop.f32.mrb[0].mxu0
        %721 = vdwg.mxu0
        %v722 = vadd.f32 %v575, %v684
        %v723 = vadd.f32 %v578, %v687
        %v724 = vadd.f32 %v583, %v692
        %v725 = vadd.f32 %v586, %v695
        %v726 = vadd.f32 %v591, %v700
        %v727 = vadd.f32 %v594, %v703
        %v728 = vadd.f32 %v599, %v708
        %v729 = vadd.f32 %v602, %v711
        %v730 = vadd.f32 %v607, %v716
        %v731 = vadd.f32 %v610, %v719
        %v732 = vld [vmem:[%s293 + $0x4] sm:$0xe]
        %v733 = vld [vmem:[%s293 + $0x8] sm:$0xf]
        %v734 = vld [vmem:[%s293 + $0xc] sm:$0xf]
        %v735 = vld [vmem:[%s293 + $0x10] sm:$0xf]
        %v736 = vld [vmem:[%s293 + $0x14] sm:$0xf]
        %v737 = vld [vmem:[%s293 + $0x18] sm:$0xf]
        %v738 = vld [vmem:[%s293 + $0x1c] sm:$0xf]
        %v739 = vld [vmem:[%s293 + $0x20] sm:$0xf]
        %v740 = vld [vmem:[%s293 + $0x24] sm:$0xf]
        %v741 = vld [vmem:[%s293 + $0x28] sm:$0xf]
        %v742 = vld [vmem:[%s293 + $0x2c] sm:$0x1]
        %s743 = scalar_lea.vmem [#allocation7], 12
        %v744 = vld [vmem:[%s743] sm:$0xf]
        %v756 = vunpack.c.l.b16 %v732
        %v757 = vunpack.c.l.b16 %v733
        %v758 = vunpack.c.l.b16 %v734
        %v759 = vunpack.c.l.b16 %v735
        %v760 = vunpack.c.l.b16 %v736
        %v761 = vunpack.c.l.b16 %v737
        %v762 = vunpack.c.l.b16 %v738
        %v763 = vunpack.c.l.b16 %v739
        %v764 = vunpack.c.l.b16 %v740
        %v765 = vunpack.c.l.b16 %v741
        %v766 = vunpack.c.l.b16 %v742
        %v767 = vpack.c.b16 %v757, %v756
        %v768 = vpack.c.b16 %v759, %v758
        %v769 = vpack.c.b16 %v761, %v760
        %v770 = vpack.c.b16 %v763, %v762
        %v771 = vpack.c.b16 %v765, %v764
        %v772 = vpack.c.b16 %v766, %v766
        %v773 = vrot.slane %v767, 1
        %v774 = vrot.slane %v768, 1
        %v775 = vsel %vm619, %v773, %v774
        %v776 = vrot.slane %v769, 1
        %v777 = vsel %vm619, %v774, %v776
        %v778 = vrot.slane %v770, 1
        %v779 = vsel %vm619, %v776, %v778
        %v780 = vrot.slane %v771, 1
        %v781 = vsel %vm619, %v778, %v780
        %v782 = vrot.slane %v772, 1
        %v783 = vsel %vm619, %v780, %v782
        %v785 = vsel %vm434, %v775, 0
        %v788 = vsel %vm434, %v777, 0
        %v791 = vsel %vm434, %v779, 0
        %v794 = vsel %vm434, %v781, 0
        %v797 = vsel %vm434, %v783, 0
        %v800 = vsel %vm450, %v744, 0
        %802 = vmatprep.subr.bf16.mxu0 0
        %803 = vmatpush1.bf16.msra.mxu0 %v800
        %804 = vmatprep.subr.bf16.mxu0 0
        %805 = vmatpush1.bf16.msra.mxu0 0
        %806 = vmatprep.subr.bf16.mxu0 0
        %807 = vmatpush1.bf16.msra.mxu0 0
        %808 = vmatprep.subr.bf16.mxu0 0
        %809 = vmatpush1.bf16.msra.mxu0 0
        %810 = vmatprep.subr.bf16.mxu0 0
        %811 = vmatpush1.bf16.msra.mxu0 0
        %812 = vmatprep.subr.bf16.mxu0 0
        %813 = vmatpush1.bf16.msra.mxu0 0
        %814 = vmatprep.subr.bf16.mxu0 0
        %815 = vmatpush1.bf16.msra.mxu0 0
        %816 = vmatprep.subr.bf16.mxu0 0
        %817 = vmatpush1.bf16.msra.mxu0 0
        %818 = vmatprep.subr.bf16.mxu0 0
        %819 = vmatpush1.bf16.msra.mxu0 0
        %820 = vmatprep.subr.bf16.mxu0 0
        %821 = vmatpush1.bf16.msra.mxu0 0
        %822 = vmatprep.subr.bf16.mxu0 0
        %823 = vmatpush1.bf16.msra.mxu0 0
        %824 = vmatprep.subr.bf16.mxu0 0
        %825 = vmatpush1.bf16.msra.mxu0 0
        %826 = vmatprep.subr.bf16.mxu0 0
        %827 = vmatpush1.bf16.msra.mxu0 0
        %828 = vmatprep.subr.bf16.mxu0 0
        %829 = vmatpush1.bf16.msra.mxu0 0
        %830 = vmatprep.subr.bf16.mxu0 0
        %831 = vmatpush1.bf16.msra.mxu0 0
        %832 = vmatprep.subr.bf16.mxu0 0
        %833 = vmatpush1.bf16.msra.mxu0 0
        %834 = vmatprep.mubr.bf16.mxu0 0
        %835 = vmatmul.mubr.bf16.gmra.mrb[0].mxu0 %v785
        %v836 = vpop.f32.mrb[0].mxu0
        %v837 = vadd.f32 0.0, %v836
        %v838 = vpop.f32.mrb[0].mxu0
        %v839 = vpop.f32.mrb[0].mxu0
        %v840 = vadd.f32 0.0, %v839
        %v841 = vpop.f32.mrb[0].mxu0
        %842 = vmatprep.mubr.bf16.mxu0 0
        %843 = vmatmul.mubr.bf16.gmra.mrb[0].mxu0 %v788
        %v844 = vpop.f32.mrb[0].mxu0
        %v845 = vadd.f32 0.0, %v844
        %v846 = vpop.f32.mrb[0].mxu0
        %v847 = vpop.f32.mrb[0].mxu0
        %v848 = vadd.f32 0.0, %v847
        %v849 = vpop.f32.mrb[0].mxu0
        %850 = vmatprep.mubr.bf16.mxu0 0
        %851 = vmatmul.mubr.bf16.gmra.mrb[0].mxu0 %v791
        %v852 = vpop.f32.mrb[0].mxu0
        %v853 = vadd.f32 0.0, %v852
        %v854 = vpop.f32.mrb[0].mxu0
        %v855 = vpop.f32.mrb[0].mxu0
        %v856 = vadd.f32 0.0, %v855
        %v857 = vpop.f32.mrb[0].mxu0
        %858 = vmatprep.mubr.bf16.mxu0 0
        %859 = vmatmul.mubr.bf16.gmra.mrb[0].mxu0 %v794
        %v860 = vpop.f32.mrb[0].mxu0
        %v861 = vadd.f32 0.0, %v860
        %v862 = vpop.f32.mrb[0].mxu0
        %v863 = vpop.f32.mrb[0].mxu0
        %v864 = vadd.f32 0.0, %v863
        %v865 = vpop.f32.mrb[0].mxu0
        %866 = vmatprep.mubr.bf16.mxu0 0
        %867 = vmatmul.mubr.bf16.gmra.mrb[0].mxu0 %v797
        %v868 = vpop.f32.mrb[0].mxu0
        %v869 = vadd.f32 0.0, %v868
        %v870 = vpop.f32.mrb[0].mxu0
        %v871 = vpop.f32.mrb[0].mxu0
        %v872 = vadd.f32 0.0, %v871
        %v873 = vpop.f32.mrb[0].mxu0
        %874 = vdwg.mxu0
        %v875 = vadd.f32 %v722, %v837
        %v876 = vadd.f32 %v723, %v840
        %v877 = vadd.f32 %v724, %v845
        %v878 = vadd.f32 %v725, %v848
        %v879 = vadd.f32 %v726, %v853
        %v880 = vadd.f32 %v727, %v856
        %v881 = vadd.f32 %v728, %v861
        %v882 = vadd.f32 %v729, %v864
        %v883 = vadd.f32 %v730, %v869
        %v884 = vadd.f32 %v731, %v872
        %v885 = vld [vmem:[%s293 + $0x2c] sm:$0x3]
        %s886 = scalar_lea.vmem [#allocation7], 16
        %v887 = vld [vmem:[%s886] sm:$0xf]
        %v889 = vunpack.c.l.b16 %v885
        %v890 = vpack.c.b16 %v889, %v889
        %vm891 = vsmask.f32 6400
        %v893 = vshrl.u32 %v767, 16
        %v895 = vrot.slane %v893, 1
        %v896 = vshll.u32 %v767, 16
        %v898 = vrot.slane %v896, 2
        %v899 = vor.u32 %v895, %v898
        %v901 = vshrl.u32 %v768, 16
        %v903 = vrot.slane %v901, 1
        %v904 = vshll.u32 %v768, 16
        %v906 = vrot.slane %v904, 2
        %v907 = vor.u32 %v903, %v906
        %v908 = vsel %vm891, %v899, %v907
        %v910 = vshrl.u32 %v769, 16
        %v912 = vrot.slane %v910, 1
        %v913 = vshll.u32 %v769, 16
        %v915 = vrot.slane %v913, 2
        %v916 = vor.u32 %v912, %v915
        %v917 = vsel %vm891, %v907, %v916
        %v919 = vshrl.u32 %v770, 16
        %v921 = vrot.slane %v919, 1
        %v922 = vshll.u32 %v770, 16
        %v924 = vrot.slane %v922, 2
        %v925 = vor.u32 %v921, %v924
        %v926 = vsel %vm891, %v916, %v925
        %v928 = vshrl.u32 %v771, 16
        %v930 = vrot.slane %v928, 1
        %v931 = vshll.u32 %v771, 16
        %v933 = vrot.slane %v931, 2
        %v934 = vor.u32 %v930, %v933
        %v935 = vsel %vm891, %v925, %v934
        %v937 = vshrl.u32 %v890, 16
        %v939 = vrot.slane %v937, 1
        %v940 = vshll.u32 %v890, 16
        %v942 = vrot.slane %v940, 2
        %v943 = vor.u32 %v939, %v942
        %v944 = vsel %vm891, %v934, %v943
        %v946 = vsel %vm434, %v908, 0
        %v949 = vsel %vm434, %v917, 0
        %v952 = vsel %vm434, %v926, 0
        %v955 = vsel %vm434, %v935, 0
        %v958 = vsel %vm434, %v944, 0
        %v961 = vsel %vm450, %v887, 0
        %963 = vmatprep.subr.bf16.mxu0 0
        %964 = vmatpush1.bf16.msra.mxu0 %v961
        %965 = vmatprep.subr.bf16.mxu0 0
        %966 = vmatpush1.bf16.msra.mxu0 0
        %967 = vmatprep.subr.bf16.mxu0 0
        %968 = vmatpush1.bf16.msra.mxu0 0
        %969 = vmatprep.subr.bf16.mxu0 0
        %970 = vmatpush1.bf16.msra.mxu0 0
        %971 = vmatprep.subr.bf16.mxu0 0
        %972 = vmatpush1.bf16.msra.mxu0 0
        %973 = vmatprep.subr.bf16.mxu0 0
        %974 = vmatpush1.bf16.msra.mxu0 0
        %975 = vmatprep.subr.bf16.mxu0 0
        %976 = vmatpush1.bf16.msra.mxu0 0
        %977 = vmatprep.subr.bf16.mxu0 0
        %978 = vmatpush1.bf16.msra.mxu0 0
        %979 = vmatprep.subr.bf16.mxu0 0
        %980 = vmatpush1.bf16.msra.mxu0 0
        %981 = vmatprep.subr.bf16.mxu0 0
        %982 = vmatpush1.bf16.msra.mxu0 0
        %983 = vmatprep.subr.bf16.mxu0 0
        %984 = vmatpush1.bf16.msra.mxu0 0
        %985 = vmatprep.subr.bf16.mxu0 0
        %986 = vmatpush1.bf16.msra.mxu0 0
        %987 = vmatprep.subr.bf16.mxu0 0
        %988 = vmatpush1.bf16.msra.mxu0 0
        %989 = vmatprep.subr.bf16.mxu0 0
        %990 = vmatpush1.bf16.msra.mxu0 0
        %991 = vmatprep.subr.bf16.mxu0 0
        %992 = vmatpush1.bf16.msra.mxu0 0
        %993 = vmatprep.subr.bf16.mxu0 0
        %994 = vmatpush1.bf16.msra.mxu0 0
        %995 = vmatprep.mubr.bf16.mxu0 0
        %996 = vmatmul.mubr.bf16.gmra.mrb[0].mxu0 %v946
        %v997 = vpop.f32.mrb[0].mxu0
        %v998 = vadd.f32 0.0, %v997
        %v999 = vpop.f32.mrb[0].mxu0
        %v1000 = vpop.f32.mrb[0].mxu0
        %v1001 = vadd.f32 0.0, %v1000
        %v1002 = vpop.f32.mrb[0].mxu0
        %1003 = vmatprep.mubr.bf16.mxu0 0
        %1004 = vmatmul.mubr.bf16.gmra.mrb[0].mxu0 %v949
        %v1005 = vpop.f32.mrb[0].mxu0
        %v1006 = vadd.f32 0.0, %v1005
        %v1007 = vpop.f32.mrb[0].mxu0
        %v1008 = vpop.f32.mrb[0].mxu0
        %v1009 = vadd.f32 0.0, %v1008
        %v1010 = vpop.f32.mrb[0].mxu0
        %1011 = vmatprep.mubr.bf16.mxu0 0
        %1012 = vmatmul.mubr.bf16.gmra.mrb[0].mxu0 %v952
        %v1013 = vpop.f32.mrb[0].mxu0
        %v1014 = vadd.f32 0.0, %v1013
        %v1015 = vpop.f32.mrb[0].mxu0
        %v1016 = vpop.f32.mrb[0].mxu0
        %v1017 = vadd.f32 0.0, %v1016
        %v1018 = vpop.f32.mrb[0].mxu0
        %1019 = vmatprep.mubr.bf16.mxu0 0
        %1020 = vmatmul.mubr.bf16.gmra.mrb[0].mxu0 %v955
        %v1021 = vpop.f32.mrb[0].mxu0
        %v1022 = vadd.f32 0.0, %v1021
        %v1023 = vpop.f32.mrb[0].mxu0
        %v1024 = vpop.f32.mrb[0].mxu0
        %v1025 = vadd.f32 0.0, %v1024
        %v1026 = vpop.f32.mrb[0].mxu0
        %1027 = vmatprep.mubr.bf16.mxu0 0
        %1028 = vmatmul.mubr.bf16.gmra.mrb[0].mxu0 %v958
        %v1029 = vpop.f32.mrb[0].mxu0
        %v1030 = vadd.f32 0.0, %v1029
        %v1031 = vpop.f32.mrb[0].mxu0
        %v1032 = vpop.f32.mrb[0].mxu0
        %v1033 = vadd.f32 0.0, %v1032
        %v1034 = vpop.f32.mrb[0].mxu0
        %1035 = vdwg.mxu0
        %v1036 = vadd.f32 %v875, %v998
        %v1037 = vadd.f32 %v876, %v1001
        %v1038 = vadd.f32 %v877, %v1006
        %v1039 = vadd.f32 %v878, %v1009
        %v1040 = vadd.f32 %v879, %v1014
        %v1041 = vadd.f32 %v880, %v1017
        %v1042 = vadd.f32 %v881, %v1022
        %v1043 = vadd.f32 %v882, %v1025
        %v1044 = vadd.f32 %v883, %v1030
        %v1045 = vadd.f32 %v884, %v1033
        %v1046 = vld [vmem:[%s293 + $0x4] sm:$0xc]
        %s1047 = scalar_lea.vmem [#allocation7], 20
        %v1048 = vld [vmem:[%s1047] sm:$0xf]
        %v1050 = vunpack.c.l.b16 %v1046
        %v1051 = vpack.c.b16 %v757, %v1050
        %vm1052 = vcmask 1045504
        %v1053 = vrot.slane %v1051, 2
        %v1054 = vrot.slane %v768, 2
        %v1055 = vsel %vm1052, %v1053, %v1054
        %v1056 = vrot.slane %v769, 2
        %v1057 = vsel %vm1052, %v1054, %v1056
        %v1058 = vrot.slane %v770, 2
        %v1059 = vsel %vm1052, %v1056, %v1058
        %v1060 = vrot.slane %v771, 2
        %v1061 = vsel %vm1052, %v1058, %v1060
        %v1062 = vrot.slane %v890, 2
        %v1063 = vsel %vm1052, %v1060, %v1062
        %v1065 = vsel %vm434, %v1055, 0
        %v1068 = vsel %vm434, %v1057, 0
        %v1071 = vsel %vm434, %v1059, 0
        %v1074 = vsel %vm434, %v1061, 0
        %v1077 = vsel %vm434, %v1063, 0
        %v1080 = vsel %vm450, %v1048, 0
        %1082 = vmatprep.subr.bf16.mxu0 0
        %1083 = vmatpush1.bf16.msra.mxu0 %v1080
        %1084 = vmatprep.subr.bf16.mxu0 0
        %1085 = vmatpush1.bf16.msra.mxu0 0
        %1086 = vmatprep.subr.bf16.mxu0 0
        %1087 = vmatpush1.bf16.msra.mxu0 0
        %1088 = vmatprep.subr.bf16.mxu0 0
        %1089 = vmatpush1.bf16.msra.mxu0 0
        %1090 = vmatprep.subr.bf16.mxu0 0
        %1091 = vmatpush1.bf16.msra.mxu0 0
        %1092 = vmatprep.subr.bf16.mxu0 0
        %1093 = vmatpush1.bf16.msra.mxu0 0
        %1094 = vmatprep.subr.bf16.mxu0 0
        %1095 = vmatpush1.bf16.msra.mxu0 0
        %1096 = vmatprep.subr.bf16.mxu0 0
        %1097 = vmatpush1.bf16.msra.mxu0 0
        %1098 = vmatprep.subr.bf16.mxu0 0
        %1099 = vmatpush1.bf16.msra.mxu0 0
        %1100 = vmatprep.subr.bf16.mxu0 0
        %1101 = vmatpush1.bf16.msra.mxu0 0
        %1102 = vmatprep.subr.bf16.mxu0 0
        %1103 = vmatpush1.bf16.msra.mxu0 0
        %1104 = vmatprep.subr.bf16.mxu0 0
        %1105 = vmatpush1.bf16.msra.mxu0 0
        %1106 = vmatprep.subr.bf16.mxu0 0
        %1107 = vmatpush1.bf16.msra.mxu0 0
        %1108 = vmatprep.subr.bf16.mxu0 0
        %1109 = vmatpush1.bf16.msra.mxu0 0
        %1110 = vmatprep.subr.bf16.mxu0 0
        %1111 = vmatpush1.bf16.msra.mxu0 0
        %1112 = vmatprep.subr.bf16.mxu0 0
        %1113 = vmatpush1.bf16.msra.mxu0 0
        %1114 = vmatprep.mubr.bf16.mxu0 0
        %1115 = vmatmul.mubr.bf16.gmra.mrb[0].mxu0 %v1065
        %v1116 = vpop.f32.mrb[0].mxu0
        %v1117 = vadd.f32 0.0, %v1116
        %v1118 = vpop.f32.mrb[0].mxu0
        %v1119 = vpop.f32.mrb[0].mxu0
        %v1120 = vadd.f32 0.0, %v1119
        %v1121 = vpop.f32.mrb[0].mxu0
        %1122 = vmatprep.mubr.bf16.mxu0 0
        %1123 = vmatmul.mubr.bf16.gmra.mrb[0].mxu0 %v1068
        %v1124 = vpop.f32.mrb[0].mxu0
        %v1125 = vadd.f32 0.0, %v1124
        %v1126 = vpop.f32.mrb[0].mxu0
        %v1127 = vpop.f32.mrb[0].mxu0
        %v1128 = vadd.f32 0.0, %v1127
        %v1129 = vpop.f32.mrb[0].mxu0
        %1130 = vmatprep.mubr.bf16.mxu0 0
        %1131 = vmatmul.mubr.bf16.gmra.mrb[0].mxu0 %v1071
        %v1132 = vpop.f32.mrb[0].mxu0
        %v1133 = vadd.f32 0.0, %v1132
        %v1134 = vpop.f32.mrb[0].mxu0
        %v1135 = vpop.f32.mrb[0].mxu0
        %v1136 = vadd.f32 0.0, %v1135
        %v1137 = vpop.f32.mrb[0].mxu0
        %1138 = vmatprep.mubr.bf16.mxu0 0
        %1139 = vmatmul.mubr.bf16.gmra.mrb[0].mxu0 %v1074
        %v1140 = vpop.f32.mrb[0].mxu0
        %v1141 = vadd.f32 0.0, %v1140
        %v1142 = vpop.f32.mrb[0].mxu0
        %v1143 = vpop.f32.mrb[0].mxu0
        %v1144 = vadd.f32 0.0, %v1143
        %v1145 = vpop.f32.mrb[0].mxu0
        %1146 = vmatprep.mubr.bf16.mxu0 0
        %1147 = vmatmul.mubr.bf16.gmra.mrb[0].mxu0 %v1077
        %v1148 = vpop.f32.mrb[0].mxu0
        %v1149 = vadd.f32 0.0, %v1148
        %v1150 = vpop.f32.mrb[0].mxu0
        %v1151 = vpop.f32.mrb[0].mxu0
        %v1152 = vadd.f32 0.0, %v1151
        %v1153 = vpop.f32.mrb[0].mxu0
        %1154 = vdwg.mxu0
        %v1155 = vadd.f32 %v1036, %v1117
        %v1156 = vadd.f32 %v1037, %v1120
        %v1157 = vadd.f32 %v1038, %v1125
        %v1158 = vadd.f32 %v1039, %v1128
        %v1159 = vadd.f32 %v1040, %v1133
        %v1160 = vadd.f32 %v1041, %v1136
        %v1161 = vadd.f32 %v1042, %v1141
        %v1162 = vadd.f32 %v1043, %v1144
        %v1163 = vadd.f32 %v1044, %v1149
        %v1164 = vadd.f32 %v1045, %v1152
        %v1165 = vld [vmem:[%s293 + $0x8] sm:$0xc]
        %v1166 = vld [vmem:[%s293 + $0xc] sm:$0xf]
        %v1167 = vld [vmem:[%s293 + $0x10] sm:$0xf]
        %v1168 = vld [vmem:[%s293 + $0x14] sm:$0xf]
        %v1169 = vld [vmem:[%s293 + $0x18] sm:$0xf]
        %v1170 = vld [vmem:[%s293 + $0x1c] sm:$0xf]
        %v1171 = vld [vmem:[%s293 + $0x20] sm:$0xf]
        %v1172 = vld [vmem:[%s293 + $0x24] sm:$0xf]
        %v1173 = vld [vmem:[%s293 + $0x28] sm:$0xf]
        %v1174 = vld [vmem:[%s293 + $0x2c] sm:$0xf]
        %v1175 = vld [vmem:[%s293 + $0x30] sm:$0x3]
        %s1176 = scalar_lea.vmem [#allocation7], 24
        %v1177 = vld [vmem:[%s1176] sm:$0xf]
        %v1189 = vunpack.c.l.b16 %v1165
        %v1190 = vunpack.c.l.b16 %v1166
        %v1191 = vunpack.c.l.b16 %v1167
        %v1192 = vunpack.c.l.b16 %v1168
        %v1193 = vunpack.c.l.b16 %v1169
        %v1194 = vunpack.c.l.b16 %v1170
        %v1195 = vunpack.c.l.b16 %v1171
        %v1196 = vunpack.c.l.b16 %v1172
        %v1197 = vunpack.c.l.b16 %v1173
        %v1198 = vunpack.c.l.b16 %v1174
        %v1199 = vunpack.c.l.b16 %v1175
        %v1200 = vpack.c.b16 %v1190, %v1189
        %v1201 = vpack.c.b16 %v1192, %v1191
        %v1202 = vpack.c.b16 %v1194, %v1193
        %v1203 = vpack.c.b16 %v1196, %v1195
        %v1204 = vpack.c.b16 %v1198, %v1197
        %v1205 = vpack.c.b16 %v1199, %v1199
        %v1206 = vrot.slane %v1200, 2
        %v1207 = vrot.slane %v1201, 2
        %v1208 = vsel %vm1052, %v1206, %v1207
        %v1209 = vrot.slane %v1202, 2
        %v1210 = vsel %vm1052, %v1207, %v1209
        %v1211 = vrot.slane %v1203, 2
        %v1212 = vsel %vm1052, %v1209, %v1211
        %v1213 = vrot.slane %v1204, 2
        %v1214 = vsel %vm1052, %v1211, %v1213
        %v1215 = vrot.slane %v1205, 2
        %v1216 = vsel %vm1052, %v1213, %v1215
        %v1218 = vsel %vm434, %v1208, 0
        %v1221 = vsel %vm434, %v1210, 0
        %v1224 = vsel %vm434, %v1212, 0
        %v1227 = vsel %vm434, %v1214, 0
        %v1230 = vsel %vm434, %v1216, 0
        %v1233 = vsel %vm450, %v1177, 0
        %1235 = vmatprep.subr.bf16.mxu0 0
        %1236 = vmatpush1.bf16.msra.mxu0 %v1233
        %1237 = vmatprep.subr.bf16.mxu0 0
        %1238 = vmatpush1.bf16.msra.mxu0 0
        %1239 = vmatprep.subr.bf16.mxu0 0
        %1240 = vmatpush1.bf16.msra.mxu0 0
        %1241 = vmatprep.subr.bf16.mxu0 0
        %1242 = vmatpush1.bf16.msra.mxu0 0
        %1243 = vmatprep.subr.bf16.mxu0 0
        %1244 = vmatpush1.bf16.msra.mxu0 0
        %1245 = vmatprep.subr.bf16.mxu0 0
        %1246 = vmatpush1.bf16.msra.mxu0 0
        %1247 = vmatprep.subr.bf16.mxu0 0
        %1248 = vmatpush1.bf16.msra.mxu0 0
        %1249 = vmatprep.subr.bf16.mxu0 0
        %1250 = vmatpush1.bf16.msra.mxu0 0
        %1251 = vmatprep.subr.bf16.mxu0 0
        %1252 = vmatpush1.bf16.msra.mxu0 0
        %1253 = vmatprep.subr.bf16.mxu0 0
        %1254 = vmatpush1.bf16.msra.mxu0 0
        %1255 = vmatprep.subr.bf16.mxu0 0
        %1256 = vmatpush1.bf16.msra.mxu0 0
        %1257 = vmatprep.subr.bf16.mxu0 0
        %1258 = vmatpush1.bf16.msra.mxu0 0
        %1259 = vmatprep.subr.bf16.mxu0 0
        %1260 = vmatpush1.bf16.msra.mxu0 0
        %1261 = vmatprep.subr.bf16.mxu0 0
        %1262 = vmatpush1.bf16.msra.mxu0 0
        %1263 = vmatprep.subr.bf16.mxu0 0
        %1264 = vmatpush1.bf16.msra.mxu0 0
        %1265 = vmatprep.subr.bf16.mxu0 0
        %1266 = vmatpush1.bf16.msra.mxu0 0
        %1267 = vmatprep.mubr.bf16.mxu0 0
        %1268 = vmatmul.mubr.bf16.gmra.mrb[0].mxu0 %v1218
        %v1269 = vpop.f32.mrb[0].mxu0
        %v1270 = vadd.f32 0.0, %v1269
        %v1271 = vpop.f32.mrb[0].mxu0
        %v1272 = vpop.f32.mrb[0].mxu0
        %v1273 = vadd.f32 0.0, %v1272
        %v1274 = vpop.f32.mrb[0].mxu0
        %1275 = vmatprep.mubr.bf16.mxu0 0
        %1276 = vmatmul.mubr.bf16.gmra.mrb[0].mxu0 %v1221
        %v1277 = vpop.f32.mrb[0].mxu0
        %v1278 = vadd.f32 0.0, %v1277
        %v1279 = vpop.f32.mrb[0].mxu0
        %v1280 = vpop.f32.mrb[0].mxu0
        %v1281 = vadd.f32 0.0, %v1280
        %v1282 = vpop.f32.mrb[0].mxu0
        %1283 = vmatprep.mubr.bf16.mxu0 0
        %1284 = vmatmul.mubr.bf16.gmra.mrb[0].mxu0 %v1224
        %v1285 = vpop.f32.mrb[0].mxu0
        %v1286 = vadd.f32 0.0, %v1285
        %v1287 = vpop.f32.mrb[0].mxu0
        %v1288 = vpop.f32.mrb[0].mxu0
        %v1289 = vadd.f32 0.0, %v1288
        %v1290 = vpop.f32.mrb[0].mxu0
        %1291 = vmatprep.mubr.bf16.mxu0 0
        %1292 = vmatmul.mubr.bf16.gmra.mrb[0].mxu0 %v1227
        %v1293 = vpop.f32.mrb[0].mxu0
        %v1294 = vadd.f32 0.0, %v1293
        %v1295 = vpop.f32.mrb[0].mxu0
        %v1296 = vpop.f32.mrb[0].mxu0
        %v1297 = vadd.f32 0.0, %v1296
        %v1298 = vpop.f32.mrb[0].mxu0
        %1299 = vmatprep.mubr.bf16.mxu0 0
        %1300 = vmatmul.mubr.bf16.gmra.mrb[0].mxu0 %v1230
        %v1301 = vpop.f32.mrb[0].mxu0
        %v1302 = vadd.f32 0.0, %v1301
        %v1303 = vpop.f32.mrb[0].mxu0
        %v1304 = vpop.f32.mrb[0].mxu0
        %v1305 = vadd.f32 0.0, %v1304
        %v1306 = vpop.f32.mrb[0].mxu0
        %1307 = vdwg.mxu0
        %v1308 = vadd.f32 %v1155, %v1270
        %v1309 = vadd.f32 %v1156, %v1273
        %v1310 = vadd.f32 %v1157, %v1278
        %v1311 = vadd.f32 %v1158, %v1281
        %v1312 = vadd.f32 %v1159, %v1286
        %v1313 = vadd.f32 %v1160, %v1289
        %v1314 = vadd.f32 %v1161, %v1294
        %v1315 = vadd.f32 %v1162, %v1297
        %v1316 = vadd.f32 %v1163, %v1302
        %v1317 = vadd.f32 %v1164, %v1305
        %v1318 = vld [vmem:[%s293 + $0x30] sm:$0x7]
        %s1319 = scalar_lea.vmem [#allocation7], 28
        %v1320 = vld [vmem:[%s1319] sm:$0xf]
        %v1322 = vunpack.c.l.b16 %v1318
        %v1323 = vpack.c.b16 %v1322, %v1322
        %vm1324 = vsmask.f32 5376
        %v1326 = vshrl.u32 %v1200, 16
        %v1328 = vrot.slane %v1326, 2
        %v1329 = vshll.u32 %v1200, 16
        %v1331 = vrot.slane %v1329, 3
        %v1332 = vor.u32 %v1328, %v1331
        %v1334 = vshrl.u32 %v1201, 16
        %v1336 = vrot.slane %v1334, 2
        %v1337 = vshll.u32 %v1201, 16
        %v1339 = vrot.slane %v1337, 3
        %v1340 = vor.u32 %v1336, %v1339
        %v1341 = vsel %vm1324, %v1332, %v1340
        %v1343 = vshrl.u32 %v1202, 16
        %v1345 = vrot.slane %v1343, 2
        %v1346 = vshll.u32 %v1202, 16
        %v1348 = vrot.slane %v1346, 3
        %v1349 = vor.u32 %v1345, %v1348
        %v1350 = vsel %vm1324, %v1340, %v1349
        %v1352 = vshrl.u32 %v1203, 16
        %v1354 = vrot.slane %v1352, 2
        %v1355 = vshll.u32 %v1203, 16
        %v1357 = vrot.slane %v1355, 3
        %v1358 = vor.u32 %v1354, %v1357
        %v1359 = vsel %vm1324, %v1349, %v1358
        %v1361 = vshrl.u32 %v1204, 16
        %v1363 = vrot.slane %v1361, 2
        %v1364 = vshll.u32 %v1204, 16
        %v1366 = vrot.slane %v1364, 3
        %v1367 = vor.u32 %v1363, %v1366
        %v1368 = vsel %vm1324, %v1358, %v1367
        %v1370 = vshrl.u32 %v1323, 16
        %v1372 = vrot.slane %v1370, 2
        %v1373 = vshll.u32 %v1323, 16
        %v1375 = vrot.slane %v1373, 3
        %v1376 = vor.u32 %v1372, %v1375
        %v1377 = vsel %vm1324, %v1367, %v1376
        %v1379 = vsel %vm434, %v1341, 0
        %v1382 = vsel %vm434, %v1350, 0
        %v1385 = vsel %vm434, %v1359, 0
        %v1388 = vsel %vm434, %v1368, 0
        %v1391 = vsel %vm434, %v1377, 0
        %v1394 = vsel %vm450, %v1320, 0
        %1396 = vmatprep.subr.bf16.mxu0 0
        %1397 = vmatpush1.bf16.msra.mxu0 %v1394
        %1398 = vmatprep.subr.bf16.mxu0 0
        %1399 = vmatpush1.bf16.msra.mxu0 0
        %1400 = vmatprep.subr.bf16.mxu0 0
        %1401 = vmatpush1.bf16.msra.mxu0 0
        %1402 = vmatprep.subr.bf16.mxu0 0
        %1403 = vmatpush1.bf16.msra.mxu0 0
        %1404 = vmatprep.subr.bf16.mxu0 0
        %1405 = vmatpush1.bf16.msra.mxu0 0
        %1406 = vmatprep.subr.bf16.mxu0 0
        %1407 = vmatpush1.bf16.msra.mxu0 0
        %1408 = vmatprep.subr.bf16.mxu0 0
        %1409 = vmatpush1.bf16.msra.mxu0 0
        %1410 = vmatprep.subr.bf16.mxu0 0
        %1411 = vmatpush1.bf16.msra.mxu0 0
        %1412 = vmatprep.subr.bf16.mxu0 0
        %1413 = vmatpush1.bf16.msra.mxu0 0
        %1414 = vmatprep.subr.bf16.mxu0 0
        %1415 = vmatpush1.bf16.msra.mxu0 0
        %1416 = vmatprep.subr.bf16.mxu0 0
        %1417 = vmatpush1.bf16.msra.mxu0 0
        %1418 = vmatprep.subr.bf16.mxu0 0
        %1419 = vmatpush1.bf16.msra.mxu0 0
        %1420 = vmatprep.subr.bf16.mxu0 0
        %1421 = vmatpush1.bf16.msra.mxu0 0
        %1422 = vmatprep.subr.bf16.mxu0 0
        %1423 = vmatpush1.bf16.msra.mxu0 0
        %1424 = vmatprep.subr.bf16.mxu0 0
        %1425 = vmatpush1.bf16.msra.mxu0 0
        %1426 = vmatprep.subr.bf16.mxu0 0
        %1427 = vmatpush1.bf16.msra.mxu0 0
        %1428 = vmatprep.mubr.bf16.mxu0 0
        %1429 = vmatmul.mubr.bf16.gmra.mrb[0].mxu0 %v1379
        %v1430 = vpop.f32.mrb[0].mxu0
        %v1431 = vadd.f32 0.0, %v1430
        %v1432 = vpop.f32.mrb[0].mxu0
        %v1433 = vpop.f32.mrb[0].mxu0
        %v1434 = vadd.f32 0.0, %v1433
        %v1435 = vpop.f32.mrb[0].mxu0
        %1436 = vmatprep.mubr.bf16.mxu0 0
        %1437 = vmatmul.mubr.bf16.gmra.mrb[0].mxu0 %v1382
        %v1438 = vpop.f32.mrb[0].mxu0
        %v1439 = vadd.f32 0.0, %v1438
        %v1440 = vpop.f32.mrb[0].mxu0
        %v1441 = vpop.f32.mrb[0].mxu0
        %v1442 = vadd.f32 0.0, %v1441
        %v1443 = vpop.f32.mrb[0].mxu0
        %1444 = vmatprep.mubr.bf16.mxu0 0
        %1445 = vmatmul.mubr.bf16.gmra.mrb[0].mxu0 %v1385
        %v1446 = vpop.f32.mrb[0].mxu0
        %v1447 = vadd.f32 0.0, %v1446
        %v1448 = vpop.f32.mrb[0].mxu0
        %v1449 = vpop.f32.mrb[0].mxu0
        %v1450 = vadd.f32 0.0, %v1449
        %v1451 = vpop.f32.mrb[0].mxu0
        %1452 = vmatprep.mubr.bf16.mxu0 0
        %1453 = vmatmul.mubr.bf16.gmra.mrb[0].mxu0 %v1388
        %v1454 = vpop.f32.mrb[0].mxu0
        %v1455 = vadd.f32 0.0, %v1454
        %v1456 = vpop.f32.mrb[0].mxu0
        %v1457 = vpop.f32.mrb[0].mxu0
        %v1458 = vadd.f32 0.0, %v1457
        %v1459 = vpop.f32.mrb[0].mxu0
        %1460 = vmatprep.mubr.bf16.mxu0 0
        %1461 = vmatmul.mubr.bf16.gmra.mrb[0].mxu0 %v1391
        %v1462 = vpop.f32.mrb[0].mxu0
        %v1463 = vadd.f32 0.0, %v1462
        %v1464 = vpop.f32.mrb[0].mxu0
        %v1465 = vpop.f32.mrb[0].mxu0
        %v1466 = vadd.f32 0.0, %v1465
        %v1467 = vpop.f32.mrb[0].mxu0
        %1468 = vdwg.mxu0
        %v1469 = vadd.f32 %v1308, %v1431
        %v1470 = vadd.f32 %v1309, %v1434
        %v1471 = vadd.f32 %v1310, %v1439
        %v1472 = vadd.f32 %v1311, %v1442
        %v1473 = vadd.f32 %v1312, %v1447
        %v1474 = vadd.f32 %v1313, %v1450
        %v1475 = vadd.f32 %v1314, %v1455
        %v1476 = vadd.f32 %v1315, %v1458
        %v1477 = vadd.f32 %v1316, %v1463
        %v1478 = vadd.f32 %v1317, %v1466
        %v1479 = vld [vmem:[%s293 + $0x8] sm:$0x8]
        %s1480 = scalar_lea.vmem [#allocation7], 32
        %v1481 = vld [vmem:[%s1480] sm:$0xf]
        %v1483 = vunpack.c.l.b16 %v1479
        %v1484 = vpack.c.b16 %v1190, %v1483
        %vm1485 = vcmask 1044480
        %v1486 = vrot.slane %v1484, 3
        %v1487 = vrot.slane %v1201, 3
        %v1488 = vsel %vm1485, %v1486, %v1487
        %v1489 = vrot.slane %v1202, 3
        %v1490 = vsel %vm1485, %v1487, %v1489
        %v1491 = vrot.slane %v1203, 3
        %v1492 = vsel %vm1485, %v1489, %v1491
        %v1493 = vrot.slane %v1204, 3
        %v1494 = vsel %vm1485, %v1491, %v1493
        %v1495 = vrot.slane %v1323, 3
        %v1496 = vsel %vm1485, %v1493, %v1495
        %v1498 = vsel %vm434, %v1488, 0
        %v1501 = vsel %vm434, %v1490, 0
        %v1504 = vsel %vm434, %v1492, 0
        %v1507 = vsel %vm434, %v1494, 0
        %v1510 = vsel %vm434, %v1496, 0
        %v1513 = vsel %vm450, %v1481, 0
        %1515 = vmatprep.subr.bf16.mxu0 0
        %1516 = vmatpush1.bf16.msra.mxu0 %v1513
        %1517 = vmatprep.subr.bf16.mxu0 0
        %1518 = vmatpush1.bf16.msra.mxu0 0
        %1519 = vmatprep.subr.bf16.mxu0 0
        %1520 = vmatpush1.bf16.msra.mxu0 0
        %1521 = vmatprep.subr.bf16.mxu0 0
        %1522 = vmatpush1.bf16.msra.mxu0 0
        %1523 = vmatprep.subr.bf16.mxu0 0
        %1524 = vmatpush1.bf16.msra.mxu0 0
        %1525 = vmatprep.subr.bf16.mxu0 0
        %1526 = vmatpush1.bf16.msra.mxu0 0
        %1527 = vmatprep.subr.bf16.mxu0 0
        %1528 = vmatpush1.bf16.msra.mxu0 0
        %1529 = vmatprep.subr.bf16.mxu0 0
        %1530 = vmatpush1.bf16.msra.mxu0 0
        %1531 = vmatprep.subr.bf16.mxu0 0
        %1532 = vmatpush1.bf16.msra.mxu0 0
        %1533 = vmatprep.subr.bf16.mxu0 0
        %1534 = vmatpush1.bf16.msra.mxu0 0
        %1535 = vmatprep.subr.bf16.mxu0 0
        %1536 = vmatpush1.bf16.msra.mxu0 0
        %1537 = vmatprep.subr.bf16.mxu0 0
        %1538 = vmatpush1.bf16.msra.mxu0 0
        %1539 = vmatprep.subr.bf16.mxu0 0
        %1540 = vmatpush1.bf16.msra.mxu0 0
        %1541 = vmatprep.subr.bf16.mxu0 0
        %1542 = vmatpush1.bf16.msra.mxu0 0
        %1543 = vmatprep.subr.bf16.mxu0 0
        %1544 = vmatpush1.bf16.msra.mxu0 0
        %1545 = vmatprep.subr.bf16.mxu0 0
        %1546 = vmatpush1.bf16.msra.mxu0 0
        %1547 = vmatprep.mubr.bf16.mxu0 0
        %1548 = vmatmul.mubr.bf16.gmra.mrb[0].mxu0 %v1498
        %v1549 = vpop.f32.mrb[0].mxu0
        %v1550 = vadd.f32 0.0, %v1549
        %v1551 = vpop.f32.mrb[0].mxu0
        %v1552 = vpop.f32.mrb[0].mxu0
        %v1553 = vadd.f32 0.0, %v1552
        %v1554 = vpop.f32.mrb[0].mxu0
        %1555 = vmatprep.mubr.bf16.mxu0 0
        %1556 = vmatmul.mubr.bf16.gmra.mrb[0].mxu0 %v1501
        %v1557 = vpop.f32.mrb[0].mxu0
        %v1558 = vadd.f32 0.0, %v1557
        %v1559 = vpop.f32.mrb[0].mxu0
        %v1560 = vpop.f32.mrb[0].mxu0
        %v1561 = vadd.f32 0.0, %v1560
        %v1562 = vpop.f32.mrb[0].mxu0
        %1563 = vmatprep.mubr.bf16.mxu0 0
        %1564 = vmatmul.mubr.bf16.gmra.mrb[0].mxu0 %v1504
        %v1565 = vpop.f32.mrb[0].mxu0
        %v1566 = vadd.f32 0.0, %v1565
        %v1567 = vpop.f32.mrb[0].mxu0
        %v1568 = vpop.f32.mrb[0].mxu0
        %v1569 = vadd.f32 0.0, %v1568
        %v1570 = vpop.f32.mrb[0].mxu0
        %1571 = vmatprep.mubr.bf16.mxu0 0
        %1572 = vmatmul.mubr.bf16.gmra.mrb[0].mxu0 %v1507
        %v1573 = vpop.f32.mrb[0].mxu0
        %v1574 = vadd.f32 0.0, %v1573
        %v1575 = vpop.f32.mrb[0].mxu0
        %v1576 = vpop.f32.mrb[0].mxu0
        %v1577 = vadd.f32 0.0, %v1576
        %v1578 = vpop.f32.mrb[0].mxu0
        %1579 = vmatprep.mubr.bf16.mxu0 0
        %1580 = vmatmul.mubr.bf16.gmra.mrb[0].mxu0 %v1510
        %v1581 = vpop.f32.mrb[0].mxu0
        %v1582 = vadd.f32 0.0, %v1581
        %v1583 = vpop.f32.mrb[0].mxu0
        %v1584 = vpop.f32.mrb[0].mxu0
        %v1585 = vadd.f32 0.0, %v1584
        %v1586 = vpop.f32.mrb[0].mxu0
        %1587 = vdwg.mxu0
        %v1588 = vadd.f32 %v1469, %v1550
        %v1589 = vadd.f32 %v1470, %v1553
        %v1590 = vadd.f32 %v1471, %v1558
        %v1591 = vadd.f32 %v1472, %v1561
        %v1592 = vadd.f32 %v1473, %v1566
        %v1593 = vadd.f32 %v1474, %v1569
        %v1594 = vadd.f32 %v1475, %v1574
        %v1595 = vadd.f32 %v1476, %v1577
        %v1596 = vadd.f32 %v1477, %v1582
        %v1597 = vadd.f32 %v1478, %v1585
        %v1598 = vld [vmem:[%s302] sm:$0xf]
        %v1599 = vld [vmem:[%s302 + $0x4] sm:$0xf]
        %v1600 = vld [vmem:[%s302 + $0x8] sm:$0xf]
        %v1601 = vld [vmem:[%s302 + $0xc] sm:$0xf]
        %v1602 = vld [vmem:[%s302 + $0x10] sm:$0xf]
        %v1603 = vld [vmem:[%s302 + $0x14] sm:$0xf]
        %v1604 = vld [vmem:[%s302 + $0x18] sm:$0xf]
        %v1605 = vld [vmem:[%s302 + $0x1c] sm:$0xf]
        %v1606 = vld [vmem:[%s302 + $0x20] sm:$0xf]
        %v1607 = vld [vmem:[%s302 + $0x24] sm:$0xf]
        %v1608 = vld [vmem:[#allocation8] sm:$0xf]
        %v1619 = vunpack.c.l.b16 %v1598
        %v1620 = vunpack.c.l.b16 %v1599
        %v1621 = vunpack.c.l.b16 %v1600
        %v1622 = vunpack.c.l.b16 %v1601
        %v1623 = vunpack.c.l.b16 %v1602
        %v1624 = vunpack.c.l.b16 %v1603
        %v1625 = vunpack.c.l.b16 %v1604
        %v1626 = vunpack.c.l.b16 %v1605
        %v1627 = vunpack.c.l.b16 %v1606
        %v1628 = vunpack.c.l.b16 %v1607
        %v1629 = vpack.c.b16 %v1620, %v1619
        %v1630 = vpack.c.b16 %v1622, %v1621
        %v1631 = vpack.c.b16 %v1624, %v1623
        %v1632 = vpack.c.b16 %v1626, %v1625
        %v1633 = vpack.c.b16 %v1628, %v1627
        %v1635 = vsel %vm434, %v1629, 0
        %v1638 = vsel %vm434, %v1630, 0
        %v1641 = vsel %vm434, %v1631, 0
        %v1644 = vsel %vm434, %v1632, 0
        %v1647 = vsel %vm434, %v1633, 0
        %v1650 = vsel %vm450, %v1608, 0
        %1652 = vmatprep.subr.bf16.mxu0 0
        %1653 = vmatpush1.bf16.msra.mxu0 %v1650
        %1654 = vmatprep.subr.bf16.mxu0 0
        %1655 = vmatpush1.bf16.msra.mxu0 0
        %1656 = vmatprep.subr.bf16.mxu0 0
        %1657 = vmatpush1.bf16.msra.mxu0 0
        %1658 = vmatprep.subr.bf16.mxu0 0
        %1659 = vmatpush1.bf16.msra.mxu0 0
        %1660 = vmatprep.subr.bf16.mxu0 0
        %1661 = vmatpush1.bf16.msra.mxu0 0
        %1662 = vmatprep.subr.bf16.mxu0 0
        %1663 = vmatpush1.bf16.msra.mxu0 0
        %1664 = vmatprep.subr.bf16.mxu0 0
        %1665 = vmatpush1.bf16.msra.mxu0 0
        %1666 = vmatprep.subr.bf16.mxu0 0
        %1667 = vmatpush1.bf16.msra.mxu0 0
        %1668 = vmatprep.subr.bf16.mxu0 0
        %1669 = vmatpush1.bf16.msra.mxu0 0
        %1670 = vmatprep.subr.bf16.mxu0 0
        %1671 = vmatpush1.bf16.msra.mxu0 0
        %1672 = vmatprep.subr.bf16.mxu0 0
        %1673 = vmatpush1.bf16.msra.mxu0 0
        %1674 = vmatprep.subr.bf16.mxu0 0
        %1675 = vmatpush1.bf16.msra.mxu0 0
        %1676 = vmatprep.subr.bf16.mxu0 0
        %1677 = vmatpush1.bf16.msra.mxu0 0
        %1678 = vmatprep.subr.bf16.mxu0 0
        %1679 = vmatpush1.bf16.msra.mxu0 0
        %1680 = vmatprep.subr.bf16.mxu0 0
        %1681 = vmatpush1.bf16.msra.mxu0 0
        %1682 = vmatprep.subr.bf16.mxu0 0
        %1683 = vmatpush1.bf16.msra.mxu0 0
        %1684 = vmatprep.mubr.bf16.mxu0 0
        %1685 = vmatmul.mubr.bf16.gmra.mrb[0].mxu0 %v1635
        %v1686 = vpop.f32.mrb[0].mxu0
        %v1687 = vadd.f32 0.0, %v1686
        %v1688 = vpop.f32.mrb[0].mxu0
        %v1689 = vpop.f32.mrb[0].mxu0
        %v1690 = vadd.f32 0.0, %v1689
        %v1691 = vpop.f32.mrb[0].mxu0
        %1692 = vmatprep.mubr.bf16.mxu0 0
        %1693 = vmatmul.mubr.bf16.gmra.mrb[0].mxu0 %v1638
        %v1694 = vpop.f32.mrb[0].mxu0
        %v1695 = vadd.f32 0.0, %v1694
        %v1696 = vpop.f32.mrb[0].mxu0
        %v1697 = vpop.f32.mrb[0].mxu0
        %v1698 = vadd.f32 0.0, %v1697
        %v1699 = vpop.f32.mrb[0].mxu0
        %1700 = vmatprep.mubr.bf16.mxu0 0
        %1701 = vmatmul.mubr.bf16.gmra.mrb[0].mxu0 %v1641
        %v1702 = vpop.f32.mrb[0].mxu0
        %v1703 = vadd.f32 0.0, %v1702
        %v1704 = vpop.f32.mrb[0].mxu0
        %v1705 = vpop.f32.mrb[0].mxu0
        %v1706 = vadd.f32 0.0, %v1705
        %v1707 = vpop.f32.mrb[0].mxu0
        %1708 = vmatprep.mubr.bf16.mxu0 0
        %1709 = vmatmul.mubr.bf16.gmra.mrb[0].mxu0 %v1644
        %v1710 = vpop.f32.mrb[0].mxu0
        %v1711 = vadd.f32 0.0, %v1710
        %v1712 = vpop.f32.mrb[0].mxu0
        %v1713 = vpop.f32.mrb[0].mxu0
        %v1714 = vadd.f32 0.0, %v1713
        %v1715 = vpop.f32.mrb[0].mxu0
        %1716 = vmatprep.mubr.bf16.mxu0 0
        %1717 = vmatmul.mubr.bf16.gmra.mrb[0].mxu0 %v1647
        %v1718 = vpop.f32.mrb[0].mxu0
        %v1719 = vadd.f32 0.0, %v1718
        %v1720 = vpop.f32.mrb[0].mxu0
        %v1721 = vpop.f32.mrb[0].mxu0
        %v1722 = vadd.f32 0.0, %v1721
        %v1723 = vpop.f32.mrb[0].mxu0
        %1724 = vdwg.mxu0
        %v1725 = vadd.f32 %v1588, %v1687
        %v1726 = vadd.f32 %v1589, %v1690
        %v1727 = vadd.f32 %v1590, %v1695
        %v1728 = vadd.f32 %v1591, %v1698
        %v1729 = vadd.f32 %v1592, %v1703
        %v1730 = vadd.f32 %v1593, %v1706
        %v1731 = vadd.f32 %v1594, %v1711
        %v1732 = vadd.f32 %v1595, %v1714
        %v1733 = vadd.f32 %v1596, %v1719
        %v1734 = vadd.f32 %v1597, %v1722
        %v1735 = vld [vmem:[%s302] sm:$0xf]
        %v1736 = vld [vmem:[%s302 + $0x4] sm:$0xf]
        %v1737 = vld [vmem:[%s302 + $0x8] sm:$0xf]
        %v1738 = vld [vmem:[%s302 + $0xc] sm:$0xf]
        %v1739 = vld [vmem:[%s302 + $0x10] sm:$0xf]
        %v1740 = vld [vmem:[%s302 + $0x14] sm:$0xf]
        %v1741 = vld [vmem:[%s302 + $0x18] sm:$0xf]
        %v1742 = vld [vmem:[%s302 + $0x1c] sm:$0xf]
        %v1743 = vld [vmem:[%s302 + $0x20] sm:$0xf]
        %v1744 = vld [vmem:[%s302 + $0x24] sm:$0xf]
        %v1745 = vld [vmem:[%s302 + $0x28] sm:$0x1]
        %s1746 = scalar_lea.vmem [#allocation8], 4
        %v1747 = vld [vmem:[%s1746] sm:$0xf]
        %v1759 = vunpack.c.l.b16 %v1735
        %v1760 = vunpack.c.l.b16 %v1736
        %v1761 = vunpack.c.l.b16 %v1737
        %v1762 = vunpack.c.l.b16 %v1738
        %v1763 = vunpack.c.l.b16 %v1739
        %v1764 = vunpack.c.l.b16 %v1740
        %v1765 = vunpack.c.l.b16 %v1741
        %v1766 = vunpack.c.l.b16 %v1742
        %v1767 = vunpack.c.l.b16 %v1743
        %v1768 = vunpack.c.l.b16 %v1744
        %v1769 = vunpack.c.l.b16 %v1745
        %v1770 = vpack.c.b16 %v1760, %v1759
        %v1771 = vpack.c.b16 %v1762, %v1761
        %v1772 = vpack.c.b16 %v1764, %v1763
        %v1773 = vpack.c.b16 %v1766, %v1765
        %v1774 = vpack.c.b16 %v1768, %v1767
        %v1775 = vpack.c.b16 %v1769, %v1769
        %v1777 = vshrl.u32 %v1770, 16
        %v1779 = vshll.u32 %v1770, 16
        %v1781 = vrot.slane %v1779, 1
        %v1782 = vor.u32 %v1777, %v1781
        %v1784 = vshll.u32 %v1771, 16
        %v1786 = vrot.slane %v1784, 1
        %v1787 = vsel %vm389, %v1782, %v1786
        %v1788 = vshrl.u32 %v1771, 16
        %v1790 = vor.u32 %v1788, %v1786
        %v1792 = vshll.u32 %v1772, 16
        %v1794 = vrot.slane %v1792, 1
        %v1795 = vsel %vm389, %v1790, %v1794
        %v1796 = vshrl.u32 %v1772, 16
        %v1798 = vor.u32 %v1796, %v1794
        %v1800 = vshll.u32 %v1773, 16
        %v1802 = vrot.slane %v1800, 1
        %v1803 = vsel %vm389, %v1798, %v1802
        %v1804 = vshrl.u32 %v1773, 16
        %v1806 = vor.u32 %v1804, %v1802
        %v1808 = vshll.u32 %v1774, 16
        %v1810 = vrot.slane %v1808, 1
        %v1811 = vsel %vm389, %v1806, %v1810
        %v1812 = vshrl.u32 %v1774, 16
        %v1814 = vor.u32 %v1812, %v1810
        %v1816 = vshll.u32 %v1775, 16
        %v1818 = vrot.slane %v1816, 1
        %v1819 = vsel %vm389, %v1814, %v1818
        %v1821 = vsel %vm434, %v1787, 0
        %v1824 = vsel %vm434, %v1795, 0
        %v1827 = vsel %vm434, %v1803, 0
        %v1830 = vsel %vm434, %v1811, 0
        %v1833 = vsel %vm434, %v1819, 0
        %v1836 = vsel %vm450, %v1747, 0
        %1838 = vmatprep.subr.bf16.mxu0 0
        %1839 = vmatpush1.bf16.msra.mxu0 %v1836
        %1840 = vmatprep.subr.bf16.mxu0 0
        %1841 = vmatpush1.bf16.msra.mxu0 0
        %1842 = vmatprep.subr.bf16.mxu0 0
        %1843 = vmatpush1.bf16.msra.mxu0 0
        %1844 = vmatprep.subr.bf16.mxu0 0
        %1845 = vmatpush1.bf16.msra.mxu0 0
        %1846 = vmatprep.subr.bf16.mxu0 0
        %1847 = vmatpush1.bf16.msra.mxu0 0
        %1848 = vmatprep.subr.bf16.mxu0 0
        %1849 = vmatpush1.bf16.msra.mxu0 0
        %1850 = vmatprep.subr.bf16.mxu0 0
        %1851 = vmatpush1.bf16.msra.mxu0 0
        %1852 = vmatprep.subr.bf16.mxu0 0
        %1853 = vmatpush1.bf16.msra.mxu0 0
        %1854 = vmatprep.subr.bf16.mxu0 0
        %1855 = vmatpush1.bf16.msra.mxu0 0
        %1856 = vmatprep.subr.bf16.mxu0 0
        %1857 = vmatpush1.bf16.msra.mxu0 0
        %1858 = vmatprep.subr.bf16.mxu0 0
        %1859 = vmatpush1.bf16.msra.mxu0 0
        %1860 = vmatprep.subr.bf16.mxu0 0
        %1861 = vmatpush1.bf16.msra.mxu0 0
        %1862 = vmatprep.subr.bf16.mxu0 0
        %1863 = vmatpush1.bf16.msra.mxu0 0
        %1864 = vmatprep.subr.bf16.mxu0 0
        %1865 = vmatpush1.bf16.msra.mxu0 0
        %1866 = vmatprep.subr.bf16.mxu0 0
        %1867 = vmatpush1.bf16.msra.mxu0 0
        %1868 = vmatprep.subr.bf16.mxu0 0
        %1869 = vmatpush1.bf16.msra.mxu0 0
        %1870 = vmatprep.mubr.bf16.mxu0 0
        %1871 = vmatmul.mubr.bf16.gmra.mrb[0].mxu0 %v1821
        %v1872 = vpop.f32.mrb[0].mxu0
        %v1873 = vadd.f32 0.0, %v1872
        %v1874 = vpop.f32.mrb[0].mxu0
        %v1875 = vpop.f32.mrb[0].mxu0
        %v1876 = vadd.f32 0.0, %v1875
        %v1877 = vpop.f32.mrb[0].mxu0
        %1878 = vmatprep.mubr.bf16.mxu0 0
        %1879 = vmatmul.mubr.bf16.gmra.mrb[0].mxu0 %v1824
        %v1880 = vpop.f32.mrb[0].mxu0
        %v1881 = vadd.f32 0.0, %v1880
        %v1882 = vpop.f32.mrb[0].mxu0
        %v1883 = vpop.f32.mrb[0].mxu0
        %v1884 = vadd.f32 0.0, %v1883
        %v1885 = vpop.f32.mrb[0].mxu0
        %1886 = vmatprep.mubr.bf16.mxu0 0
        %1887 = vmatmul.mubr.bf16.gmra.mrb[0].mxu0 %v1827
        %v1888 = vpop.f32.mrb[0].mxu0
        %v1889 = vadd.f32 0.0, %v1888
        %v1890 = vpop.f32.mrb[0].mxu0
        %v1891 = vpop.f32.mrb[0].mxu0
        %v1892 = vadd.f32 0.0, %v1891
        %v1893 = vpop.f32.mrb[0].mxu0
        %1894 = vmatprep.mubr.bf16.mxu0 0
        %1895 = vmatmul.mubr.bf16.gmra.mrb[0].mxu0 %v1830
        %v1896 = vpop.f32.mrb[0].mxu0
        %v1897 = vadd.f32 0.0, %v1896
        %v1898 = vpop.f32.mrb[0].mxu0
        %v1899 = vpop.f32.mrb[0].mxu0
        %v1900 = vadd.f32 0.0, %v1899
        %v1901 = vpop.f32.mrb[0].mxu0
        %1902 = vmatprep.mubr.bf16.mxu0 0
        %1903 = vmatmul.mubr.bf16.gmra.mrb[0].mxu0 %v1833
        %v1904 = vpop.f32.mrb[0].mxu0
        %v1905 = vadd.f32 0.0, %v1904
        %v1906 = vpop.f32.mrb[0].mxu0
        %v1907 = vpop.f32.mrb[0].mxu0
        %v1908 = vadd.f32 0.0, %v1907
        %v1909 = vpop.f32.mrb[0].mxu0
        %1910 = vdwg.mxu0
        %v1911 = vadd.f32 %v1725, %v1873
        %v1912 = vadd.f32 %v1726, %v1876
        %v1913 = vadd.f32 %v1727, %v1881
        %v1914 = vadd.f32 %v1728, %v1884
        %v1915 = vadd.f32 %v1729, %v1889
        %v1916 = vadd.f32 %v1730, %v1892
        %v1917 = vadd.f32 %v1731, %v1897
        %v1918 = vadd.f32 %v1732, %v1900
        %v1919 = vadd.f32 %v1733, %v1905
        %v1920 = vadd.f32 %v1734, %v1908
        %v1921 = vld [vmem:[%s302] sm:$0xe]
        %s1922 = scalar_lea.vmem [#allocation8], 8
        %v1923 = vld [vmem:[%s1922] sm:$0xf]
        %v1925 = vunpack.c.l.b16 %v1921
        %v1926 = vpack.c.b16 %v1760, %v1925
        %v1927 = vrot.slane %v1926, 1
        %v1928 = vrot.slane %v1771, 1
        %v1929 = vsel %vm619, %v1927, %v1928
        %v1930 = vrot.slane %v1772, 1
        %v1931 = vsel %vm619, %v1928, %v1930
        %v1932 = vrot.slane %v1773, 1
        %v1933 = vsel %vm619, %v1930, %v1932
        %v1934 = vrot.slane %v1774, 1
        %v1935 = vsel %vm619, %v1932, %v1934
        %v1936 = vrot.slane %v1775, 1
        %v1937 = vsel %vm619, %v1934, %v1936
        %v1939 = vsel %vm434, %v1929, 0
        %v1942 = vsel %vm434, %v1931, 0
        %v1945 = vsel %vm434, %v1933, 0
        %v1948 = vsel %vm434, %v1935, 0
        %v1951 = vsel %vm434, %v1937, 0
        %v1954 = vsel %vm450, %v1923, 0
        %1956 = vmatprep.subr.bf16.mxu0 0
        %1957 = vmatpush1.bf16.msra.mxu0 %v1954
        %1958 = vmatprep.subr.bf16.mxu0 0
        %1959 = vmatpush1.bf16.msra.mxu0 0
        %1960 = vmatprep.subr.bf16.mxu0 0
        %1961 = vmatpush1.bf16.msra.mxu0 0
        %1962 = vmatprep.subr.bf16.mxu0 0
        %1963 = vmatpush1.bf16.msra.mxu0 0
        %1964 = vmatprep.subr.bf16.mxu0 0
        %1965 = vmatpush1.bf16.msra.mxu0 0
        %1966 = vmatprep.subr.bf16.mxu0 0
        %1967 = vmatpush1.bf16.msra.mxu0 0
        %1968 = vmatprep.subr.bf16.mxu0 0
        %1969 = vmatpush1.bf16.msra.mxu0 0
        %1970 = vmatprep.subr.bf16.mxu0 0
        %1971 = vmatpush1.bf16.msra.mxu0 0
        %1972 = vmatprep.subr.bf16.mxu0 0
        %1973 = vmatpush1.bf16.msra.mxu0 0
        %1974 = vmatprep.subr.bf16.mxu0 0
        %1975 = vmatpush1.bf16.msra.mxu0 0
        %1976 = vmatprep.subr.bf16.mxu0 0
        %1977 = vmatpush1.bf16.msra.mxu0 0
        %1978 = vmatprep.subr.bf16.mxu0 0
        %1979 = vmatpush1.bf16.msra.mxu0 0
        %1980 = vmatprep.subr.bf16.mxu0 0
        %1981 = vmatpush1.bf16.msra.mxu0 0
        %1982 = vmatprep.subr.bf16.mxu0 0
        %1983 = vmatpush1.bf16.msra.mxu0 0
        %1984 = vmatprep.subr.bf16.mxu0 0
        %1985 = vmatpush1.bf16.msra.mxu0 0
        %1986 = vmatprep.subr.bf16.mxu0 0
        %1987 = vmatpush1.bf16.msra.mxu0 0
        %1988 = vmatprep.mubr.bf16.mxu0 0
        %1989 = vmatmul.mubr.bf16.gmra.mrb[0].mxu0 %v1939
        %v1990 = vpop.f32.mrb[0].mxu0
        %v1991 = vadd.f32 0.0, %v1990
        %v1992 = vpop.f32.mrb[0].mxu0
        %v1993 = vpop.f32.mrb[0].mxu0
        %v1994 = vadd.f32 0.0, %v1993
        %v1995 = vpop.f32.mrb[0].mxu0
        %1996 = vmatprep.mubr.bf16.mxu0 0
        %1997 = vmatmul.mubr.bf16.gmra.mrb[0].mxu0 %v1942
        %v1998 = vpop.f32.mrb[0].mxu0
        %v1999 = vadd.f32 0.0, %v1998
        %v2000 = vpop.f32.mrb[0].mxu0
        %v2001 = vpop.f32.mrb[0].mxu0
        %v2002 = vadd.f32 0.0, %v2001
        %v2003 = vpop.f32.mrb[0].mxu0
        %2004 = vmatprep.mubr.bf16.mxu0 0
        %2005 = vmatmul.mubr.bf16.gmra.mrb[0].mxu0 %v1945
        %v2006 = vpop.f32.mrb[0].mxu0
        %v2007 = vadd.f32 0.0, %v2006
        %v2008 = vpop.f32.mrb[0].mxu0
        %v2009 = vpop.f32.mrb[0].mxu0
        %v2010 = vadd.f32 0.0, %v2009
        %v2011 = vpop.f32.mrb[0].mxu0
        %2012 = vmatprep.mubr.bf16.mxu0 0
        %2013 = vmatmul.mubr.bf16.gmra.mrb[0].mxu0 %v1948
        %v2014 = vpop.f32.mrb[0].mxu0
        %v2015 = vadd.f32 0.0, %v2014
        %v2016 = vpop.f32.mrb[0].mxu0
        %v2017 = vpop.f32.mrb[0].mxu0
        %v2018 = vadd.f32 0.0, %v2017
        %v2019 = vpop.f32.mrb[0].mxu0
        %2020 = vmatprep.mubr.bf16.mxu0 0
        %2021 = vmatmul.mubr.bf16.gmra.mrb[0].mxu0 %v1951
        %v2022 = vpop.f32.mrb[0].mxu0
        %v2023 = vadd.f32 0.0, %v2022
        %v2024 = vpop.f32.mrb[0].mxu0
        %v2025 = vpop.f32.mrb[0].mxu0
        %v2026 = vadd.f32 0.0, %v2025
        %v2027 = vpop.f32.mrb[0].mxu0
        %2028 = vdwg.mxu0
        %v2029 = vadd.f32 %v1911, %v1991
        %v2030 = vadd.f32 %v1912, %v1994
        %v2031 = vadd.f32 %v1913, %v1999
        %v2032 = vadd.f32 %v1914, %v2002
        %v2033 = vadd.f32 %v1915, %v2007
        %v2034 = vadd.f32 %v1916, %v2010
        %v2035 = vadd.f32 %v1917, %v2015
        %v2036 = vadd.f32 %v1918, %v2018
        %v2037 = vadd.f32 %v1919, %v2023
        %v2038 = vadd.f32 %v1920, %v2026
        %v2039 = vld [vmem:[%s302 + $0x4] sm:$0xe]
        %v2040 = vld [vmem:[%s302 + $0x8] sm:$0xf]
        %v2041 = vld [vmem:[%s302 + $0xc] sm:$0xf]
        %v2042 = vld [vmem:[%s302 + $0x10] sm:$0xf]
        %v2043 = vld [vmem:[%s302 + $0x14] sm:$0xf]
        %v2044 = vld [vmem:[%s302 + $0x18] sm:$0xf]
        %v2045 = vld [vmem:[%s302 + $0x1c] sm:$0xf]
        %v2046 = vld [vmem:[%s302 + $0x20] sm:$0xf]
        %v2047 = vld [vmem:[%s302 + $0x24] sm:$0xf]
        %v2048 = vld [vmem:[%s302 + $0x28] sm:$0xf]
        %v2049 = vld [vmem:[%s302 + $0x2c] sm:$0x1]
        %s2050 = scalar_lea.vmem [#allocation8], 12
        %v2051 = vld [vmem:[%s2050] sm:$0xf]
        %v2063 = vunpack.c.l.b16 %v2039
        %v2064 = vunpack.c.l.b16 %v2040
        %v2065 = vunpack.c.l.b16 %v2041
        %v2066 = vunpack.c.l.b16 %v2042
        %v2067 = vunpack.c.l.b16 %v2043
        %v2068 = vunpack.c.l.b16 %v2044
        %v2069 = vunpack.c.l.b16 %v2045
        %v2070 = vunpack.c.l.b16 %v2046
        %v2071 = vunpack.c.l.b16 %v2047
        %v2072 = vunpack.c.l.b16 %v2048
        %v2073 = vunpack.c.l.b16 %v2049
        %v2074 = vpack.c.b16 %v2064, %v2063
        %v2075 = vpack.c.b16 %v2066, %v2065
        %v2076 = vpack.c.b16 %v2068, %v2067
        %v2077 = vpack.c.b16 %v2070, %v2069
        %v2078 = vpack.c.b16 %v2072, %v2071
        %v2079 = vpack.c.b16 %v2073, %v2073
        %v2080 = vrot.slane %v2074, 1
        %v2081 = vrot.slane %v2075, 1
        %v2082 = vsel %vm619, %v2080, %v2081
        %v2083 = vrot.slane %v2076, 1
        %v2084 = vsel %vm619, %v2081, %v2083
        %v2085 = vrot.slane %v2077, 1
        %v2086 = vsel %vm619, %v2083, %v2085
        %v2087 = vrot.slane %v2078, 1
        %v2088 = vsel %vm619, %v2085, %v2087
        %v2089 = vrot.slane %v2079, 1
        %v2090 = vsel %vm619, %v2087, %v2089
        %v2092 = vsel %vm434, %v2082, 0
        %v2095 = vsel %vm434, %v2084, 0
        %v2098 = vsel %vm434, %v2086, 0
        %v2101 = vsel %vm434, %v2088, 0
        %v2104 = vsel %vm434, %v2090, 0
        %v2107 = vsel %vm450, %v2051, 0
        %2109 = vmatprep.subr.bf16.mxu0 0
        %2110 = vmatpush1.bf16.msra.mxu0 %v2107
        %2111 = vmatprep.subr.bf16.mxu0 0
        %2112 = vmatpush1.bf16.msra.mxu0 0
        %2113 = vmatprep.subr.bf16.mxu0 0
        %2114 = vmatpush1.bf16.msra.mxu0 0
        %2115 = vmatprep.subr.bf16.mxu0 0
        %2116 = vmatpush1.bf16.msra.mxu0 0
        %2117 = vmatprep.subr.bf16.mxu0 0
        %2118 = vmatpush1.bf16.msra.mxu0 0
        %2119 = vmatprep.subr.bf16.mxu0 0
        %2120 = vmatpush1.bf16.msra.mxu0 0
        %2121 = vmatprep.subr.bf16.mxu0 0
        %2122 = vmatpush1.bf16.msra.mxu0 0
        %2123 = vmatprep.subr.bf16.mxu0 0
        %2124 = vmatpush1.bf16.msra.mxu0 0
        %2125 = vmatprep.subr.bf16.mxu0 0
        %2126 = vmatpush1.bf16.msra.mxu0 0
        %2127 = vmatprep.subr.bf16.mxu0 0
        %2128 = vmatpush1.bf16.msra.mxu0 0
        %2129 = vmatprep.subr.bf16.mxu0 0
        %2130 = vmatpush1.bf16.msra.mxu0 0
        %2131 = vmatprep.subr.bf16.mxu0 0
        %2132 = vmatpush1.bf16.msra.mxu0 0
        %2133 = vmatprep.subr.bf16.mxu0 0
        %2134 = vmatpush1.bf16.msra.mxu0 0
        %2135 = vmatprep.subr.bf16.mxu0 0
        %2136 = vmatpush1.bf16.msra.mxu0 0
        %2137 = vmatprep.subr.bf16.mxu0 0
        %2138 = vmatpush1.bf16.msra.mxu0 0
        %2139 = vmatprep.subr.bf16.mxu0 0
        %2140 = vmatpush1.bf16.msra.mxu0 0
        %2141 = vmatprep.mubr.bf16.mxu0 0
        %2142 = vmatmul.mubr.bf16.gmra.mrb[0].mxu0 %v2092
        %v2143 = vpop.f32.mrb[0].mxu0
        %v2144 = vadd.f32 0.0, %v2143
        %v2145 = vpop.f32.mrb[0].mxu0
        %v2146 = vpop.f32.mrb[0].mxu0
        %v2147 = vadd.f32 0.0, %v2146
        %v2148 = vpop.f32.mrb[0].mxu0
        %2149 = vmatprep.mubr.bf16.mxu0 0
        %2150 = vmatmul.mubr.bf16.gmra.mrb[0].mxu0 %v2095
        %v2151 = vpop.f32.mrb[0].mxu0
        %v2152 = vadd.f32 0.0, %v2151
        %v2153 = vpop.f32.mrb[0].mxu0
        %v2154 = vpop.f32.mrb[0].mxu0
        %v2155 = vadd.f32 0.0, %v2154
        %v2156 = vpop.f32.mrb[0].mxu0
        %2157 = vmatprep.mubr.bf16.mxu0 0
        %2158 = vmatmul.mubr.bf16.gmra.mrb[0].mxu0 %v2098
        %v2159 = vpop.f32.mrb[0].mxu0
        %v2160 = vadd.f32 0.0, %v2159
        %v2161 = vpop.f32.mrb[0].mxu0
        %v2162 = vpop.f32.mrb[0].mxu0
        %v2163 = vadd.f32 0.0, %v2162
        %v2164 = vpop.f32.mrb[0].mxu0
        %2165 = vmatprep.mubr.bf16.mxu0 0
        %2166 = vmatmul.mubr.bf16.gmra.mrb[0].mxu0 %v2101
        %v2167 = vpop.f32.mrb[0].mxu0
        %v2168 = vadd.f32 0.0, %v2167
        %v2169 = vpop.f32.mrb[0].mxu0
        %v2170 = vpop.f32.mrb[0].mxu0
        %v2171 = vadd.f32 0.0, %v2170
        %v2172 = vpop.f32.mrb[0].mxu0
        %2173 = vmatprep.mubr.bf16.mxu0 0
        %2174 = vmatmul.mubr.bf16.gmra.mrb[0].mxu0 %v2104
        %v2175 = vpop.f32.mrb[0].mxu0
        %v2176 = vadd.f32 0.0, %v2175
        %v2177 = vpop.f32.mrb[0].mxu0
        %v2178 = vpop.f32.mrb[0].mxu0
        %v2179 = vadd.f32 0.0, %v2178
        %v2180 = vpop.f32.mrb[0].mxu0
        %2181 = vdwg.mxu0
        %v2182 = vadd.f32 %v2029, %v2144
        %v2183 = vadd.f32 %v2030, %v2147
        %v2184 = vadd.f32 %v2031, %v2152
        %v2185 = vadd.f32 %v2032, %v2155
        %v2186 = vadd.f32 %v2033, %v2160
        %v2187 = vadd.f32 %v2034, %v2163
        %v2188 = vadd.f32 %v2035, %v2168
        %v2189 = vadd.f32 %v2036, %v2171
        %v2190 = vadd.f32 %v2037, %v2176
        %v2191 = vadd.f32 %v2038, %v2179
        %v2192 = vld [vmem:[%s302 + $0x2c] sm:$0x3]
        %s2193 = scalar_lea.vmem [#allocation8], 16
        %v2194 = vld [vmem:[%s2193] sm:$0xf]
        %v2196 = vunpack.c.l.b16 %v2192
        %v2197 = vpack.c.b16 %v2196, %v2196
        %v2199 = vshrl.u32 %v2074, 16
        %v2201 = vrot.slane %v2199, 1
        %v2202 = vshll.u32 %v2074, 16
        %v2204 = vrot.slane %v2202, 2
        %v2205 = vor.u32 %v2201, %v2204
        %v2207 = vshrl.u32 %v2075, 16
        %v2209 = vrot.slane %v2207, 1
        %v2210 = vshll.u32 %v2075, 16
        %v2212 = vrot.slane %v2210, 2
        %v2213 = vor.u32 %v2209, %v2212
        %v2214 = vsel %vm891, %v2205, %v2213
        %v2216 = vshrl.u32 %v2076, 16
        %v2218 = vrot.slane %v2216, 1
        %v2219 = vshll.u32 %v2076, 16
        %v2221 = vrot.slane %v2219, 2
        %v2222 = vor.u32 %v2218, %v2221
        %v2223 = vsel %vm891, %v2213, %v2222
        %v2225 = vshrl.u32 %v2077, 16
        %v2227 = vrot.slane %v2225, 1
        %v2228 = vshll.u32 %v2077, 16
        %v2230 = vrot.slane %v2228, 2
        %v2231 = vor.u32 %v2227, %v2230
        %v2232 = vsel %vm891, %v2222, %v2231
        %v2234 = vshrl.u32 %v2078, 16
        %v2236 = vrot.slane %v2234, 1
        %v2237 = vshll.u32 %v2078, 16
        %v2239 = vrot.slane %v2237, 2
        %v2240 = vor.u32 %v2236, %v2239
        %v2241 = vsel %vm891, %v2231, %v2240
        %v2243 = vshrl.u32 %v2197, 16
        %v2245 = vrot.slane %v2243, 1
        %v2246 = vshll.u32 %v2197, 16
        %v2248 = vrot.slane %v2246, 2
        %v2249 = vor.u32 %v2245, %v2248
        %v2250 = vsel %vm891, %v2240, %v2249
        %v2252 = vsel %vm434, %v2214, 0
        %v2255 = vsel %vm434, %v2223, 0
        %v2258 = vsel %vm434, %v2232, 0
        %v2261 = vsel %vm434, %v2241, 0
        %v2264 = vsel %vm434, %v2250, 0
        %v2267 = vsel %vm450, %v2194, 0
        %2269 = vmatprep.subr.bf16.mxu0 0
        %2270 = vmatpush1.bf16.msra.mxu0 %v2267
        %2271 = vmatprep.subr.bf16.mxu0 0
        %2272 = vmatpush1.bf16.msra.mxu0 0
        %2273 = vmatprep.subr.bf16.mxu0 0
        %2274 = vmatpush1.bf16.msra.mxu0 0
        %2275 = vmatprep.subr.bf16.mxu0 0
        %2276 = vmatpush1.bf16.msra.mxu0 0
        %2277 = vmatprep.subr.bf16.mxu0 0
        %2278 = vmatpush1.bf16.msra.mxu0 0
        %2279 = vmatprep.subr.bf16.mxu0 0
        %2280 = vmatpush1.bf16.msra.mxu0 0
        %2281 = vmatprep.subr.bf16.mxu0 0
        %2282 = vmatpush1.bf16.msra.mxu0 0
        %2283 = vmatprep.subr.bf16.mxu0 0
        %2284 = vmatpush1.bf16.msra.mxu0 0
        %2285 = vmatprep.subr.bf16.mxu0 0
        %2286 = vmatpush1.bf16.msra.mxu0 0
        %2287 = vmatprep.subr.bf16.mxu0 0
        %2288 = vmatpush1.bf16.msra.mxu0 0
        %2289 = vmatprep.subr.bf16.mxu0 0
        %2290 = vmatpush1.bf16.msra.mxu0 0
        %2291 = vmatprep.subr.bf16.mxu0 0
        %2292 = vmatpush1.bf16.msra.mxu0 0
        %2293 = vmatprep.subr.bf16.mxu0 0
        %2294 = vmatpush1.bf16.msra.mxu0 0
        %2295 = vmatprep.subr.bf16.mxu0 0
        %2296 = vmatpush1.bf16.msra.mxu0 0
        %2297 = vmatprep.subr.bf16.mxu0 0
        %2298 = vmatpush1.bf16.msra.mxu0 0
        %2299 = vmatprep.subr.bf16.mxu0 0
        %2300 = vmatpush1.bf16.msra.mxu0 0
        %2301 = vmatprep.mubr.bf16.mxu0 0
        %2302 = vmatmul.mubr.bf16.gmra.mrb[0].mxu0 %v2252
        %v2303 = vpop.f32.mrb[0].mxu0
        %v2304 = vadd.f32 0.0, %v2303
        %v2305 = vpop.f32.mrb[0].mxu0
        %v2306 = vpop.f32.mrb[0].mxu0
        %v2307 = vadd.f32 0.0, %v2306
        %v2308 = vpop.f32.mrb[0].mxu0
        %2309 = vmatprep.mubr.bf16.mxu0 0
        %2310 = vmatmul.mubr.bf16.gmra.mrb[0].mxu0 %v2255
        %v2311 = vpop.f32.mrb[0].mxu0
        %v2312 = vadd.f32 0.0, %v2311
        %v2313 = vpop.f32.mrb[0].mxu0
        %v2314 = vpop.f32.mrb[0].mxu0
        %v2315 = vadd.f32 0.0, %v2314
        %v2316 = vpop.f32.mrb[0].mxu0
        %2317 = vmatprep.mubr.bf16.mxu0 0
        %2318 = vmatmul.mubr.bf16.gmra.mrb[0].mxu0 %v2258
        %v2319 = vpop.f32.mrb[0].mxu0
        %v2320 = vadd.f32 0.0, %v2319
        %v2321 = vpop.f32.mrb[0].mxu0
        %v2322 = vpop.f32.mrb[0].mxu0
        %v2323 = vadd.f32 0.0, %v2322
        %v2324 = vpop.f32.mrb[0].mxu0
        %2325 = vmatprep.mubr.bf16.mxu0 0
        %2326 = vmatmul.mubr.bf16.gmra.mrb[0].mxu0 %v2261
        %v2327 = vpop.f32.mrb[0].mxu0
        %v2328 = vadd.f32 0.0, %v2327
        %v2329 = vpop.f32.mrb[0].mxu0
        %v2330 = vpop.f32.mrb[0].mxu0
        %v2331 = vadd.f32 0.0, %v2330
        %v2332 = vpop.f32.mrb[0].mxu0
        %2333 = vmatprep.mubr.bf16.mxu0 0
        %2334 = vmatmul.mubr.bf16.gmra.mrb[0].mxu0 %v2264
        %v2335 = vpop.f32.mrb[0].mxu0
        %v2336 = vadd.f32 0.0, %v2335
        %v2337 = vpop.f32.mrb[0].mxu0
        %v2338 = vpop.f32.mrb[0].mxu0
        %v2339 = vadd.f32 0.0, %v2338
        %v2340 = vpop.f32.mrb[0].mxu0
        %2341 = vdwg.mxu0
        %v2342 = vadd.f32 %v2182, %v2304
        %v2343 = vadd.f32 %v2183, %v2307
        %v2344 = vadd.f32 %v2184, %v2312
        %v2345 = vadd.f32 %v2185, %v2315
        %v2346 = vadd.f32 %v2186, %v2320
        %v2347 = vadd.f32 %v2187, %v2323
        %v2348 = vadd.f32 %v2188, %v2328
        %v2349 = vadd.f32 %v2189, %v2331
        %v2350 = vadd.f32 %v2190, %v2336
        %v2351 = vadd.f32 %v2191, %v2339
        %v2352 = vld [vmem:[%s302 + $0x4] sm:$0xc]
        %s2353 = scalar_lea.vmem [#allocation8], 20
        %v2354 = vld [vmem:[%s2353] sm:$0xf]
        %v2356 = vunpack.c.l.b16 %v2352
        %v2357 = vpack.c.b16 %v2064, %v2356
        %v2358 = vrot.slane %v2357, 2
        %v2359 = vrot.slane %v2075, 2
        %v2360 = vsel %vm1052, %v2358, %v2359
        %v2361 = vrot.slane %v2076, 2
        %v2362 = vsel %vm1052, %v2359, %v2361
        %v2363 = vrot.slane %v2077, 2
        %v2364 = vsel %vm1052, %v2361, %v2363
        %v2365 = vrot.slane %v2078, 2
        %v2366 = vsel %vm1052, %v2363, %v2365
        %v2367 = vrot.slane %v2197, 2
        %v2368 = vsel %vm1052, %v2365, %v2367
        %v2370 = vsel %vm434, %v2360, 0
        %v2373 = vsel %vm434, %v2362, 0
        %v2376 = vsel %vm434, %v2364, 0
        %v2379 = vsel %vm434, %v2366, 0
        %v2382 = vsel %vm434, %v2368, 0
        %v2385 = vsel %vm450, %v2354, 0
        %2387 = vmatprep.subr.bf16.mxu0 0
        %2388 = vmatpush1.bf16.msra.mxu0 %v2385
        %2389 = vmatprep.subr.bf16.mxu0 0
        %2390 = vmatpush1.bf16.msra.mxu0 0
        %2391 = vmatprep.subr.bf16.mxu0 0
        %2392 = vmatpush1.bf16.msra.mxu0 0
        %2393 = vmatprep.subr.bf16.mxu0 0
        %2394 = vmatpush1.bf16.msra.mxu0 0
        %2395 = vmatprep.subr.bf16.mxu0 0
        %2396 = vmatpush1.bf16.msra.mxu0 0
        %2397 = vmatprep.subr.bf16.mxu0 0
        %2398 = vmatpush1.bf16.msra.mxu0 0
        %2399 = vmatprep.subr.bf16.mxu0 0
        %2400 = vmatpush1.bf16.msra.mxu0 0
        %2401 = vmatprep.subr.bf16.mxu0 0
        %2402 = vmatpush1.bf16.msra.mxu0 0
        %2403 = vmatprep.subr.bf16.mxu0 0
        %2404 = vmatpush1.bf16.msra.mxu0 0
        %2405 = vmatprep.subr.bf16.mxu0 0
        %2406 = vmatpush1.bf16.msra.mxu0 0
        %2407 = vmatprep.subr.bf16.mxu0 0
        %2408 = vmatpush1.bf16.msra.mxu0 0
        %2409 = vmatprep.subr.bf16.mxu0 0
        %2410 = vmatpush1.bf16.msra.mxu0 0
        %2411 = vmatprep.subr.bf16.mxu0 0
        %2412 = vmatpush1.bf16.msra.mxu0 0
        %2413 = vmatprep.subr.bf16.mxu0 0
        %2414 = vmatpush1.bf16.msra.mxu0 0
        %2415 = vmatprep.subr.bf16.mxu0 0
        %2416 = vmatpush1.bf16.msra.mxu0 0
        %2417 = vmatprep.subr.bf16.mxu0 0
        %2418 = vmatpush1.bf16.msra.mxu0 0
        %2419 = vmatprep.mubr.bf16.mxu0 0
        %2420 = vmatmul.mubr.bf16.gmra.mrb[0].mxu0 %v2370
        %v2421 = vpop.f32.mrb[0].mxu0
        %v2422 = vadd.f32 0.0, %v2421
        %v2423 = vpop.f32.mrb[0].mxu0
        %v2424 = vpop.f32.mrb[0].mxu0
        %v2425 = vadd.f32 0.0, %v2424
        %v2426 = vpop.f32.mrb[0].mxu0
        %2427 = vmatprep.mubr.bf16.mxu0 0
        %2428 = vmatmul.mubr.bf16.gmra.mrb[0].mxu0 %v2373
        %v2429 = vpop.f32.mrb[0].mxu0
        %v2430 = vadd.f32 0.0, %v2429
        %v2431 = vpop.f32.mrb[0].mxu0
        %v2432 = vpop.f32.mrb[0].mxu0
        %v2433 = vadd.f32 0.0, %v2432
        %v2434 = vpop.f32.mrb[0].mxu0
        %2435 = vmatprep.mubr.bf16.mxu0 0
        %2436 = vmatmul.mubr.bf16.gmra.mrb[0].mxu0 %v2376
        %v2437 = vpop.f32.mrb[0].mxu0
        %v2438 = vadd.f32 0.0, %v2437
        %v2439 = vpop.f32.mrb[0].mxu0
        %v2440 = vpop.f32.mrb[0].mxu0
        %v2441 = vadd.f32 0.0, %v2440
        %v2442 = vpop.f32.mrb[0].mxu0
        %2443 = vmatprep.mubr.bf16.mxu0 0
        %2444 = vmatmul.mubr.bf16.gmra.mrb[0].mxu0 %v2379
        %v2445 = vpop.f32.mrb[0].mxu0
        %v2446 = vadd.f32 0.0, %v2445
        %v2447 = vpop.f32.mrb[0].mxu0
        %v2448 = vpop.f32.mrb[0].mxu0
        %v2449 = vadd.f32 0.0, %v2448
        %v2450 = vpop.f32.mrb[0].mxu0
        %2451 = vmatprep.mubr.bf16.mxu0 0
        %2452 = vmatmul.mubr.bf16.gmra.mrb[0].mxu0 %v2382
        %v2453 = vpop.f32.mrb[0].mxu0
        %v2454 = vadd.f32 0.0, %v2453
        %v2455 = vpop.f32.mrb[0].mxu0
        %v2456 = vpop.f32.mrb[0].mxu0
        %v2457 = vadd.f32 0.0, %v2456
        %v2458 = vpop.f32.mrb[0].mxu0
        %2459 = vdwg.mxu0
        %v2460 = vadd.f32 %v2342, %v2422
        %v2461 = vadd.f32 %v2343, %v2425
        %v2462 = vadd.f32 %v2344, %v2430
        %v2463 = vadd.f32 %v2345, %v2433
        %v2464 = vadd.f32 %v2346, %v2438
        %v2465 = vadd.f32 %v2347, %v2441
        %v2466 = vadd.f32 %v2348, %v2446
        %v2467 = vadd.f32 %v2349, %v2449
        %v2468 = vadd.f32 %v2350, %v2454
        %v2469 = vadd.f32 %v2351, %v2457
        %v2470 = vld [vmem:[%s302 + $0x8] sm:$0xc]
        %v2471 = vld [vmem:[%s302 + $0xc] sm:$0xf]
        %v2472 = vld [vmem:[%s302 + $0x10] sm:$0xf]
        %v2473 = vld [vmem:[%s302 + $0x14] sm:$0xf]
        %v2474 = vld [vmem:[%s302 + $0x18] sm:$0xf]
        %v2475 = vld [vmem:[%s302 + $0x1c] sm:$0xf]
        %v2476 = vld [vmem:[%s302 + $0x20] sm:$0xf]
        %v2477 = vld [vmem:[%s302 + $0x24] sm:$0xf]
        %v2478 = vld [vmem:[%s302 + $0x28] sm:$0xf]
        %v2479 = vld [vmem:[%s302 + $0x2c] sm:$0xf]
        %v2480 = vld [vmem:[%s302 + $0x30] sm:$0x3]
        %s2481 = scalar_lea.vmem [#allocation8], 24
        %v2482 = vld [vmem:[%s2481] sm:$0xf]
        %v2494 = vunpack.c.l.b16 %v2470
        %v2495 = vunpack.c.l.b16 %v2471
        %v2496 = vunpack.c.l.b16 %v2472
        %v2497 = vunpack.c.l.b16 %v2473
        %v2498 = vunpack.c.l.b16 %v2474
        %v2499 = vunpack.c.l.b16 %v2475
        %v2500 = vunpack.c.l.b16 %v2476
        %v2501 = vunpack.c.l.b16 %v2477
        %v2502 = vunpack.c.l.b16 %v2478
        %v2503 = vunpack.c.l.b16 %v2479
        %v2504 = vunpack.c.l.b16 %v2480
        %v2505 = vpack.c.b16 %v2495, %v2494
        %v2506 = vpack.c.b16 %v2497, %v2496
        %v2507 = vpack.c.b16 %v2499, %v2498
        %v2508 = vpack.c.b16 %v2501, %v2500
        %v2509 = vpack.c.b16 %v2503, %v2502
        %v2510 = vpack.c.b16 %v2504, %v2504
        %v2511 = vrot.slane %v2505, 2
        %v2512 = vrot.slane %v2506, 2
        %v2513 = vsel %vm1052, %v2511, %v2512
        %v2514 = vrot.slane %v2507, 2
        %v2515 = vsel %vm1052, %v2512, %v2514
        %v2516 = vrot.slane %v2508, 2
        %v2517 = vsel %vm1052, %v2514, %v2516
        %v2518 = vrot.slane %v2509, 2
        %v2519 = vsel %vm1052, %v2516, %v2518
        %v2520 = vrot.slane %v2510, 2
        %v2521 = vsel %vm1052, %v2518, %v2520
        %v2523 = vsel %vm434, %v2513, 0
        %v2526 = vsel %vm434, %v2515, 0
        %v2529 = vsel %vm434, %v2517, 0
        %v2532 = vsel %vm434, %v2519, 0
        %v2535 = vsel %vm434, %v2521, 0
        %v2538 = vsel %vm450, %v2482, 0
        %2540 = vmatprep.subr.bf16.mxu0 0
        %2541 = vmatpush1.bf16.msra.mxu0 %v2538
        %2542 = vmatprep.subr.bf16.mxu0 0
        %2543 = vmatpush1.bf16.msra.mxu0 0
        %2544 = vmatprep.subr.bf16.mxu0 0
        %2545 = vmatpush1.bf16.msra.mxu0 0
        %2546 = vmatprep.subr.bf16.mxu0 0
        %2547 = vmatpush1.bf16.msra.mxu0 0
        %2548 = vmatprep.subr.bf16.mxu0 0
        %2549 = vmatpush1.bf16.msra.mxu0 0
        %2550 = vmatprep.subr.bf16.mxu0 0
        %2551 = vmatpush1.bf16.msra.mxu0 0
        %2552 = vmatprep.subr.bf16.mxu0 0
        %2553 = vmatpush1.bf16.msra.mxu0 0
        %2554 = vmatprep.subr.bf16.mxu0 0
        %2555 = vmatpush1.bf16.msra.mxu0 0
        %2556 = vmatprep.subr.bf16.mxu0 0
        %2557 = vmatpush1.bf16.msra.mxu0 0
        %2558 = vmatprep.subr.bf16.mxu0 0
        %2559 = vmatpush1.bf16.msra.mxu0 0
        %2560 = vmatprep.subr.bf16.mxu0 0
        %2561 = vmatpush1.bf16.msra.mxu0 0
        %2562 = vmatprep.subr.bf16.mxu0 0
        %2563 = vmatpush1.bf16.msra.mxu0 0
        %2564 = vmatprep.subr.bf16.mxu0 0
        %2565 = vmatpush1.bf16.msra.mxu0 0
        %2566 = vmatprep.subr.bf16.mxu0 0
        %2567 = vmatpush1.bf16.msra.mxu0 0
        %2568 = vmatprep.subr.bf16.mxu0 0
        %2569 = vmatpush1.bf16.msra.mxu0 0
        %2570 = vmatprep.subr.bf16.mxu0 0
        %2571 = vmatpush1.bf16.msra.mxu0 0
        %2572 = vmatprep.mubr.bf16.mxu0 0
        %2573 = vmatmul.mubr.bf16.gmra.mrb[0].mxu0 %v2523
        %v2574 = vpop.f32.mrb[0].mxu0
        %v2575 = vadd.f32 0.0, %v2574
        %v2576 = vpop.f32.mrb[0].mxu0
        %v2577 = vpop.f32.mrb[0].mxu0
        %v2578 = vadd.f32 0.0, %v2577
        %v2579 = vpop.f32.mrb[0].mxu0
        %2580 = vmatprep.mubr.bf16.mxu0 0
        %2581 = vmatmul.mubr.bf16.gmra.mrb[0].mxu0 %v2526
        %v2582 = vpop.f32.mrb[0].mxu0
        %v2583 = vadd.f32 0.0, %v2582
        %v2584 = vpop.f32.mrb[0].mxu0
        %v2585 = vpop.f32.mrb[0].mxu0
        %v2586 = vadd.f32 0.0, %v2585
        %v2587 = vpop.f32.mrb[0].mxu0
        %2588 = vmatprep.mubr.bf16.mxu0 0
        %2589 = vmatmul.mubr.bf16.gmra.mrb[0].mxu0 %v2529
        %v2590 = vpop.f32.mrb[0].mxu0
        %v2591 = vadd.f32 0.0, %v2590
        %v2592 = vpop.f32.mrb[0].mxu0
        %v2593 = vpop.f32.mrb[0].mxu0
        %v2594 = vadd.f32 0.0, %v2593
        %v2595 = vpop.f32.mrb[0].mxu0
        %2596 = vmatprep.mubr.bf16.mxu0 0
        %2597 = vmatmul.mubr.bf16.gmra.mrb[0].mxu0 %v2532
        %v2598 = vpop.f32.mrb[0].mxu0
        %v2599 = vadd.f32 0.0, %v2598
        %v2600 = vpop.f32.mrb[0].mxu0
        %v2601 = vpop.f32.mrb[0].mxu0
        %v2602 = vadd.f32 0.0, %v2601
        %v2603 = vpop.f32.mrb[0].mxu0
        %2604 = vmatprep.mubr.bf16.mxu0 0
        %2605 = vmatmul.mubr.bf16.gmra.mrb[0].mxu0 %v2535
        %v2606 = vpop.f32.mrb[0].mxu0
        %v2607 = vadd.f32 0.0, %v2606
        %v2608 = vpop.f32.mrb[0].mxu0
        %v2609 = vpop.f32.mrb[0].mxu0
        %v2610 = vadd.f32 0.0, %v2609
        %v2611 = vpop.f32.mrb[0].mxu0
        %2612 = vdwg.mxu0
        %v2613 = vadd.f32 %v2460, %v2575
        %v2614 = vadd.f32 %v2461, %v2578
        %v2615 = vadd.f32 %v2462, %v2583
        %v2616 = vadd.f32 %v2463, %v2586
        %v2617 = vadd.f32 %v2464, %v2591
        %v2618 = vadd.f32 %v2465, %v2594
        %v2619 = vadd.f32 %v2466, %v2599
        %v2620 = vadd.f32 %v2467, %v2602
        %v2621 = vadd.f32 %v2468, %v2607
        %v2622 = vadd.f32 %v2469, %v2610
        %v2623 = vld [vmem:[%s302 + $0x30] sm:$0x7]
        %s2624 = scalar_lea.vmem [#allocation8], 28
        %v2625 = vld [vmem:[%s2624] sm:$0xf]
        %v2627 = vunpack.c.l.b16 %v2623
        %v2628 = vpack.c.b16 %v2627, %v2627
        %v2630 = vshrl.u32 %v2505, 16
        %v2632 = vrot.slane %v2630, 2
        %v2633 = vshll.u32 %v2505, 16
        %v2635 = vrot.slane %v2633, 3
        %v2636 = vor.u32 %v2632, %v2635
        %v2638 = vshrl.u32 %v2506, 16
        %v2640 = vrot.slane %v2638, 2
        %v2641 = vshll.u32 %v2506, 16
        %v2643 = vrot.slane %v2641, 3
        %v2644 = vor.u32 %v2640, %v2643
        %v2645 = vsel %vm1324, %v2636, %v2644
        %v2647 = vshrl.u32 %v2507, 16
        %v2649 = vrot.slane %v2647, 2
        %v2650 = vshll.u32 %v2507, 16
        %v2652 = vrot.slane %v2650, 3
        %v2653 = vor.u32 %v2649, %v2652
        %v2654 = vsel %vm1324, %v2644, %v2653
        %v2656 = vshrl.u32 %v2508, 16
        %v2658 = vrot.slane %v2656, 2
        %v2659 = vshll.u32 %v2508, 16
        %v2661 = vrot.slane %v2659, 3
        %v2662 = vor.u32 %v2658, %v2661
        %v2663 = vsel %vm1324, %v2653, %v2662
        %v2665 = vshrl.u32 %v2509, 16
        %v2667 = vrot.slane %v2665, 2
        %v2668 = vshll.u32 %v2509, 16
        %v2670 = vrot.slane %v2668, 3
        %v2671 = vor.u32 %v2667, %v2670
        %v2672 = vsel %vm1324, %v2662, %v2671
        %v2674 = vshrl.u32 %v2628, 16
        %v2676 = vrot.slane %v2674, 2
        %v2677 = vshll.u32 %v2628, 16
        %v2679 = vrot.slane %v2677, 3
        %v2680 = vor.u32 %v2676, %v2679
        %v2681 = vsel %vm1324, %v2671, %v2680
        %v2683 = vsel %vm434, %v2645, 0
        %v2686 = vsel %vm434, %v2654, 0
        %v2689 = vsel %vm434, %v2663, 0
        %v2692 = vsel %vm434, %v2672, 0
        %v2695 = vsel %vm434, %v2681, 0
        %v2698 = vsel %vm450, %v2625, 0
        %2700 = vmatprep.subr.bf16.mxu0 0
        %2701 = vmatpush1.bf16.msra.mxu0 %v2698
        %2702 = vmatprep.subr.bf16.mxu0 0
        %2703 = vmatpush1.bf16.msra.mxu0 0
        %2704 = vmatprep.subr.bf16.mxu0 0
        %2705 = vmatpush1.bf16.msra.mxu0 0
        %2706 = vmatprep.subr.bf16.mxu0 0
        %2707 = vmatpush1.bf16.msra.mxu0 0
        %2708 = vmatprep.subr.bf16.mxu0 0
        %2709 = vmatpush1.bf16.msra.mxu0 0
        %2710 = vmatprep.subr.bf16.mxu0 0
        %2711 = vmatpush1.bf16.msra.mxu0 0
        %2712 = vmatprep.subr.bf16.mxu0 0
        %2713 = vmatpush1.bf16.msra.mxu0 0
        %2714 = vmatprep.subr.bf16.mxu0 0
        %2715 = vmatpush1.bf16.msra.mxu0 0
        %2716 = vmatprep.subr.bf16.mxu0 0
        %2717 = vmatpush1.bf16.msra.mxu0 0
        %2718 = vmatprep.subr.bf16.mxu0 0
        %2719 = vmatpush1.bf16.msra.mxu0 0
        %2720 = vmatprep.subr.bf16.mxu0 0
        %2721 = vmatpush1.bf16.msra.mxu0 0
        %2722 = vmatprep.subr.bf16.mxu0 0
        %2723 = vmatpush1.bf16.msra.mxu0 0
        %2724 = vmatprep.subr.bf16.mxu0 0
        %2725 = vmatpush1.bf16.msra.mxu0 0
        %2726 = vmatprep.subr.bf16.mxu0 0
        %2727 = vmatpush1.bf16.msra.mxu0 0
        %2728 = vmatprep.subr.bf16.mxu0 0
        %2729 = vmatpush1.bf16.msra.mxu0 0
        %2730 = vmatprep.subr.bf16.mxu0 0
        %2731 = vmatpush1.bf16.msra.mxu0 0
        %2732 = vmatprep.mubr.bf16.mxu0 0
        %2733 = vmatmul.mubr.bf16.gmra.mrb[0].mxu0 %v2683
        %v2734 = vpop.f32.mrb[0].mxu0
        %v2735 = vadd.f32 0.0, %v2734
        %v2736 = vpop.f32.mrb[0].mxu0
        %v2737 = vpop.f32.mrb[0].mxu0
        %v2738 = vadd.f32 0.0, %v2737
        %v2739 = vpop.f32.mrb[0].mxu0
        %2740 = vmatprep.mubr.bf16.mxu0 0
        %2741 = vmatmul.mubr.bf16.gmra.mrb[0].mxu0 %v2686
        %v2742 = vpop.f32.mrb[0].mxu0
        %v2743 = vadd.f32 0.0, %v2742
        %v2744 = vpop.f32.mrb[0].mxu0
        %v2745 = vpop.f32.mrb[0].mxu0
        %v2746 = vadd.f32 0.0, %v2745
        %v2747 = vpop.f32.mrb[0].mxu0
        %2748 = vmatprep.mubr.bf16.mxu0 0
        %2749 = vmatmul.mubr.bf16.gmra.mrb[0].mxu0 %v2689
        %v2750 = vpop.f32.mrb[0].mxu0
        %v2751 = vadd.f32 0.0, %v2750
        %v2752 = vpop.f32.mrb[0].mxu0
        %v2753 = vpop.f32.mrb[0].mxu0
        %v2754 = vadd.f32 0.0, %v2753
        %v2755 = vpop.f32.mrb[0].mxu0
        %2756 = vmatprep.mubr.bf16.mxu0 0
        %2757 = vmatmul.mubr.bf16.gmra.mrb[0].mxu0 %v2692
        %v2758 = vpop.f32.mrb[0].mxu0
        %v2759 = vadd.f32 0.0, %v2758
        %v2760 = vpop.f32.mrb[0].mxu0
        %v2761 = vpop.f32.mrb[0].mxu0
        %v2762 = vadd.f32 0.0, %v2761
        %v2763 = vpop.f32.mrb[0].mxu0
        %2764 = vmatprep.mubr.bf16.mxu0 0
        %2765 = vmatmul.mubr.bf16.gmra.mrb[0].mxu0 %v2695
        %v2766 = vpop.f32.mrb[0].mxu0
        %v2767 = vadd.f32 0.0, %v2766
        %v2768 = vpop.f32.mrb[0].mxu0
        %v2769 = vpop.f32.mrb[0].mxu0
        %v2770 = vadd.f32 0.0, %v2769
        %v2771 = vpop.f32.mrb[0].mxu0
        %2772 = vdwg.mxu0
        %v2773 = vadd.f32 %v2613, %v2735
        %v2774 = vadd.f32 %v2614, %v2738
        %v2775 = vadd.f32 %v2615, %v2743
        %v2776 = vadd.f32 %v2616, %v2746
        %v2777 = vadd.f32 %v2617, %v2751
        %v2778 = vadd.f32 %v2618, %v2754
        %v2779 = vadd.f32 %v2619, %v2759
        %v2780 = vadd.f32 %v2620, %v2762
        %v2781 = vadd.f32 %v2621, %v2767
        %v2782 = vadd.f32 %v2622, %v2770
        %v2783 = vld [vmem:[%s302 + $0x8] sm:$0x8]
        %s2784 = scalar_lea.vmem [#allocation8], 32
        %v2785 = vld [vmem:[%s2784] sm:$0xf]
        %v2787 = vunpack.c.l.b16 %v2783
        %v2788 = vpack.c.b16 %v2495, %v2787
        %v2789 = vrot.slane %v2788, 3
        %v2790 = vrot.slane %v2506, 3
        %v2791 = vsel %vm1485, %v2789, %v2790
        %v2792 = vrot.slane %v2507, 3
        %v2793 = vsel %vm1485, %v2790, %v2792
        %v2794 = vrot.slane %v2508, 3
        %v2795 = vsel %vm1485, %v2792, %v2794
        %v2796 = vrot.slane %v2509, 3
        %v2797 = vsel %vm1485, %v2794, %v2796
        %v2798 = vrot.slane %v2628, 3
        %v2799 = vsel %vm1485, %v2796, %v2798
        %v2801 = vsel %vm434, %v2791, 0
        %v2804 = vsel %vm434, %v2793, 0
        %v2807 = vsel %vm434, %v2795, 0
        %v2810 = vsel %vm434, %v2797, 0
        %v2813 = vsel %vm434, %v2799, 0
        %v2816 = vsel %vm450, %v2785, 0
        %2818 = vmatprep.subr.bf16.mxu0 0
        %2819 = vmatpush1.bf16.msra.mxu0 %v2816
        %2820 = vmatprep.subr.bf16.mxu0 0
        %2821 = vmatpush1.bf16.msra.mxu0 0
        %2822 = vmatprep.subr.bf16.mxu0 0
        %2823 = vmatpush1.bf16.msra.mxu0 0
        %2824 = vmatprep.subr.bf16.mxu0 0
        %2825 = vmatpush1.bf16.msra.mxu0 0
        %2826 = vmatprep.subr.bf16.mxu0 0
        %2827 = vmatpush1.bf16.msra.mxu0 0
        %2828 = vmatprep.subr.bf16.mxu0 0
        %2829 = vmatpush1.bf16.msra.mxu0 0
        %2830 = vmatprep.subr.bf16.mxu0 0
        %2831 = vmatpush1.bf16.msra.mxu0 0
        %2832 = vmatprep.subr.bf16.mxu0 0
        %2833 = vmatpush1.bf16.msra.mxu0 0
        %2834 = vmatprep.subr.bf16.mxu0 0
        %2835 = vmatpush1.bf16.msra.mxu0 0
        %2836 = vmatprep.subr.bf16.mxu0 0
        %2837 = vmatpush1.bf16.msra.mxu0 0
        %2838 = vmatprep.subr.bf16.mxu0 0
        %2839 = vmatpush1.bf16.msra.mxu0 0
        %2840 = vmatprep.subr.bf16.mxu0 0
        %2841 = vmatpush1.bf16.msra.mxu0 0
        %2842 = vmatprep.subr.bf16.mxu0 0
        %2843 = vmatpush1.bf16.msra.mxu0 0
        %2844 = vmatprep.subr.bf16.mxu0 0
        %2845 = vmatpush1.bf16.msra.mxu0 0
        %2846 = vmatprep.subr.bf16.mxu0 0
        %2847 = vmatpush1.bf16.msra.mxu0 0
        %2848 = vmatprep.subr.bf16.mxu0 0
        %2849 = vmatpush1.bf16.msra.mxu0 0
        %2850 = vmatprep.mubr.bf16.mxu0 0
        %2851 = vmatmul.mubr.bf16.gmra.mrb[0].mxu0 %v2801
        %v2852 = vpop.f32.mrb[0].mxu0
        %v2853 = vadd.f32 0.0, %v2852
        %v2854 = vpop.f32.mrb[0].mxu0
        %v2855 = vpop.f32.mrb[0].mxu0
        %v2856 = vadd.f32 0.0, %v2855
        %v2857 = vpop.f32.mrb[0].mxu0
        %2858 = vmatprep.mubr.bf16.mxu0 0
        %2859 = vmatmul.mubr.bf16.gmra.mrb[0].mxu0 %v2804
        %v2860 = vpop.f32.mrb[0].mxu0
        %v2861 = vadd.f32 0.0, %v2860
        %v2862 = vpop.f32.mrb[0].mxu0
        %v2863 = vpop.f32.mrb[0].mxu0
        %v2864 = vadd.f32 0.0, %v2863
        %v2865 = vpop.f32.mrb[0].mxu0
        %2866 = vmatprep.mubr.bf16.mxu0 0
        %2867 = vmatmul.mubr.bf16.gmra.mrb[0].mxu0 %v2807
        %v2868 = vpop.f32.mrb[0].mxu0
        %v2869 = vadd.f32 0.0, %v2868
        %v2870 = vpop.f32.mrb[0].mxu0
        %v2871 = vpop.f32.mrb[0].mxu0
        %v2872 = vadd.f32 0.0, %v2871
        %v2873 = vpop.f32.mrb[0].mxu0
        %2874 = vmatprep.mubr.bf16.mxu0 0
        %2875 = vmatmul.mubr.bf16.gmra.mrb[0].mxu0 %v2810
        %v2876 = vpop.f32.mrb[0].mxu0
        %v2877 = vadd.f32 0.0, %v2876
        %v2878 = vpop.f32.mrb[0].mxu0
        %v2879 = vpop.f32.mrb[0].mxu0
        %v2880 = vadd.f32 0.0, %v2879
        %v2881 = vpop.f32.mrb[0].mxu0
        %2882 = vmatprep.mubr.bf16.mxu0 0
        %2883 = vmatmul.mubr.bf16.gmra.mrb[0].mxu0 %v2813
        %v2884 = vpop.f32.mrb[0].mxu0
        %v2885 = vadd.f32 0.0, %v2884
        %v2886 = vpop.f32.mrb[0].mxu0
        %v2887 = vpop.f32.mrb[0].mxu0
        %v2888 = vadd.f32 0.0, %v2887
        %v2889 = vpop.f32.mrb[0].mxu0
        %2890 = vdwg.mxu0
        %v2891 = vadd.f32 %v2773, %v2853
        %v2892 = vadd.f32 %v2774, %v2856
        %v2893 = vadd.f32 %v2775, %v2861
        %v2894 = vadd.f32 %v2776, %v2864
        %v2895 = vadd.f32 %v2777, %v2869
        %v2896 = vadd.f32 %v2778, %v2872
        %v2897 = vadd.f32 %v2779, %v2877
        %v2898 = vadd.f32 %v2780, %v2880
        %v2899 = vadd.f32 %v2781, %v2885
        %v2900 = vadd.f32 %v2782, %v2888
        %v2901 = vld [vmem:[#allocation10] sm:$0x1]
        %v2903 = vlaneseq
        %v2904 = vshrl.u32 %v2903, 7
        %v2905 = vsub.s32 0, %v2904
        %v2906 = vrot.slane %v2901, %v2905
        %v2908 = vadd.f32 %v2891, %v2906
        %v2909 = vadd.f32 %v2892, %v2906
        %v2910 = vadd.f32 %v2893, %v2906
        %v2911 = vadd.f32 %v2894, %v2906
        %v2912 = vadd.f32 %v2895, %v2906
        %v2913 = vadd.f32 %v2896, %v2906
        %v2914 = vadd.f32 %v2897, %v2906
        %v2915 = vadd.f32 %v2898, %v2906
        %v2916 = vadd.f32 %v2899, %v2906
        %v2917 = vadd.f32 %v2900, %v2906
        %v2918 = vmax.f32 %v2908, 0.0
        %v2919 = vmax.f32 %v2909, 0.0
        %v2920 = vmax.f32 %v2910, 0.0
        %v2921 = vmax.f32 %v2911, 0.0
        %v2922 = vmax.f32 %v2912, 0.0
        %v2923 = vmax.f32 %v2913, 0.0
        %v2924 = vmax.f32 %v2914, 0.0
        %v2925 = vmax.f32 %v2915, 0.0
        %v2926 = vmax.f32 %v2916, 0.0
        %v2927 = vmax.f32 %v2917, 0.0
        %2928 = vst [vmem:[%s345] sm:$0xff] %v2918
        %2929 = vst [vmem:[%s345 + $0x8] sm:$0xff] %v2919
        %2930 = vst [vmem:[%s345 + $0x10] sm:$0xff] %v2920
        %2931 = vst [vmem:[%s345 + $0x18] sm:$0xff] %v2921
        %2932 = vst [vmem:[%s345 + $0x20] sm:$0xff] %v2922
        %2933 = vst [vmem:[%s345 + $0x28] sm:$0xff] %v2923
        %2934 = vst [vmem:[%s345 + $0x30] sm:$0xff] %v2924
        %2935 = vst [vmem:[%s345 + $0x38] sm:$0xff] %v2925
        %2936 = vst [vmem:[%s345 + $0x40] sm:$0xff] %v2926
        %2937 = vst [vmem:[%s345 + $0x48] sm:$0xff] %v2927
        %s2938 = sand.u32 %s167, 1
        %s2939 = scalar_lea.sflag [#allocation4], %s2938
        %s2940 = sand.u32 %s167, 1
        %s2941 = smul.addr %s2940, 80
        %s2942 = scalar_lea.vmem [#allocation11], %s2941
        // Predicated region
        $region61: #{conv2x_forward.3} parent=39 // pred_check
          %p2943 = pneg %p177
        $region62: #{conv2x_forward.3} parent=39 // pred_check_branch
          %2945 = sbr.rel (%p2943) target = $region64
        $region63: #{conv2x_forward.3} parent=39 // pred_region
          %s2947 = ssub.s32 1280, 1280
          %2948 = vsyncadd %s2939, %s2947
          %s2949 = smul.addr %s31, 10
          %s2950 = smul.addr %s30, 10
          %s2951 = sadd.s32 %s2949, %s2950
          %s2952 = smul.addr %s2951, 128
          %s2953 = scalar_lea.hbm %s5, %s2952
          %s2954 = sshll.u32 %s2942, 4
          %s2955 = int_to_ptr.vmem [resolvable:$true] %s2954
          %2960 = dma.vmem_to_hbm [thread:$0]  %s2955, 1280, %s2953, %s2939, 128, 128, 8
        $region64: #{conv2x_forward.3} parent=39 // pred_fallthru
          _
      $region40: #{conv2x_forward.3} parent=5 // pred_fallthru
        _
      %p2961 = scmp.le.s32.totalorder 2, %s21
      // Predicated region
      $region65: #{conv2x_forward.3} parent=5 // pred_check
        %p2962 = pneg %p2961
      $region66: #{conv2x_forward.3} parent=5 // pred_check_branch
        %2964 = sbr.rel (%p2962) target = $region68
      $region67: #{conv2x_forward.3} parent=5 // pred_region
        %s2965 = ssub.s32 %s21, 2
        // Predicated region
        $region69: #{conv2x_forward.3} parent=67 // pred_check
          %p2966 = pneg %p183
        $region70: #{conv2x_forward.3} parent=67 // pred_check_branch
          %2968 = sbr.rel (%p2966) target = $region72
        $region71: #{conv2x_forward.3} parent=67 // pred_region
          %s2969 = sand.u32 %s168, 1
          %s2970 = scalar_lea.sflag [#allocation4], %s2969
          %s2971 = sand.u32 %s168, 1
          %s2972 = smul.addr %s2971, 80
          %s2973 = scalar_lea.vmem [#allocation11], %s2972
          %2974 = dma.done %s2970, 1280
        $region72: #{conv2x_forward.3} parent=67 // pred_fallthru
          _
      $region68: #{conv2x_forward.3} parent=5 // pred_fallthru
        _
    $region6: #{conv2x_forward.3} parent=1 // loop_footer
      %s25 = sadd.s32 1, %s21
    $region7: #{conv2x_forward.3} parent=1 // loop_footer_branch
      %20 = sbr.rel target = $region3
    $region8: #{conv2x_forward.3} parent=1 // loop_exit
      _
    %2975 = vsyncpa [#allocation3], 1
    %s2976 = scalar_lea.sflag [#allocation3], 1
    %2977 = vsyncpa %s2976, 1
    %2978 = vsyncpa [#allocation6], 1
    %s2979 = scalar_lea.sflag [#allocation6], 1
    %2980 = vsyncpa %s2979, 1
    %2981 = vsyncpa [#allocation9], 1
    %2982 = vsyncpa [#allocation4], 1
    %s2983 = scalar_lea.sflag [#allocation4], 1
    %2984 = vsyncpa %s2983, 1

</llo_original>
